<compile_context>
chip_gen: v6e
topology: v6e:2x2x1
jax: 0.10.0
libtpu: 0.0.40
codegen_flags: <defaults>
</compile_context>

<pallas_src>
import jax
import jax.numpy as jnp
from jax.experimental import pallas as pl
from jax.experimental.pallas import tpu as pltpu

FEAT3D_DIM = 32   # hyp.feat3D_dim (synthetic choice)
EPS = 1e-6


def _round_up(a, m):
    return ((a + m - 1) // m) * m


# ----------------------------------------------------------------- kernel ----

def _make_fused_kernel(s_len):
    """FeatNet3D conv + l2norm, fused with the sequence mean and OccNet head."""
    inv_den = 1.0 / (float(s_len - 1) + EPS)   # reduce_masked_mean denom (valid==1)

    def kernel(p_ref, w_ref, b_ref, wocc_ref, bocc_ref,
               alt_ref, mean_ref, occ_ref):
        s = pl.program_id(2)

        # FeatNet3D hot path: im2col'd 3x3x3/stride-2 conv as an MXU matmul
        # (bf16 inputs, f32 accumulation) + channel-wise L2 normalization.
        y = jnp.dot(p_ref[...], w_ref[...], preferred_element_type=jnp.float32)
        y = y + b_ref[...]
        norm = jnp.sqrt(jnp.sum(y * y, axis=-1, keepdims=True))
        feat = y * pl.reciprocal(norm + EPS, approx=True)   # EUP, not VPU divide

        @pl.when(s == 0)
        def _():
            # featnet3D_slow (weights shared with featnet3D) on frame 0, plus
            # the OccNet 1x1x1 conv + sigmoid fused as a frame-0 epilogue.
            mean_ref[...] = jnp.zeros_like(mean_ref)
            alt_ref[...] = feat
            logits = (jnp.sum(feat * wocc_ref[...], axis=-1, keepdims=True)
                      + bocc_ref[...])
            occ_ref[...] = jax.nn.sigmoid(logits)

        @pl.when(s > 0)
        def _():
            # reduce_masked_mean over frames 1: (valid mask == ones) -> plain sum
            mean_ref[...] = mean_ref[...] + feat

        @pl.when(s == s_len - 1)
        def _():
            mean_ref[...] = mean_ref[...] * inv_den

    return kernel


# -------------------------------------------------------------------- glue ----

def _im2col_3d(x, k=3, stride=2, pad=1):
    """x: [N, Z, Y, X, C] (channels-last).  Returns [N*Zo*Yo*Xo, k^3*C]."""
    N, Z, Y, X, C = x.shape
    xp = jnp.pad(x, ((0, 0), (pad, pad), (pad, pad), (pad, pad), (0, 0)))
    Zo = (Z + 2 * pad - k) // stride + 1
    Yo = (Y + 2 * pad - k) // stride + 1
    Xo = (X + 2 * pad - k) // stride + 1
    cols = []
    for dz in range(k):
        for dy in range(k):
            for dx in range(k):
                cols.append(
                    xp[:, dz:dz + stride * (Zo - 1) + 1:stride,
                          dy:dy + stride * (Yo - 1) + 1:stride,
                          dx:dx + stride * (Xo - 1) + 1:stride, :])
    p = jnp.stack(cols, axis=4)                       # [N, Zo, Yo, Xo, 27, C]
    return p.reshape(N * Zo * Yo * Xo, k * k * k * C), (Zo, Yo, Xo)


def carla_ml_forward(occ_memX0s, unp_memX0s, params):
    """occ_memX0s: [B,S,1,Z,Y,X] float32, unp_memX0s: [B,S,3,Z,Y,X] float32."""
    B, S, _, Z, Y, X = occ_memX0s.shape
    C = FEAT3D_DIM

    # feat_memX0s_input = cat([occ_memX0s, unp_memX0s * occ_memX0s], dim=2)
    feat_input = jnp.concatenate([occ_memX0s, unp_memX0s * occ_memX0s], axis=2)
    Cin = feat_input.shape[2]                                     # == 4

    # channels-last + bf16 (halves the dominant im2col HBM stream, MXU-friendly)
    x = feat_input.reshape(B * S, Cin, Z, Y, X).transpose(0, 2, 3, 4, 1)
    x = x.astype(jnp.bfloat16)

    # TODO(synk): the im2col patch slab is still materialized by XLA (now bf16);
    # generating patches in-kernel from a halo'd VMEM input tile would remove
    # this HBM round trip but needs Element-indexed overlapping blocks.
    patches, (Zo, Yo, Xo) = _im2col_3d(x, k=3, stride=2, pad=1)   # [B*S*Nvox, 108]
    K = patches.shape[1]                                          # 108 (no pad pass)
    Nvox = Zo * Yo * Xo

    # Big voxel-row tiles (>=1024 rows at real sizes) to amortize per-step
    # pipeline overhead; pad the voxel axis so it divides the tile.
    TMv = min(1024, _round_up(Nvox, 128))
    Mv = _round_up(Nvox, TMv)
    patches = patches.reshape(B, S, Nvox, K)
    if Mv != Nvox:
        patches = jnp.pad(patches, ((0, 0), (0, 0), (0, Mv - Nvox), (0, 0)))

    w1 = params['w1'].astype(jnp.bfloat16)   # [K, C]  (FeatNet3D conv weights)
    b1 = params['b1']                        # [1, C]  f32
    w_occ = params['w_occ']                  # [1, C]  f32 (OccNet 1x1x1 conv)
    b_occ = params['b_occ']                  # [1, 1]  f32

    # TODO(synk): the C=32 / width-1 outputs keep their natural layout (masked
    # stores); a [M,32]->[M/4,128] lane-dense reinterpret needs an in-kernel
    # sublane->lane relayout and is skipped to keep lowering robust.
    kernel = _make_fused_kernel(S)
    grid = (B, Mv // TMv, S)
    altfeat, feat_mean, occ_col = pl.pallas_call(
        kernel,
        out_shape=(jax.ShapeDtypeStruct((B, Mv, C), jnp.float32),   # altfeat (frame 0)
                   jax.ShapeDtypeStruct((B, Mv, C), jnp.float32),   # mean over frames 1:
                   jax.ShapeDtypeStruct((B, Mv, 1), jnp.float32)),  # occ pred (frame 0)
        grid=grid,
        in_specs=[
            pl.BlockSpec((None, None, TMv, K), lambda b, i, s: (b, s, i, 0)),  # patches
            pl.BlockSpec((K, C), lambda b, i, s: (0, 0)),                      # w1 (resident)
            pl.BlockSpec((1, C), lambda b, i, s: (0, 0)),                      # b1
            pl.BlockSpec((1, C), lambda b, i, s: (0, 0)),                      # w_occ
            pl.BlockSpec((1, 1), lambda b, i, s: (0, 0)),                      # b_occ
        ],
        out_specs=(
            pl.BlockSpec((None, TMv, C), lambda b, i, s: (b, i, 0)),
            pl.BlockSpec((None, TMv, C), lambda b, i, s: (b, i, 0)),
            pl.BlockSpec((None, TMv, 1), lambda b, i, s: (b, i, 0)),
        ),
        compiler_params=pltpu.CompilerParams(
            dimension_semantics=("parallel", "parallel", "arbitrary")),
    )(patches, w1, b1, w_occ, b_occ)

    def to_ncdhw(v):   # [B, Nvox, c] -> [B, c, Zo, Yo, Xo]
        c = v.shape[-1]
        return v.reshape(B, Zo, Yo, Xo, c).transpose(0, 4, 1, 2, 3)

    feat_memX0 = to_ncdhw(feat_mean[:, :Nvox])
    altfeat_memX0 = to_ncdhw(altfeat[:, :Nvox])
    occ_memX0_pred = to_ncdhw(occ_col[:, :Nvox])
    # FeatNet3D valid masks are all-ones -> sum over frames, clamped to 1 == 1.0
    valid_memX0 = jnp.ones((B, 1, Zo, Yo, Xo), jnp.float32)
    altvalid_memX0 = jnp.ones((B, 1, Zo, Yo, Xo), jnp.float32)

    results = {
        'feat_memX0': feat_memX0,            # [B, 32, Z/2, Y/2, X/2]
        'valid_memX0': valid_memX0,          # [B, 1,  Z/2, Y/2, X/2]
        'altfeat_memX0': altfeat_memX0,      # [B, 32, Z/2, Y/2, X/2]
        'altvalid_memX0': altvalid_memX0,    # [B, 1,  Z/2, Y/2, X/2]
        'occ_memX0_pred': occ_memX0_pred,    # [B, 1,  Z/2, Y/2, X/2]
    }

    # TODO(synk): feat3D smoothness loss, EmbNet3D metric-learning loss and the
    # OccNet BCE need vox_util geometry / supervision tensors not available
    # here; total_loss stays at its initialized value (0.0).
    total_loss = jnp.float32(0.0)
    return total_loss, results


if __name__ == "__main__":
    B, S, Z, Y, X = 2, 3, 16, 16, 16
    Cin = 4
    key = jax.random.PRNGKey(0)
    k_occ, k_rgb, k_w1, k_wocc = jax.random.split(key, 4)

    occ_memX0s = jax.random.bernoulli(k_occ, 0.3, (B, S, 1, Z, Y, X)).astype(jnp.float32)
    unp_memX0s = jax.random.uniform(k_rgb, (B, S, 3, Z, Y, X),
                                    minval=-0.5, maxval=0.5, dtype=jnp.float32)

    # deterministic synthetic parameters (FeatNet3D conv proxy + OccNet head)
    K = 27 * Cin           # 108 -- consumed at natural width, no padding pass
    w1 = jax.random.normal(k_w1, (K, FEAT3D_DIM), jnp.float32) * (2.0 / K) ** 0.5
    b1 = jnp.zeros((1, FEAT3D_DIM), jnp.float32)
    w_occ = jax.random.normal(k_wocc, (1, FEAT3D_DIM), jnp.float32) * (2.0 / FEAT3D_DIM) ** 0.5
    b_occ = jnp.zeros((1, 1), jnp.float32)
    params = dict(w1=w1, b1=b1, w_occ=w_occ, b_occ=b_occ)

    total_loss, results = jax.jit(carla_ml_forward)(occ_memX0s, unp_memX0s, params)
    jax.block_until_ready((total_loss, results))
    assert results['feat_memX0'].shape == (B, FEAT3D_DIM, Z // 2, Y // 2, X // 2)
    assert results['occ_memX0_pred'].shape == (B, 1, Z // 2, Y // 2, X // 2)
    print("KERNEL_OK")
</pallas_src>

<mosaic_0001>
module attributes {stable_mosaic.version = 11 : i64} {
  func.func @kernel(%arg0: i32, %arg1: i32, %arg2: i32, %arg3: memref<1x1x512x108xbf16, #tpu.memory_space<vmem>>, %arg4: memref<108x32xbf16, #tpu.memory_space<vmem>>, %arg5: memref<1x32xf32, #tpu.memory_space<vmem>>, %arg6: memref<1x32xf32, #tpu.memory_space<vmem>>, %arg7: memref<1x1xf32, #tpu.memory_space<vmem>>, %arg8: memref<1x512x32xf32, #tpu.memory_space<vmem>>, %arg9: memref<1x512x32xf32, #tpu.memory_space<vmem>>, %arg10: memref<1x512x1xf32, #tpu.memory_space<vmem>>) attributes {dimension_semantics = [#tpu.dimension_semantics<parallel>, #tpu.dimension_semantics<parallel>, #tpu.dimension_semantics<arbitrary>], iteration_bounds = array<i64: 2, 1, 3>, scalar_prefetch = 0 : i64, scratch_operands = 0 : i64, tpu.core_type = #tpu.core_type<tc>, window_params = [{transform_indices = @transform_0, window_bounds = array<i64: 1, 1, 512, 108>}, {pipeline_mode = #tpu.pipeline_mode<synchronous>, transform_indices = @transform_1, window_bounds = array<i64: 108, 32>}, {pipeline_mode = #tpu.pipeline_mode<synchronous>, transform_indices = @transform_2, window_bounds = array<i64: 1, 32>}, {pipeline_mode = #tpu.pipeline_mode<synchronous>, transform_indices = @transform_3, window_bounds = array<i64: 1, 32>}, {pipeline_mode = #tpu.pipeline_mode<synchronous>, transform_indices = @transform_4, window_bounds = array<i64: 1, 1>}, {transform_indices = @transform_5, window_bounds = array<i64: 1, 512, 32>}, {transform_indices = @transform_6, window_bounds = array<i64: 1, 512, 32>}, {transform_indices = @transform_7, window_bounds = array<i64: 1, 512, 1>}]} {
    %c0 = arith.constant 0 : index
    %c0_0 = arith.constant 0 : index
    %c0_1 = arith.constant 0 : index
    %c0_2 = arith.constant 0 : index
    %0 = vector.load %arg3[%c0, %c0_0, %c0_1, %c0_2] : memref<1x1x512x108xbf16, #tpu.memory_space<vmem>>, vector<1x1x512x108xbf16>
    %1 = vector.shape_cast %0 : vector<1x1x512x108xbf16> to vector<512x108xbf16>
    %c0_3 = arith.constant 0 : index
    %c0_4 = arith.constant 0 : index
    %2 = vector.load %arg4[%c0_3, %c0_4] : memref<108x32xbf16, #tpu.memory_space<vmem>>, vector<108x32xbf16>
    %cst = arith.constant dense<0.000000e+00> : vector<512x32xf32>
    %3 = tpu.matmul %1, %2, %cst {dimension_numbers = #tpu.dot_dimension_numbers<[1], [0], [0], [1], [0, 0, 1, 1], [], []>} : vector<512x108xbf16>, vector<108x32xbf16>, vector<512x32xf32> -> vector<512x32xf32>
    %c0_5 = arith.constant 0 : index
    %c0_6 = arith.constant 0 : index
    %4 = vector.load %arg5[%c0_5, %c0_6] : memref<1x32xf32, #tpu.memory_space<vmem>>, vector<1x32xf32>
    %5 = vector.broadcast %4 : vector<1x32xf32> to vector<512x32xf32>
    %6 = arith.addf %3, %5 : vector<512x32xf32>
    %7 = arith.mulf %6, %6 : vector<512x32xf32>
    %cst_7 = arith.constant dense<0.000000e+00> : vector<512xf32>
    %8 = vector.multi_reduction <add>, %7, %cst_7 [1] : vector<512x32xf32> to vector<512xf32>
    %9 = vector.shape_cast %8 : vector<512xf32> to vector<512x1xf32>
    %10 = math.sqrt %9 : vector<512x1xf32>
    %cst_8 = arith.constant 9.99999997E-7 : f32
    %11 = vector.broadcast %cst_8 : f32 to vector<512x1xf32>
    %12 = arith.addf %10, %11 : vector<512x1xf32>
    %13 = tpu.reciprocal %12 {approx = true} : vector<512x1xf32> -> vector<512x1xf32>
    %14 = vector.broadcast %13 : vector<512x1xf32> to vector<512x32xf32>
    %15 = arith.mulf %6, %14 : vector<512x32xf32>
    %c0_i32 = arith.constant 0 : i32
    %16 = arith.cmpi eq, %arg2, %c0_i32 : i32
    %17 = arith.extui %16 : i1 to i32
    %c0_i32_9 = arith.constant 0 : i32
    %18 = arith.cmpi ne, %17, %c0_i32_9 : i32
    scf.if %18 {
      %cst_13 = arith.constant 0.000000e+00 : f32
      %25 = vector.broadcast %cst_13 : f32 to vector<512x32xf32>
      %c0_14 = arith.constant 0 : index
      %c0_15 = arith.constant 0 : index
      %c0_16 = arith.constant 0 : index
      %26 = vector.load %arg9[%c0_14, %c0_15, %c0_16] : memref<1x512x32xf32, #tpu.memory_space<vmem>>, vector<1x512x32xf32>
      %27 = vector.shape_cast %26 : vector<1x512x32xf32> to vector<512x32xf32>
      %28 = vector.shape_cast %25 : vector<512x32xf32> to vector<1x512x32xf32>
      tpu.vector_store %arg9[%c0_14, %c0_15, %c0_16], %28 {strides = array<i32>} : memref<1x512x32xf32, #tpu.memory_space<vmem>>, vector<1x512x32xf32>,
      %c0_17 = arith.constant 0 : index
      %c0_18 = arith.constant 0 : index
      %c0_19 = arith.constant 0 : index
      %29 = vector.load %arg8[%c0_17, %c0_18, %c0_19] : memref<1x512x32xf32, #tpu.memory_space<vmem>>, vector<1x512x32xf32>
      %30 = vector.shape_cast %29 : vector<1x512x32xf32> to vector<512x32xf32>
      %31 = vector.shape_cast %15 : vector<512x32xf32> to vector<1x512x32xf32>
      tpu.vector_store %arg8[%c0_17, %c0_18, %c0_19], %31 {strides = array<i32>} : memref<1x512x32xf32, #tpu.memory_space<vmem>>, vector<1x512x32xf32>,
      %c0_20 = arith.constant 0 : index
      %c0_21 = arith.constant 0 : index
      %32 = vector.load %arg6[%c0_20, %c0_21] : memref<1x32xf32, #tpu.memory_space<vmem>>, vector<1x32xf32>
      %33 = vector.broadcast %32 : vector<1x32xf32> to vector<512x32xf32>
      %34 = arith.mulf %15, %33 : vector<512x32xf32>
      %cst_22 = arith.constant dense<0.000000e+00> : vector<512xf32>
      %35 = vector.multi_reduction <add>, %34, %cst_22 [1] : vector<512x32xf32> to vector<512xf32>
      %36 = vector.shape_cast %35 : vector<512xf32> to vector<512x1xf32>
      %c0_23 = arith.constant 0 : index
      %c0_24 = arith.constant 0 : index
      %37 = vector.load %arg7[%c0_23, %c0_24] : memref<1x1xf32, #tpu.memory_space<vmem>>, vector<1x1xf32>
      %38 = vector.broadcast %37 : vector<1x1xf32> to vector<512x1xf32>
      %39 = arith.addf %36, %38 : vector<512x1xf32>
      %40 = arith.negf %39 : vector<512x1xf32>
      %41 = math.exp %40 : vector<512x1xf32>
      %cst_25 = arith.constant 1.000000e+00 : f32
      %42 = vector.broadcast %cst_25 : f32 to vector<512x1xf32>
      %43 = arith.addf %42, %41 : vector<512x1xf32>
      %44 = arith.divf %42, %43 : vector<512x1xf32>
      %c0_26 = arith.constant 0 : index
      %c0_27 = arith.constant 0 : index
      %c0_28 = arith.constant 0 : index
      %45 = vector.load %arg10[%c0_26, %c0_27, %c0_28] : memref<1x512x1xf32, #tpu.memory_space<vmem>>, vector<1x512x1xf32>
      %46 = vector.shape_cast %45 : vector<1x512x1xf32> to vector<512x1xf32>
      %47 = vector.shape_cast %44 : vector<512x1xf32> to vector<1x512x1xf32>
      tpu.vector_store %arg10[%c0_26, %c0_27, %c0_28], %47 {strides = array<i32>} : memref<1x512x1xf32, #tpu.memory_space<vmem>>, vector<1x512x1xf32>,
    } else {
    }
    %c0_i32_10 = arith.constant 0 : i32
    %19 = arith.cmpi sgt, %arg2, %c0_i32_10 : i32
    %20 = arith.extui %19 : i1 to i32
    %c0_i32_11 = arith.constant 0 : i32
    %21 = arith.cmpi ne, %20, %c0_i32_11 : i32
    scf.if %21 {
      %c0_13 = arith.constant 0 : index
      %c0_14 = arith.constant 0 : index
      %c0_15 = arith.constant 0 : index
      %25 = vector.load %arg9[%c0_13, %c0_14, %c0_15] : memref<1x512x32xf32, #tpu.memory_space<vmem>>, vector<1x512x32xf32>
      %26 = vector.shape_cast %25 : vector<1x512x32xf32> to vector<512x32xf32>
      %27 = arith.addf %26, %15 : vector<512x32xf32>
      %c0_16 = arith.constant 0 : index
      %c0_17 = arith.constant 0 : index
      %c0_18 = arith.constant 0 : index
      %28 = vector.load %arg9[%c0_16, %c0_17, %c0_18] : memref<1x512x32xf32, #tpu.memory_space<vmem>>, vector<1x512x32xf32>
      %29 = vector.shape_cast %28 : vector<1x512x32xf32> to vector<512x32xf32>
      %30 = vector.shape_cast %27 : vector<512x32xf32> to vector<1x512x32xf32>
      tpu.vector_store %arg9[%c0_16, %c0_17, %c0_18], %30 {strides = array<i32>} : memref<1x512x32xf32, #tpu.memory_space<vmem>>, vector<1x512x32xf32>,
    } else {
    }
    %c2_i32 = arith.constant 2 : i32
    %22 = arith.cmpi eq, %arg2, %c2_i32 : i32
    %23 = arith.extui %22 : i1 to i32
    %c0_i32_12 = arith.constant 0 : i32
    %24 = arith.cmpi ne, %23, %c0_i32_12 : i32
    scf.if %24 {
      %c0_13 = arith.constant 0 : index
      %c0_14 = arith.constant 0 : index
      %c0_15 = arith.constant 0 : index
      %25 = vector.load %arg9[%c0_13, %c0_14, %c0_15] : memref<1x512x32xf32, #tpu.memory_space<vmem>>, vector<1x512x32xf32>
      %26 = vector.shape_cast %25 : vector<1x512x32xf32> to vector<512x32xf32>
      %cst_16 = arith.constant 0.499999762 : f32
      %27 = vector.broadcast %cst_16 : f32 to vector<512x32xf32>
      %28 = arith.mulf %26, %27 : vector<512x32xf32>
      %c0_17 = arith.constant 0 : index
      %c0_18 = arith.constant 0 : index
      %c0_19 = arith.constant 0 : index
      %29 = vector.load %arg9[%c0_17, %c0_18, %c0_19] : memref<1x512x32xf32, #tpu.memory_space<vmem>>, vector<1x512x32xf32>
      %30 = vector.shape_cast %29 : vector<1x512x32xf32> to vector<512x32xf32>
      %31 = vector.shape_cast %28 : vector<512x32xf32> to vector<1x512x32xf32>
      tpu.vector_store %arg9[%c0_17, %c0_18, %c0_19], %31 {strides = array<i32>} : memref<1x512x32xf32, #tpu.memory_space<vmem>>, vector<1x512x32xf32>,
    } else {
    }
    return
  }
  func.func @transform_0(%arg0: i32, %arg1: i32, %arg2: i32) -> (i32, i32, i32, i32) {
    %c0_i32 = arith.constant 0 : i32
    %c0_i32_0 = arith.constant 0 : i32
    return %arg0, %arg2, %arg1, %c0_i32 : i32, i32, i32, i32
  }
  func.func @transform_1(%arg0: i32, %arg1: i32, %arg2: i32) -> (i32, i32) {
    %c0_i32 = arith.constant 0 : i32
    %c0_i32_0 = arith.constant 0 : i32
    %c0_i32_1 = arith.constant 0 : i32
    return %c0_i32, %c0_i32_0 : i32, i32
  }
  func.func @transform_2(%arg0: i32, %arg1: i32, %arg2: i32) -> (i32, i32) {
    %c0_i32 = arith.constant 0 : i32
    %c0_i32_0 = arith.constant 0 : i32
    %c0_i32_1 = arith.constant 0 : i32
    return %c0_i32, %c0_i32_0 : i32, i32
  }
  func.func @transform_3(%arg0: i32, %arg1: i32, %arg2: i32) -> (i32, i32) {
    %c0_i32 = arith.constant 0 : i32
    %c0_i32_0 = arith.constant 0 : i32
    %c0_i32_1 = arith.constant 0 : i32
    return %c0_i32, %c0_i32_0 : i32, i32
  }
  func.func @transform_4(%arg0: i32, %arg1: i32, %arg2: i32) -> (i32, i32) {
    %c0_i32 = arith.constant 0 : i32
    %c0_i32_0 = arith.constant 0 : i32
    %c0_i32_1 = arith.constant 0 : i32
    return %c0_i32, %c0_i32_0 : i32, i32
  }
  func.func @transform_5(%arg0: i32, %arg1: i32, %arg2: i32) -> (i32, i32, i32) {
    %c0_i32 = arith.constant 0 : i32
    %c0_i32_0 = arith.constant 0 : i32
    return %arg0, %arg1, %c0_i32 : i32, i32, i32
  }
  func.func @transform_6(%arg0: i32, %arg1: i32, %arg2: i32) -> (i32, i32, i32) {
    %c0_i32 = arith.constant 0 : i32
    %c0_i32_0 = arith.constant 0 : i32
    return %arg0, %arg1, %c0_i32 : i32, i32, i32
  }
  func.func @transform_7(%arg0: i32, %arg1: i32, %arg2: i32) -> (i32, i32, i32) {
    %c0_i32 = arith.constant 0 : i32
    %c0_i32_0 = arith.constant 0 : i32
    return %arg0, %arg1, %c0_i32 : i32, i32, i32
  }
}

</mosaic_0001>

<llo_original>
// kernel: carla_ml_forward.1
$region0: #{carla_ml_forward.1}
  #allocation0 [shape = 'u32[]', space=smem, size = 0x4, offset = 0x4, fixed_abs, tag = 'smem constant byte address 0x4 - core index']
  #allocation1 [shape = 'u32[144,128]{1,0:T(1,128)}', space=vmem, size = 0x12000, scoped, tag = 'internal scratch']
  #allocation2 [shape = 'f32[1,1]{1,0:T(1,128)S(1)}', space=vmem, size = 0x200, scoped, tag = 'scoped memory for carla_ml_forward.1']
  %s0 = inlined_call_operand.vmem [shape: bf16[2,3,512,108], index: 0, kind: input, shape index: {}]
  %s1 = inlined_call_operand.vmem [shape: bf16[108,32], index: 1, kind: input, shape index: {}]
  %s2 = inlined_call_operand.vmem [shape: f32[1,32], index: 2, kind: input, shape index: {}]
  %s3 = inlined_call_operand.vmem [shape: f32[1,32], index: 3, kind: input, shape index: {}]
  %s4 = inlined_call_operand.<no memory space> [shape: f32[1,1], index: 4, kind: input, shape index: {}]
  %s5 = inlined_call_operand.hbm [shape: f32[2,512,32], index: 5, kind: output, shape index: {0}]
  %s6 = inlined_call_operand.hbm [shape: f32[2,512,32], index: 6, kind: output, shape index: {1}]
  %s7 = inlined_call_operand.vmem [shape: f32[2,512,1], index: 7, kind: output, shape index: {2}]
  %8 = xla_tuple %s5, %s6, %s7
  %s9 = sld [smem:[#allocation0]]
  $region81: #{carla_ml_forward.1} parent=0
    _
  %s11 = ssub.s32 1, %s9
  %s12 = scalar_select 0, %s11, %s9
  %v13 = vstv %s4
  %14 = vst [vmem:[#allocation2] sm:$0x1] %v13
  $region1: #{carla_ml_forward.1} parent=0
    #allocation3 [shape = 'u8[524288]{0}', space=vmem, size = 0x80000, scoped, tag = 'output window, operand 0']
    #allocation4 [shape = 's32[2]{0}', space=sflag, size = 0x8, scoped, tag = 'scoped memory for carla_ml_forward.1']
    #allocation5 [shape = 'u8[524288]{0}', space=vmem, size = 0x80000, scoped, tag = 'output window, operand 1']
    #allocation6 [shape = 's32[2]{0}', space=sflag, size = 0x8, scoped, tag = 'scoped memory for carla_ml_forward.1']
    %15 = vsyncpa [#allocation4], 0
    %s16 = scalar_lea.sflag [#allocation4], 1
    %17 = vsyncpa %s16, 0
    %18 = vsyncpa [#allocation6], 0
    %s19 = scalar_lea.sflag [#allocation6], 1
    %20 = vsyncpa %s19, 0
    loop: start=0, step=1, limit=8
    $region2: #{carla_ml_forward.1} parent=1 // loop_pre_header
      _
    $region3: #{carla_ml_forward.1} parent=1 // loop_header
      %s22 = sphi 0, %s26
      %p23 = scmp.ge.s32.totalorder %s22, 8
      %s29 = sphi 0, %s48
      %s30 = sphi 0, %s44
      %s31 = sphi 0, %s40
      %s32 = sphi 0, %s29
      %s33 = sphi 0, %s30
      %s34 = sphi 0, %s31
      %s35 = sphi 0, %s32
      %s36 = sphi 0, %s33
      %s37 = sphi 0, %s34
      %s55 = sphi 0, %s57
      %s58 = sphi 0, %s55
      %s59 = sphi 0, %s58
      %s75 = sphi 0, %s59
      %s79 = sphi 0, %s79
      %s81 = sphi 0, %s79
      %s82 = sphi 0, %s81
      %s96 = sphi 0, %s82
      %s100 = sphi 0, %s100
      %s102 = sphi 0, %s100
      %s103 = sphi 0, %s102
      %s117 = sphi 0, %s103
      %s121 = sphi 0, %s121
      %s123 = sphi 0, %s121
      %s124 = sphi 0, %s123
      %s138 = sphi 0, %s124
      %s142 = sphi 0, %s142
      %s144 = sphi 0, %s142
      %s145 = sphi 0, %s144
      %s159 = sphi 0, %s145
      %s167 = sphi 0, %s169
      %s170 = sphi 0, %s167
      %s171 = sphi 0, %s170
      %s187 = sphi 0, %s171
      %s195 = sphi 0, %s197
      %s198 = sphi 0, %s195
      %s199 = sphi 0, %s198
      %s215 = sphi 0, %s199
      %s223 = sphi 0, %s225
      %s226 = sphi 0, %s223
      %s227 = sphi 0, %s226
      %s243 = sphi 0, %s227
    $region4: #{carla_ml_forward.1} parent=1 // loop_header_branch
      %25 = sbr.rel (%p23) target = $region8
    $region5: #{carla_ml_forward.1} parent=1 // loop_body
      %s27 = ssub.s32 %s22, 1
      %s28 = ssub.s32 %s22, 2
      %s38 = sadd.s32 1, %s31
      %p39 = scmp.ge.s32.totalorder %s38, 3
      %s40 = scalar_select %p39, 0, %s38
      %s41 = sadd.s32 1, %s30
      %s42 = scalar_select %p39, %s41, %s30
      %p43 = scmp.ge.s32.totalorder %s42, 1
      %s44 = scalar_select %p43, 0, %s42
      %s45 = sadd.s32 1, %s29
      %s46 = scalar_select %p43, %s45, %s29
      %p47 = scmp.ge.s32.totalorder %s46, 2
      %s48 = scalar_select %p47, 0, %s46
      %s49 = ssub.s32 %s29, %s48
      %s50 = ssub.s32 %s31, %s40
      %s51 = sor.u32 %s49, %s50
      %s52 = ssub.s32 %s30, %s44
      %s53 = sor.u32 %s51, %s52
      %p54 = scmp.eq.s32.totalorder %s53, 0
      %s56 = sadd.s32 %s55, 1
      %s57 = scalar_select %p54, %s55, %s56
      %p60 = pneg %p54
      %p61 = scmp.eq.s32.totalorder %s22, 5
      %p62 = por %p60, %p61
      %p63 = scmp.ne.s32.totalorder %s55, %s58
      %p64 = scmp.eq.s32.totalorder %s22, 0
      %p65 = por %p63, %p64
      %p66 = scmp.ne.s32.totalorder %s55, %s58
      %p67 = scmp.eq.s32.totalorder %s27, 5
      %p68 = por %p66, %p67
      %p69 = scmp.ne.s32.totalorder %s58, %s59
      %p70 = scmp.eq.s32.totalorder %s27, 0
      %p71 = por %p69, %p70
      %p72 = scmp.ne.s32.totalorder %s58, %s59
      %p73 = scmp.eq.s32.totalorder %s28, 5
      %p74 = por %p72, %p73
      %p76 = scmp.ne.s32.totalorder %s59, %s75
      %p77 = scmp.eq.s32.totalorder %s28, 0
      %p78 = por %p76, %p77
      %s80 = sadd.s32 %s79, 1
      %p83 = scmp.eq.s32.totalorder %s22, 5
      %p84 = scmp.ne.s32.totalorder %s79, %s81
      %p85 = scmp.eq.s32.totalorder %s22, 0
      %p86 = por %p84, %p85
      %p87 = scmp.ne.s32.totalorder %s79, %s81
      %p88 = scmp.eq.s32.totalorder %s27, 5
      %p89 = por %p87, %p88
      %p90 = scmp.ne.s32.totalorder %s81, %s82
      %p91 = scmp.eq.s32.totalorder %s27, 0
      %p92 = por %p90, %p91
      %p93 = scmp.ne.s32.totalorder %s81, %s82
      %p94 = scmp.eq.s32.totalorder %s28, 5
      %p95 = por %p93, %p94
      %p97 = scmp.ne.s32.totalorder %s82, %s96
      %p98 = scmp.eq.s32.totalorder %s28, 0
      %p99 = por %p97, %p98
      %s101 = sadd.s32 %s100, 1
      %p104 = scmp.eq.s32.totalorder %s22, 5
      %p105 = scmp.ne.s32.totalorder %s100, %s102
      %p106 = scmp.eq.s32.totalorder %s22, 0
      %p107 = por %p105, %p106
      %p108 = scmp.ne.s32.totalorder %s100, %s102
      %p109 = scmp.eq.s32.totalorder %s27, 5
      %p110 = por %p108, %p109
      %p111 = scmp.ne.s32.totalorder %s102, %s103
      %p112 = scmp.eq.s32.totalorder %s27, 0
      %p113 = por %p111, %p112
      %p114 = scmp.ne.s32.totalorder %s102, %s103
      %p115 = scmp.eq.s32.totalorder %s28, 5
      %p116 = por %p114, %p115
      %p118 = scmp.ne.s32.totalorder %s103, %s117
      %p119 = scmp.eq.s32.totalorder %s28, 0
      %p120 = por %p118, %p119
      %s122 = sadd.s32 %s121, 1
      %p125 = scmp.eq.s32.totalorder %s22, 5
      %p126 = scmp.ne.s32.totalorder %s121, %s123
      %p127 = scmp.eq.s32.totalorder %s22, 0
      %p128 = por %p126, %p127
      %p129 = scmp.ne.s32.totalorder %s121, %s123
      %p130 = scmp.eq.s32.totalorder %s27, 5
      %p131 = por %p129, %p130
      %p132 = scmp.ne.s32.totalorder %s123, %s124
      %p133 = scmp.eq.s32.totalorder %s27, 0
      %p134 = por %p132, %p133
      %p135 = scmp.ne.s32.totalorder %s123, %s124
      %p136 = scmp.eq.s32.totalorder %s28, 5
      %p137 = por %p135, %p136
      %p139 = scmp.ne.s32.totalorder %s124, %s138
      %p140 = scmp.eq.s32.totalorder %s28, 0
      %p141 = por %p139, %p140
      %s143 = sadd.s32 %s142, 1
      %p146 = scmp.eq.s32.totalorder %s22, 5
      %p147 = scmp.ne.s32.totalorder %s142, %s144
      %p148 = scmp.eq.s32.totalorder %s22, 0
      %p149 = por %p147, %p148
      %p150 = scmp.ne.s32.totalorder %s142, %s144
      %p151 = scmp.eq.s32.totalorder %s27, 5
      %p152 = por %p150, %p151
      %p153 = scmp.ne.s32.totalorder %s144, %s145
      %p154 = scmp.eq.s32.totalorder %s27, 0
      %p155 = por %p153, %p154
      %p156 = scmp.ne.s32.totalorder %s144, %s145
      %p157 = scmp.eq.s32.totalorder %s28, 5
      %p158 = por %p156, %p157
      %p160 = scmp.ne.s32.totalorder %s145, %s159
      %p161 = scmp.eq.s32.totalorder %s28, 0
      %p162 = por %p160, %p161
      %s163 = ssub.s32 %s29, %s48
      %s164 = ssub.s32 %s30, %s44
      %s165 = sor.u32 %s163, %s164
      %p166 = scmp.eq.s32.totalorder %s165, 0
      %s168 = sadd.s32 %s167, 1
      %s169 = scalar_select %p166, %s167, %s168
      %p172 = pneg %p166
      %p173 = scmp.eq.s32.totalorder %s22, 5
      %p174 = por %p172, %p173
      %p175 = scmp.ne.s32.totalorder %s167, %s170
      %p176 = scmp.eq.s32.totalorder %s22, 0
      %p177 = por %p175, %p176
      %p178 = scmp.ne.s32.totalorder %s167, %s170
      %p179 = scmp.eq.s32.totalorder %s27, 5
      %p180 = por %p178, %p179
      %p181 = scmp.ne.s32.totalorder %s170, %s171
      %p182 = scmp.eq.s32.totalorder %s27, 0
      %p183 = por %p181, %p182
      %p184 = scmp.ne.s32.totalorder %s170, %s171
      %p185 = scmp.eq.s32.totalorder %s28, 5
      %p186 = por %p184, %p185
      %p188 = scmp.ne.s32.totalorder %s171, %s187
      %p189 = scmp.eq.s32.totalorder %s28, 0
      %p190 = por %p188, %p189
      %s191 = ssub.s32 %s29, %s48
      %s192 = ssub.s32 %s30, %s44
      %s193 = sor.u32 %s191, %s192
      %p194 = scmp.eq.s32.totalorder %s193, 0
      %s196 = sadd.s32 %s195, 1
      %s197 = scalar_select %p194, %s195, %s196
      %p200 = pneg %p194
      %p201 = scmp.eq.s32.totalorder %s22, 5
      %p202 = por %p200, %p201
      %p203 = scmp.ne.s32.totalorder %s195, %s198
      %p204 = scmp.eq.s32.totalorder %s22, 0
      %p205 = por %p203, %p204
      %p206 = scmp.ne.s32.totalorder %s195, %s198
      %p207 = scmp.eq.s32.totalorder %s27, 5
      %p208 = por %p206, %p207
      %p209 = scmp.ne.s32.totalorder %s198, %s199
      %p210 = scmp.eq.s32.totalorder %s27, 0
      %p211 = por %p209, %p210
      %p212 = scmp.ne.s32.totalorder %s198, %s199
      %p213 = scmp.eq.s32.totalorder %s28, 5
      %p214 = por %p212, %p213
      %p216 = scmp.ne.s32.totalorder %s199, %s215
      %p217 = scmp.eq.s32.totalorder %s28, 0
      %p218 = por %p216, %p217
      %s219 = ssub.s32 %s29, %s48
      %s220 = ssub.s32 %s30, %s44
      %s221 = sor.u32 %s219, %s220
      %p222 = scmp.eq.s32.totalorder %s221, 0
      %s224 = sadd.s32 %s223, 1
      %s225 = scalar_select %p222, %s223, %s224
      %p228 = pneg %p222
      %p229 = scmp.eq.s32.totalorder %s22, 5
      %p230 = por %p228, %p229
      %p231 = scmp.ne.s32.totalorder %s223, %s226
      %p232 = scmp.eq.s32.totalorder %s22, 0
      %p233 = por %p231, %p232
      %p234 = scmp.ne.s32.totalorder %s223, %s226
      %p235 = scmp.eq.s32.totalorder %s27, 5
      %p236 = por %p234, %p235
      %p237 = scmp.ne.s32.totalorder %s226, %s227
      %p238 = scmp.eq.s32.totalorder %s27, 0
      %p239 = por %p237, %p238
      %p240 = scmp.ne.s32.totalorder %s226, %s227
      %p241 = scmp.eq.s32.totalorder %s28, 5
      %p242 = por %p240, %p241
      %p244 = scmp.ne.s32.totalorder %s227, %s243
      %p245 = scmp.eq.s32.totalorder %s28, 0
      %p246 = por %p244, %p245
      %p247 = scmp.le.s32.totalorder 1, %s22
      %p248 = scmp.lt.s32.totalorder %s22, 7
      %p249 = pnand %p247, %p248
      %p250 = pneg %p249
      // Predicated region
      $region9: #{carla_ml_forward.1} parent=5 // pred_check
        _
      $region10: #{carla_ml_forward.1} parent=5 // pred_check_branch
        %252 = sbr.rel (%p249) target = $region12
      $region11: #{carla_ml_forward.1} parent=5 // pred_region
        %s253 = ssub.s32 %s22, 1
        // Predicated region
        $region13: #{carla_ml_forward.1} parent=11 // pred_check
          %p254 = pneg %p92
        $region14: #{carla_ml_forward.1} parent=11 // pred_check_branch
          %256 = sbr.rel (%p254) target = $region16
        $region15: #{carla_ml_forward.1} parent=11 // pred_region
          _
        $region16: #{carla_ml_forward.1} parent=11 // pred_fallthru
          _
        // Predicated region
        $region17: #{carla_ml_forward.1} parent=11 // pred_check
          %p257 = pneg %p113
        $region18: #{carla_ml_forward.1} parent=11 // pred_check_branch
          %259 = sbr.rel (%p257) target = $region20
        $region19: #{carla_ml_forward.1} parent=11 // pred_region
          _
        $region20: #{carla_ml_forward.1} parent=11 // pred_fallthru
          _
        // Predicated region
        $region21: #{carla_ml_forward.1} parent=11 // pred_check
          %p260 = pneg %p134
        $region22: #{carla_ml_forward.1} parent=11 // pred_check_branch
          %262 = sbr.rel (%p260) target = $region24
        $region23: #{carla_ml_forward.1} parent=11 // pred_region
          _
        $region24: #{carla_ml_forward.1} parent=11 // pred_fallthru
          _
        // Predicated region
        $region25: #{carla_ml_forward.1} parent=11 // pred_check
          %p263 = pneg %p155
        $region26: #{carla_ml_forward.1} parent=11 // pred_check_branch
          %265 = sbr.rel (%p263) target = $region28
        $region27: #{carla_ml_forward.1} parent=11 // pred_region
          _
        $region28: #{carla_ml_forward.1} parent=11 // pred_fallthru
          _
      $region12: #{carla_ml_forward.1} parent=5 // pred_fallthru
        _
      %p266 = scmp.lt.s32.totalorder %s22, 6
      // Predicated region
      $region29: #{carla_ml_forward.1} parent=5 // pred_check
        %p267 = pneg %p266
      $region30: #{carla_ml_forward.1} parent=5 // pred_check_branch
        %269 = sbr.rel (%p267) target = $region32
      $region31: #{carla_ml_forward.1} parent=5 // pred_region
        // Predicated region
        $region33: #{carla_ml_forward.1} parent=31 // pred_check
          %p270 = pneg %p65
        $region34: #{carla_ml_forward.1} parent=31 // pred_check_branch
          %272 = sbr.rel (%p270) target = $region36
        $region35: #{carla_ml_forward.1} parent=31 // pred_region
          %s273 = smul.u32 64, %s30
          %p274 = scmp.lt.s32.totalorder %s29, 1
          %s275 = scalar_select %p274, %s29, 1
          %p276 = scmp.lt.s32.totalorder %s31, 2
          %s277 = scalar_select %p276, %s31, 2
          %p278 = scmp.lt.s32.totalorder %s273, 63
          %s279 = scalar_select %p278, %s273, 63
          %s280 = smul.addr %s277, 64
          %s281 = sadd.s32 %s279, %s280
          %s282 = smul.addr %s275, 192
          %s283 = sadd.s32 %s281, %s282
          %s284 = smul.addr %s283, 4
          %s285 = scalar_lea.vmem %s0, %s284
          %s286 = smul.u32 64, %s30
        $region36: #{carla_ml_forward.1} parent=31 // pred_fallthru
          _
      $region32: #{carla_ml_forward.1} parent=5 // pred_fallthru
        _
      %p287 = scmp.le.s32.totalorder 1, %s22
      %p288 = scmp.lt.s32.totalorder %s22, 7
      %p289 = pnand %p287, %p288
      %p290 = pneg %p289
      // Predicated region
      $region37: #{carla_ml_forward.1} parent=5 // pred_check
        _
      $region38: #{carla_ml_forward.1} parent=5 // pred_check_branch
        %292 = sbr.rel (%p289) target = $region40
      $region39: #{carla_ml_forward.1} parent=5 // pred_region
        %s293 = ssub.s32 %s22, 1
        %s294 = smul.u32 64, %s33
        %p295 = scmp.lt.s32.totalorder %s32, 1
        %s296 = scalar_select %p295, %s32, 1
        %p297 = scmp.lt.s32.totalorder %s34, 2
        %s298 = scalar_select %p297, %s34, 2
        %p299 = scmp.lt.s32.totalorder %s294, 63
        %s300 = scalar_select %p299, %s294, 63
        %s301 = smul.addr %s298, 64
        %s302 = sadd.s32 %s300, %s301
        %s303 = smul.addr %s296, 192
        %s304 = sadd.s32 %s302, %s303
        %s305 = smul.addr %s304, 4
        %s306 = scalar_lea.vmem %s0, %s305
        %p307 = pneg %p71
        %p308 = pneg %p68
        %p309 = pneg %p92
        %p310 = pneg %p89
        %p311 = pneg %p113
        %p312 = pneg %p110
        %p313 = pneg %p134
        %p314 = pneg %p131
        %p315 = pneg %p155
        %p316 = pneg %p152
        %p317 = pneg %p183
        %p318 = pneg %p180
        %s319 = sand.u32 %s170, 1
        %s320 = scalar_lea.sflag [#allocation4], %s319
        %s321 = sand.u32 %s170, 1
        %s322 = smul.addr %s321, 512
        %s323 = scalar_lea.vmem [#allocation3], %s322
        %p324 = pneg %p211
        %p325 = pneg %p208
        %s326 = sand.u32 %s198, 1
        %s327 = scalar_lea.sflag [#allocation6], %s326
        %s328 = sand.u32 %s198, 1
        %s329 = smul.addr %s328, 512
        %s330 = scalar_lea.vmem [#allocation5], %s329
        %p331 = pneg %p239
        %p332 = pneg %p236
        %s333 = smul.u32 64, %s33
        %p334 = scmp.lt.s32.totalorder %s32, 1
        %s335 = scalar_select %p334, %s32, 1
        %p336 = scmp.lt.s32.totalorder %s333, 63
        %s337 = scalar_select %p336, %s333, 63
        %s338 = smul.addr %s335, 64
        %s339 = sadd.s32 %s337, %s338
        %s340 = smul.addr %s339, 8
        %s341 = scalar_lea.vmem %s7, %s340
        %s342 = smul.u32 64, %s33
        %p343 = scmp.lt.s32.totalorder %s32, 1
        %s344 = scalar_select %p343, %s32, 1
        %p345 = scmp.lt.s32.totalorder %s34, 2
        %s346 = scalar_select %p345, %s34, 2
        %p347 = scmp.lt.s32.totalorder %s342, 63
        %s348 = scalar_select %p347, %s342, 63
        %s349 = smul.addr %s346, 64
        %s350 = sadd.s32 %s348, %s349
        %s351 = smul.addr %s344, 192
        %s352 = sadd.s32 %s350, %s351
        %s353 = smul.addr %s352, 4
        %s354 = scalar_lea.vmem %s0, %s353
        %s355 = smul.u32 64, %s33
        %s356 = smul.u32 64, %s33
        %s357 = smul.u32 64, %s33
        %s358 = smul.u32 64, %s33
        %p359 = scmp.lt.s32.totalorder %s32, 1
        %s360 = scalar_select %p359, %s32, 1
        %p361 = scmp.lt.s32.totalorder %s358, 63
        %s362 = scalar_select %p361, %s358, 63
        %s363 = smul.addr %s360, 64
        %s364 = sadd.s32 %s362, %s363
        %s365 = smul.addr %s364, 8
        %s366 = scalar_lea.vmem %s7, %s365
        %s367 = smul.u32 64, %s33
        %v369 = vld [vmem:[%s354] sm:$0xf]
        %v370 = vld [vmem:[%s354 + $0x4] sm:$0xf]
        %v371 = vld [vmem:[%s354 + $0x8] sm:$0xf]
        %v372 = vld [vmem:[%s354 + $0xc] sm:$0xf]
        %v373 = vld [vmem:[%s354 + $0x10] sm:$0xf]
        %v374 = vld [vmem:[%s354 + $0x14] sm:$0xf]
        %v375 = vld [vmem:[%s354 + $0x18] sm:$0xf]
        %v376 = vld [vmem:[%s354 + $0x1c] sm:$0xf]
        %v377 = vld [vmem:[%s354 + $0x20] sm:$0xf]
        %v378 = vld [vmem:[%s354 + $0x24] sm:$0xf]
        %v379 = vld [vmem:[%s354 + $0x28] sm:$0xf]
        %v380 = vld [vmem:[%s354 + $0x2c] sm:$0xf]
        %v381 = vld [vmem:[%s354 + $0x30] sm:$0xf]
        %v382 = vld [vmem:[%s354 + $0x34] sm:$0xf]
        %v383 = vld [vmem:[%s354 + $0x38] sm:$0xf]
        %v384 = vld [vmem:[%s354 + $0x3c] sm:$0xf]
        %v385 = vld [vmem:[%s354 + $0x40] sm:$0xf]
        %v386 = vld [vmem:[%s354 + $0x44] sm:$0xf]
        %v387 = vld [vmem:[%s354 + $0x48] sm:$0xf]
        %v388 = vld [vmem:[%s354 + $0x4c] sm:$0xf]
        %v389 = vld [vmem:[%s354 + $0x50] sm:$0xf]
        %v390 = vld [vmem:[%s354 + $0x54] sm:$0xf]
        %v391 = vld [vmem:[%s354 + $0x58] sm:$0xf]
        %v392 = vld [vmem:[%s354 + $0x5c] sm:$0xf]
        %v393 = vld [vmem:[%s354 + $0x60] sm:$0xf]
        %v394 = vld [vmem:[%s354 + $0x64] sm:$0xf]
        %v395 = vld [vmem:[%s354 + $0x68] sm:$0xf]
        %v396 = vld [vmem:[%s354 + $0x6c] sm:$0xf]
        %v397 = vld [vmem:[%s354 + $0x70] sm:$0xf]
        %v398 = vld [vmem:[%s354 + $0x74] sm:$0xf]
        %v399 = vld [vmem:[%s354 + $0x78] sm:$0xf]
        %v400 = vld [vmem:[%s354 + $0x7c] sm:$0xf]
        %v401 = vld [vmem:[%s354 + $0x80] sm:$0xf]
        %v402 = vld [vmem:[%s354 + $0x84] sm:$0xf]
        %v403 = vld [vmem:[%s354 + $0x88] sm:$0xf]
        %v404 = vld [vmem:[%s354 + $0x8c] sm:$0xf]
        %v405 = vld [vmem:[%s354 + $0x90] sm:$0xf]
        %v406 = vld [vmem:[%s354 + $0x94] sm:$0xf]
        %v407 = vld [vmem:[%s354 + $0x98] sm:$0xf]
        %v408 = vld [vmem:[%s354 + $0x9c] sm:$0xf]
        %v409 = vld [vmem:[%s354 + $0xa0] sm:$0xf]
        %v410 = vld [vmem:[%s354 + $0xa4] sm:$0xf]
        %v411 = vld [vmem:[%s354 + $0xa8] sm:$0xf]
        %v412 = vld [vmem:[%s354 + $0xac] sm:$0xf]
        %v413 = vld [vmem:[%s354 + $0xb0] sm:$0xf]
        %v414 = vld [vmem:[%s354 + $0xb4] sm:$0xf]
        %v415 = vld [vmem:[%s354 + $0xb8] sm:$0xf]
        %v416 = vld [vmem:[%s354 + $0xbc] sm:$0xf]
        %v417 = vld [vmem:[%s354 + $0xc0] sm:$0xf]
        %v418 = vld [vmem:[%s354 + $0xc4] sm:$0xf]
        %v419 = vld [vmem:[%s354 + $0xc8] sm:$0xf]
        %v420 = vld [vmem:[%s354 + $0xcc] sm:$0xf]
        %v421 = vld [vmem:[%s354 + $0xd0] sm:$0xf]
        %v422 = vld [vmem:[%s354 + $0xd4] sm:$0xf]
        %v423 = vld [vmem:[%s354 + $0xd8] sm:$0xf]
        %v424 = vld [vmem:[%s354 + $0xdc] sm:$0xf]
        %v425 = vld [vmem:[%s354 + $0xe0] sm:$0xf]
        %v426 = vld [vmem:[%s354 + $0xe4] sm:$0xf]
        %v427 = vld [vmem:[%s354 + $0xe8] sm:$0xf]
        %v428 = vld [vmem:[%s354 + $0xec] sm:$0xf]
        %v429 = vld [vmem:[%s354 + $0xf0] sm:$0xf]
        %v430 = vld [vmem:[%s354 + $0xf4] sm:$0xf]
        %v431 = vld [vmem:[%s354 + $0xf8] sm:$0xf]
        %v432 = vld [vmem:[%s354 + $0xfc] sm:$0xf]
        %v433 = vld [vmem:[%s1] sm:$0xf]
        %v434 = vld [vmem:[%s1 + $0x4] sm:$0xf]
        %v435 = vld [vmem:[%s1 + $0x8] sm:$0xf]
        %v436 = vld [vmem:[%s1 + $0xc] sm:$0xf]
        %v437 = vld [vmem:[%s1 + $0x10] sm:$0xf]
        %v438 = vld [vmem:[%s1 + $0x14] sm:$0xf]
        %v439 = vld [vmem:[%s1 + $0x18] sm:$0xf]
        %v440 = vld [vmem:[%s1 + $0x1c] sm:$0xf]
        %v441 = vld [vmem:[%s1 + $0x20] sm:$0xf]
        %v442 = vld [vmem:[%s1 + $0x24] sm:$0xf]
        %v443 = vld [vmem:[%s1 + $0x28] sm:$0xf]
        %v444 = vld [vmem:[%s1 + $0x2c] sm:$0xf]
        %v445 = vld [vmem:[%s1 + $0x30] sm:$0xf]
        %v446 = vld [vmem:[%s1 + $0x34] sm:$0x3]
        %v447 = vld [vmem:[%s2] sm:$0x1]
        %v449 = vlaneseq
        %v450 = vshrl.u32 %v449, 7
        %v451 = vsub.s32 0, %v450
        %v452 = vrot.slane %v447, %v451
        %v518 = vunpack.c.l.b16 %v369
        %v519 = vunpack.c.l.b16 %v370
        %v520 = vunpack.c.l.b16 %v371
        %v521 = vunpack.c.l.b16 %v372
        %v522 = vunpack.c.l.b16 %v373
        %v523 = vunpack.c.l.b16 %v374
        %v524 = vunpack.c.l.b16 %v375
        %v525 = vunpack.c.l.b16 %v376
        %v526 = vunpack.c.l.b16 %v377
        %v527 = vunpack.c.l.b16 %v378
        %v528 = vunpack.c.l.b16 %v379
        %v529 = vunpack.c.l.b16 %v380
        %v530 = vunpack.c.l.b16 %v381
        %v531 = vunpack.c.l.b16 %v382
        %v532 = vunpack.c.l.b16 %v383
        %v533 = vunpack.c.l.b16 %v384
        %v534 = vunpack.c.l.b16 %v385
        %v535 = vunpack.c.l.b16 %v386
        %v536 = vunpack.c.l.b16 %v387
        %v537 = vunpack.c.l.b16 %v388
        %v538 = vunpack.c.l.b16 %v389
        %v539 = vunpack.c.l.b16 %v390
        %v540 = vunpack.c.l.b16 %v391
        %v541 = vunpack.c.l.b16 %v392
        %v542 = vunpack.c.l.b16 %v393
        %v543 = vunpack.c.l.b16 %v394
        %v544 = vunpack.c.l.b16 %v395
        %v545 = vunpack.c.l.b16 %v396
        %v546 = vunpack.c.l.b16 %v397
        %v547 = vunpack.c.l.b16 %v398
        %v548 = vunpack.c.l.b16 %v399
        %v549 = vunpack.c.l.b16 %v400
        %v550 = vunpack.c.l.b16 %v401
        %v551 = vunpack.c.l.b16 %v402
        %v552 = vunpack.c.l.b16 %v403
        %v553 = vunpack.c.l.b16 %v404
        %v554 = vunpack.c.l.b16 %v405
        %v555 = vunpack.c.l.b16 %v406
        %v556 = vunpack.c.l.b16 %v407
        %v557 = vunpack.c.l.b16 %v408
        %v558 = vunpack.c.l.b16 %v409
        %v559 = vunpack.c.l.b16 %v410
        %v560 = vunpack.c.l.b16 %v411
        %v561 = vunpack.c.l.b16 %v412
        %v562 = vunpack.c.l.b16 %v413
        %v563 = vunpack.c.l.b16 %v414
        %v564 = vunpack.c.l.b16 %v415
        %v565 = vunpack.c.l.b16 %v416
        %v566 = vunpack.c.l.b16 %v417
        %v567 = vunpack.c.l.b16 %v418
        %v568 = vunpack.c.l.b16 %v419
        %v569 = vunpack.c.l.b16 %v420
        %v570 = vunpack.c.l.b16 %v421
        %v571 = vunpack.c.l.b16 %v422
        %v572 = vunpack.c.l.b16 %v423
        %v573 = vunpack.c.l.b16 %v424
        %v574 = vunpack.c.l.b16 %v425
        %v575 = vunpack.c.l.b16 %v426
        %v576 = vunpack.c.l.b16 %v427
        %v577 = vunpack.c.l.b16 %v428
        %v578 = vunpack.c.l.b16 %v429
        %v579 = vunpack.c.l.b16 %v430
        %v580 = vunpack.c.l.b16 %v431
        %v581 = vunpack.c.l.b16 %v432
        %v582 = vpack.c.b16 %v519, %v518
        %v583 = vpack.c.b16 %v521, %v520
        %v584 = vpack.c.b16 %v523, %v522
        %v585 = vpack.c.b16 %v525, %v524
        %v586 = vpack.c.b16 %v527, %v526
        %v587 = vpack.c.b16 %v529, %v528
        %v588 = vpack.c.b16 %v531, %v530
        %v589 = vpack.c.b16 %v533, %v532
        %v590 = vpack.c.b16 %v535, %v534
        %v591 = vpack.c.b16 %v537, %v536
        %v592 = vpack.c.b16 %v539, %v538
        %v593 = vpack.c.b16 %v541, %v540
        %v594 = vpack.c.b16 %v543, %v542
        %v595 = vpack.c.b16 %v545, %v544
        %v596 = vpack.c.b16 %v547, %v546
        %v597 = vpack.c.b16 %v549, %v548
        %v598 = vpack.c.b16 %v551, %v550
        %v599 = vpack.c.b16 %v553, %v552
        %v600 = vpack.c.b16 %v555, %v554
        %v601 = vpack.c.b16 %v557, %v556
        %v602 = vpack.c.b16 %v559, %v558
        %v603 = vpack.c.b16 %v561, %v560
        %v604 = vpack.c.b16 %v563, %v562
        %v605 = vpack.c.b16 %v565, %v564
        %v606 = vpack.c.b16 %v567, %v566
        %v607 = vpack.c.b16 %v569, %v568
        %v608 = vpack.c.b16 %v571, %v570
        %v609 = vpack.c.b16 %v573, %v572
        %v610 = vpack.c.b16 %v575, %v574
        %v611 = vpack.c.b16 %v577, %v576
        %v612 = vpack.c.b16 %v579, %v578
        %v613 = vpack.c.b16 %v581, %v580
        %v628 = vunpack.c.l.b16 %v433
        %v629 = vunpack.c.l.b16 %v434
        %v630 = vunpack.c.l.b16 %v435
        %v631 = vunpack.c.l.b16 %v436
        %v632 = vunpack.c.l.b16 %v437
        %v633 = vunpack.c.l.b16 %v438
        %v634 = vunpack.c.l.b16 %v439
        %v635 = vunpack.c.l.b16 %v440
        %v636 = vunpack.c.l.b16 %v441
        %v637 = vunpack.c.l.b16 %v442
        %v638 = vunpack.c.l.b16 %v443
        %v639 = vunpack.c.l.b16 %v444
        %v640 = vunpack.c.l.b16 %v445
        %v641 = vunpack.c.l.b16 %v446
        %v642 = vpack.c.b16 %v629, %v628
        %v643 = vpack.c.b16 %v631, %v630
        %v644 = vpack.c.b16 %v633, %v632
        %v645 = vpack.c.b16 %v635, %v634
        %v646 = vpack.c.b16 %v637, %v636
        %v647 = vpack.c.b16 %v639, %v638
        %v648 = vpack.c.b16 %v641, %v640
        %vm655 = vcmask 883712
        %v657 = vsel %vm655, %v582, 0
        %v660 = vsel %vm655, %v583, 0
        %v663 = vsel %vm655, %v584, 0
        %v666 = vsel %vm655, %v585, 0
        %v669 = vsel %vm655, %v586, 0
        %v672 = vsel %vm655, %v587, 0
        %v675 = vsel %vm655, %v588, 0
        %v678 = vsel %vm655, %v589, 0
        %v681 = vsel %vm655, %v590, 0
        %v684 = vsel %vm655, %v591, 0
        %v687 = vsel %vm655, %v592, 0
        %v690 = vsel %vm655, %v593, 0
        %v693 = vsel %vm655, %v594, 0
        %v696 = vsel %vm655, %v595, 0
        %v699 = vsel %vm655, %v596, 0
        %v702 = vsel %vm655, %v597, 0
        %v705 = vsel %vm655, %v598, 0
        %v708 = vsel %vm655, %v599, 0
        %v711 = vsel %vm655, %v600, 0
        %v714 = vsel %vm655, %v601, 0
        %v717 = vsel %vm655, %v602, 0
        %v720 = vsel %vm655, %v603, 0
        %v723 = vsel %vm655, %v604, 0
        %v726 = vsel %vm655, %v605, 0
        %v729 = vsel %vm655, %v606, 0
        %v732 = vsel %vm655, %v607, 0
        %v735 = vsel %vm655, %v608, 0
        %v738 = vsel %vm655, %v609, 0
        %v741 = vsel %vm655, %v610, 0
        %v744 = vsel %vm655, %v611, 0
        %v747 = vsel %vm655, %v612, 0
        %v750 = vsel %vm655, %v613, 0
        %vm752 = vcmask 1045504
        %v754 = vsel %vm752, %v648, 0
        %756 = vmatprep.subr.bf16.mxu0 0
        %757 = vmatpush1.bf16.msra.mxu0 0
        %758 = vmatprep.subr.bf16.mxu0 0
        %759 = vmatpush1.bf16.msra.mxu0 %v754
        %760 = vmatprep.subr.bf16.mxu0 0
        %761 = vmatpush1.bf16.msra.mxu0 %v647
        %762 = vmatprep.subr.bf16.mxu0 0
        %763 = vmatpush1.bf16.msra.mxu0 %v646
        %764 = vmatprep.subr.bf16.mxu0 0
        %765 = vmatpush1.bf16.msra.mxu0 %v645
        %766 = vmatprep.subr.bf16.mxu0 0
        %767 = vmatpush1.bf16.msra.mxu0 %v644
        %768 = vmatprep.subr.bf16.mxu0 0
        %769 = vmatpush1.bf16.msra.mxu0 %v643
        %770 = vmatprep.subr.bf16.mxu0 0
        %771 = vmatpush1.bf16.msra.mxu0 %v642
        %772 = vmatprep.subr.bf16.mxu0 0
        %773 = vmatpush2.bf16.msra.mxu0 0
        %774 = vmatprep.subr.bf16.mxu0 0
        %775 = vmatpush2.bf16.msra.mxu0 0
        %776 = vmatprep.subr.bf16.mxu0 0
        %777 = vmatpush2.bf16.msra.mxu0 0
        %778 = vmatprep.subr.bf16.mxu0 0
        %779 = vmatpush2.bf16.msra.mxu0 0
        %780 = vmatprep.subr.bf16.mxu0 0
        %781 = vmatpush2.bf16.msra.mxu0 0
        %782 = vmatprep.subr.bf16.mxu0 0
        %783 = vmatpush2.bf16.msra.mxu0 0
        %784 = vmatprep.subr.bf16.mxu0 0
        %785 = vmatpush2.bf16.msra.mxu0 0
        %786 = vmatprep.subr.bf16.mxu0 0
        %787 = vmatpush2.bf16.msra.mxu0 0
        %788 = vmatprep.mubr.bf16.mxu0 0
        %789 = vmatmul.mubr.bf16.gmra.mxu0 %v657
        %v790 = vpop.f32.mrf.mxu0
        %v791 = vadd.f32 %v452, %v790
        %v792 = vpop.f32.mrf.mxu0
        %v793 = vpop.f32.mrf.mxu0
        %v794 = vadd.f32 %v452, %v793
        %v795 = vpop.f32.mrf.mxu0
        %796 = vmatprep.mubr.bf16.mxu0 0
        %797 = vmatmul.mubr.bf16.gmra.mxu0 %v660
        %v798 = vpop.f32.mrf.mxu0
        %v799 = vadd.f32 %v452, %v798
        %v800 = vpop.f32.mrf.mxu0
        %v801 = vpop.f32.mrf.mxu0
        %v802 = vadd.f32 %v452, %v801
        %v803 = vpop.f32.mrf.mxu0
        %804 = vmatprep.mubr.bf16.mxu0 0
        %805 = vmatmul.mubr.bf16.gmra.mxu0 %v663
        %v806 = vpop.f32.mrf.mxu0
        %v807 = vadd.f32 %v452, %v806
        %v808 = vpop.f32.mrf.mxu0
        %v809 = vpop.f32.mrf.mxu0
        %v810 = vadd.f32 %v452, %v809
        %v811 = vpop.f32.mrf.mxu0
        %812 = vmatprep.mubr.bf16.mxu0 0
        %813 = vmatmul.mubr.bf16.gmra.mxu0 %v666
        %v814 = vpop.f32.mrf.mxu0
        %v815 = vadd.f32 %v452, %v814
        %v816 = vpop.f32.mrf.mxu0
        %v817 = vpop.f32.mrf.mxu0
        %v818 = vadd.f32 %v452, %v817
        %v819 = vpop.f32.mrf.mxu0
        %820 = vmatprep.mubr.bf16.mxu0 0
        %821 = vmatmul.mubr.bf16.gmra.mxu0 %v669
        %v822 = vpop.f32.mrf.mxu0
        %v823 = vadd.f32 %v452, %v822
        %v824 = vpop.f32.mrf.mxu0
        %v825 = vpop.f32.mrf.mxu0
        %v826 = vadd.f32 %v452, %v825
        %v827 = vpop.f32.mrf.mxu0
        %828 = vmatprep.mubr.bf16.mxu0 0
        %829 = vmatmul.mubr.bf16.gmra.mxu0 %v672
        %v830 = vpop.f32.mrf.mxu0
        %v831 = vadd.f32 %v452, %v830
        %v832 = vpop.f32.mrf.mxu0
        %v833 = vpop.f32.mrf.mxu0
        %v834 = vadd.f32 %v452, %v833
        %v835 = vpop.f32.mrf.mxu0
        %836 = vmatprep.mubr.bf16.mxu0 0
        %837 = vmatmul.mubr.bf16.gmra.mxu0 %v675
        %v838 = vpop.f32.mrf.mxu0
        %v839 = vadd.f32 %v452, %v838
        %v840 = vpop.f32.mrf.mxu0
        %v841 = vpop.f32.mrf.mxu0
        %v842 = vadd.f32 %v452, %v841
        %v843 = vpop.f32.mrf.mxu0
        %844 = vmatprep.mubr.bf16.mxu0 0
        %845 = vmatmul.mubr.bf16.gmra.mxu0 %v678
        %v846 = vpop.f32.mrf.mxu0
        %v847 = vadd.f32 %v452, %v846
        %v848 = vpop.f32.mrf.mxu0
        %v849 = vpop.f32.mrf.mxu0
        %v850 = vadd.f32 %v452, %v849
        %v851 = vpop.f32.mrf.mxu0
        %852 = vmatprep.mubr.bf16.mxu0 0
        %853 = vmatmul.mubr.bf16.gmra.mxu0 %v681
        %v854 = vpop.f32.mrf.mxu0
        %v855 = vadd.f32 %v452, %v854
        %v856 = vpop.f32.mrf.mxu0
        %v857 = vpop.f32.mrf.mxu0
        %v858 = vadd.f32 %v452, %v857
        %v859 = vpop.f32.mrf.mxu0
        %860 = vmatprep.mubr.bf16.mxu0 0
        %861 = vmatmul.mubr.bf16.gmra.mxu0 %v684
        %v862 = vpop.f32.mrf.mxu0
        %v863 = vadd.f32 %v452, %v862
        %v864 = vpop.f32.mrf.mxu0
        %v865 = vpop.f32.mrf.mxu0
        %v866 = vadd.f32 %v452, %v865
        %v867 = vpop.f32.mrf.mxu0
        %868 = vmatprep.mubr.bf16.mxu0 0
        %869 = vmatmul.mubr.bf16.gmra.mxu0 %v687
        %v870 = vpop.f32.mrf.mxu0
        %v871 = vadd.f32 %v452, %v870
        %v872 = vpop.f32.mrf.mxu0
        %v873 = vpop.f32.mrf.mxu0
        %v874 = vadd.f32 %v452, %v873
        %v875 = vpop.f32.mrf.mxu0
        %876 = vmatprep.mubr.bf16.mxu0 0
        %877 = vmatmul.mubr.bf16.gmra.mxu0 %v690
        %v878 = vpop.f32.mrf.mxu0
        %v879 = vadd.f32 %v452, %v878
        %v880 = vpop.f32.mrf.mxu0
        %v881 = vpop.f32.mrf.mxu0
        %v882 = vadd.f32 %v452, %v881
        %v883 = vpop.f32.mrf.mxu0
        %884 = vmatprep.mubr.bf16.mxu0 0
        %885 = vmatmul.mubr.bf16.gmra.mxu0 %v693
        %v886 = vpop.f32.mrf.mxu0
        %v887 = vadd.f32 %v452, %v886
        %v888 = vpop.f32.mrf.mxu0
        %v889 = vpop.f32.mrf.mxu0
        %v890 = vadd.f32 %v452, %v889
        %v891 = vpop.f32.mrf.mxu0
        %892 = vmatprep.mubr.bf16.mxu0 0
        %893 = vmatmul.mubr.bf16.gmra.mxu0 %v696
        %v894 = vpop.f32.mrf.mxu0
        %v895 = vadd.f32 %v452, %v894
        %v896 = vpop.f32.mrf.mxu0
        %v897 = vpop.f32.mrf.mxu0
        %v898 = vadd.f32 %v452, %v897
        %v899 = vpop.f32.mrf.mxu0
        %900 = vmatprep.mubr.bf16.mxu0 0
        %901 = vmatmul.mubr.bf16.gmra.mxu0 %v699
        %v902 = vpop.f32.mrf.mxu0
        %v903 = vadd.f32 %v452, %v902
        %v904 = vpop.f32.mrf.mxu0
        %v905 = vpop.f32.mrf.mxu0
        %v906 = vadd.f32 %v452, %v905
        %v907 = vpop.f32.mrf.mxu0
        %908 = vmatprep.mubr.bf16.mxu0 0
        %909 = vmatmul.mubr.bf16.gmra.mxu0 %v702
        %v910 = vpop.f32.mrf.mxu0
        %v911 = vadd.f32 %v452, %v910
        %v912 = vpop.f32.mrf.mxu0
        %v913 = vpop.f32.mrf.mxu0
        %v914 = vadd.f32 %v452, %v913
        %v915 = vpop.f32.mrf.mxu0
        %916 = vmatprep.mubr.bf16.mxu0 0
        %917 = vmatmul.mubr.bf16.gmra.mxu0 %v705
        %v918 = vpop.f32.mrf.mxu0
        %v919 = vadd.f32 %v452, %v918
        %v920 = vpop.f32.mrf.mxu0
        %v921 = vpop.f32.mrf.mxu0
        %v922 = vadd.f32 %v452, %v921
        %v923 = vpop.f32.mrf.mxu0
        %924 = vmatprep.mubr.bf16.mxu0 0
        %925 = vmatmul.mubr.bf16.gmra.mxu0 %v708
        %v926 = vpop.f32.mrf.mxu0
        %v927 = vadd.f32 %v452, %v926
        %v928 = vpop.f32.mrf.mxu0
        %v929 = vpop.f32.mrf.mxu0
        %v930 = vadd.f32 %v452, %v929
        %v931 = vpop.f32.mrf.mxu0
        %932 = vmatprep.mubr.bf16.mxu0 0
        %933 = vmatmul.mubr.bf16.gmra.mxu0 %v711
        %v934 = vpop.f32.mrf.mxu0
        %v935 = vadd.f32 %v452, %v934
        %v936 = vpop.f32.mrf.mxu0
        %v937 = vpop.f32.mrf.mxu0
        %v938 = vadd.f32 %v452, %v937
        %v939 = vpop.f32.mrf.mxu0
        %940 = vmatprep.mubr.bf16.mxu0 0
        %941 = vmatmul.mubr.bf16.gmra.mxu0 %v714
        %v942 = vpop.f32.mrf.mxu0
        %v943 = vadd.f32 %v452, %v942
        %v944 = vpop.f32.mrf.mxu0
        %v945 = vpop.f32.mrf.mxu0
        %v946 = vadd.f32 %v452, %v945
        %v947 = vpop.f32.mrf.mxu0
        %948 = vmatprep.mubr.bf16.mxu0 0
        %949 = vmatmul.mubr.bf16.gmra.mxu0 %v717
        %v950 = vpop.f32.mrf.mxu0
        %v951 = vadd.f32 %v452, %v950
        %v952 = vpop.f32.mrf.mxu0
        %v953 = vpop.f32.mrf.mxu0
        %v954 = vadd.f32 %v452, %v953
        %v955 = vpop.f32.mrf.mxu0
        %956 = vmatprep.mubr.bf16.mxu0 0
        %957 = vmatmul.mubr.bf16.gmra.mxu0 %v720
        %v958 = vpop.f32.mrf.mxu0
        %v959 = vadd.f32 %v452, %v958
        %v960 = vpop.f32.mrf.mxu0
        %v961 = vpop.f32.mrf.mxu0
        %v962 = vadd.f32 %v452, %v961
        %v963 = vpop.f32.mrf.mxu0
        %964 = vmatprep.mubr.bf16.mxu0 0
        %965 = vmatmul.mubr.bf16.gmra.mxu0 %v723
        %v966 = vpop.f32.mrf.mxu0
        %v967 = vadd.f32 %v452, %v966
        %v968 = vpop.f32.mrf.mxu0
        %v969 = vpop.f32.mrf.mxu0
        %v970 = vadd.f32 %v452, %v969
        %v971 = vpop.f32.mrf.mxu0
        %972 = vmatprep.mubr.bf16.mxu0 0
        %973 = vmatmul.mubr.bf16.gmra.mxu0 %v726
        %v974 = vpop.f32.mrf.mxu0
        %v975 = vadd.f32 %v452, %v974
        %v976 = vpop.f32.mrf.mxu0
        %v977 = vpop.f32.mrf.mxu0
        %v978 = vadd.f32 %v452, %v977
        %v979 = vpop.f32.mrf.mxu0
        %980 = vmatprep.mubr.bf16.mxu0 0
        %981 = vmatmul.mubr.bf16.gmra.mxu0 %v729
        %v982 = vpop.f32.mrf.mxu0
        %v983 = vadd.f32 %v452, %v982
        %v984 = vpop.f32.mrf.mxu0
        %v985 = vpop.f32.mrf.mxu0
        %v986 = vadd.f32 %v452, %v985
        %v987 = vpop.f32.mrf.mxu0
        %988 = vmatprep.mubr.bf16.mxu0 0
        %989 = vmatmul.mubr.bf16.gmra.mxu0 %v732
        %v990 = vpop.f32.mrf.mxu0
        %v991 = vadd.f32 %v452, %v990
        %v992 = vpop.f32.mrf.mxu0
        %v993 = vpop.f32.mrf.mxu0
        %v994 = vadd.f32 %v452, %v993
        %v995 = vpop.f32.mrf.mxu0
        %996 = vmatprep.mubr.bf16.mxu0 0
        %997 = vmatmul.mubr.bf16.gmra.mxu0 %v735
        %v998 = vpop.f32.mrf.mxu0
        %v999 = vadd.f32 %v452, %v998
        %v1000 = vpop.f32.mrf.mxu0
        %v1001 = vpop.f32.mrf.mxu0
        %v1002 = vadd.f32 %v452, %v1001
        %v1003 = vpop.f32.mrf.mxu0
        %1004 = vmatprep.mubr.bf16.mxu0 0
        %1005 = vmatmul.mubr.bf16.gmra.mxu0 %v738
        %v1006 = vpop.f32.mrf.mxu0
        %v1007 = vadd.f32 %v452, %v1006
        %v1008 = vpop.f32.mrf.mxu0
        %v1009 = vpop.f32.mrf.mxu0
        %v1010 = vadd.f32 %v452, %v1009
        %v1011 = vpop.f32.mrf.mxu0
        %1012 = vmatprep.mubr.bf16.mxu0 0
        %1013 = vmatmul.mubr.bf16.gmra.mxu0 %v741
        %v1014 = vpop.f32.mrf.mxu0
        %v1015 = vadd.f32 %v452, %v1014
        %v1016 = vpop.f32.mrf.mxu0
        %v1017 = vpop.f32.mrf.mxu0
        %v1018 = vadd.f32 %v452, %v1017
        %v1019 = vpop.f32.mrf.mxu0
        %1020 = vmatprep.mubr.bf16.mxu0 0
        %1021 = vmatmul.mubr.bf16.gmra.mxu0 %v744
        %v1022 = vpop.f32.mrf.mxu0
        %v1023 = vadd.f32 %v452, %v1022
        %v1024 = vpop.f32.mrf.mxu0
        %v1025 = vpop.f32.mrf.mxu0
        %v1026 = vadd.f32 %v452, %v1025
        %v1027 = vpop.f32.mrf.mxu0
        %1028 = vmatprep.mubr.bf16.mxu0 0
        %1029 = vmatmul.mubr.bf16.gmra.mxu0 %v747
        %v1030 = vpop.f32.mrf.mxu0
        %v1031 = vadd.f32 %v452, %v1030
        %v1032 = vpop.f32.mrf.mxu0
        %v1033 = vpop.f32.mrf.mxu0
        %v1034 = vadd.f32 %v452, %v1033
        %v1035 = vpop.f32.mrf.mxu0
        %1036 = vmatprep.mubr.bf16.mxu0 0
        %1037 = vmatmul.mubr.bf16.gmra.mxu0 %v750
        %v1038 = vpop.f32.mrf.mxu0
        %v1039 = vadd.f32 %v452, %v1038
        %v1040 = vpop.f32.mrf.mxu0
        %v1041 = vpop.f32.mrf.mxu0
        %v1042 = vadd.f32 %v452, %v1041
        %v1043 = vpop.f32.mrf.mxu0
        %1044 = vdwg.mxu0
        %v1045 = vmul.f32 %v791, %v791
        %v1046 = vmul.f32 %v794, %v794
        %v1047 = vmul.f32 %v799, %v799
        %v1048 = vmul.f32 %v802, %v802
        %v1049 = vmul.f32 %v807, %v807
        %v1050 = vmul.f32 %v810, %v810
        %v1051 = vmul.f32 %v815, %v815
        %v1052 = vmul.f32 %v818, %v818
        %v1053 = vmul.f32 %v823, %v823
        %v1054 = vmul.f32 %v826, %v826
        %v1055 = vmul.f32 %v831, %v831
        %v1056 = vmul.f32 %v834, %v834
        %v1057 = vmul.f32 %v839, %v839
        %v1058 = vmul.f32 %v842, %v842
        %v1059 = vmul.f32 %v847, %v847
        %v1060 = vmul.f32 %v850, %v850
        %v1061 = vmul.f32 %v855, %v855
        %v1062 = vmul.f32 %v858, %v858
        %v1063 = vmul.f32 %v863, %v863
        %v1064 = vmul.f32 %v866, %v866
        %v1065 = vmul.f32 %v871, %v871
        %v1066 = vmul.f32 %v874, %v874
        %v1067 = vmul.f32 %v879, %v879
        %v1068 = vmul.f32 %v882, %v882
        %v1069 = vmul.f32 %v887, %v887
        %v1070 = vmul.f32 %v890, %v890
        %v1071 = vmul.f32 %v895, %v895
        %v1072 = vmul.f32 %v898, %v898
        %v1073 = vmul.f32 %v903, %v903
        %v1074 = vmul.f32 %v906, %v906
        %v1075 = vmul.f32 %v911, %v911
        %v1076 = vmul.f32 %v914, %v914
        %v1077 = vmul.f32 %v919, %v919
        %v1078 = vmul.f32 %v922, %v922
        %v1079 = vmul.f32 %v927, %v927
        %v1080 = vmul.f32 %v930, %v930
        %v1081 = vmul.f32 %v935, %v935
        %v1082 = vmul.f32 %v938, %v938
        %v1083 = vmul.f32 %v943, %v943
        %v1084 = vmul.f32 %v946, %v946
        %v1085 = vmul.f32 %v951, %v951
        %v1086 = vmul.f32 %v954, %v954
        %v1087 = vmul.f32 %v959, %v959
        %v1088 = vmul.f32 %v962, %v962
        %v1089 = vmul.f32 %v967, %v967
        %v1090 = vmul.f32 %v970, %v970
        %v1091 = vmul.f32 %v975, %v975
        %v1092 = vmul.f32 %v978, %v978
        %v1093 = vmul.f32 %v983, %v983
        %v1094 = vmul.f32 %v986, %v986
        %v1095 = vmul.f32 %v991, %v991
        %v1096 = vmul.f32 %v994, %v994
        %v1097 = vmul.f32 %v999, %v999
        %v1098 = vmul.f32 %v1002, %v1002
        %v1099 = vmul.f32 %v1007, %v1007
        %v1100 = vmul.f32 %v1010, %v1010
        %v1101 = vmul.f32 %v1015, %v1015
        %v1102 = vmul.f32 %v1018, %v1018
        %v1103 = vmul.f32 %v1023, %v1023
        %v1104 = vmul.f32 %v1026, %v1026
        %v1105 = vmul.f32 %v1031, %v1031
        %v1106 = vmul.f32 %v1034, %v1034
        %v1107 = vmul.f32 %v1039, %v1039
        %v1108 = vmul.f32 %v1042, %v1042
        %vm1109 = vcmask 261120
        %v1110 = vsel %vm1109, %v1045, 0.0
        %1111 = vadd.xlane.f32.xlu0 %v1110
        %v1112 = vpop.xlane.xlu0 %1111
        %v1113 = vsel %vm1109, %v1046, 0.0
        %1114 = vadd.xlane.f32.xlu0 %v1113
        %v1115 = vpop.xlane.xlu0 %1114
        %v1116 = vsel %vm1109, %v1047, 0.0
        %1117 = vadd.xlane.f32.xlu0 %v1116
        %v1118 = vpop.xlane.xlu0 %1117
        %v1119 = vsel %vm1109, %v1048, 0.0
        %1120 = vadd.xlane.f32.xlu0 %v1119
        %v1121 = vpop.xlane.xlu0 %1120
        %v1122 = vsel %vm1109, %v1049, 0.0
        %1123 = vadd.xlane.f32.xlu0 %v1122
        %v1124 = vpop.xlane.xlu0 %1123
        %v1125 = vsel %vm1109, %v1050, 0.0
        %1126 = vadd.xlane.f32.xlu0 %v1125
        %v1127 = vpop.xlane.xlu0 %1126
        %v1128 = vsel %vm1109, %v1051, 0.0
        %1129 = vadd.xlane.f32.xlu0 %v1128
        %v1130 = vpop.xlane.xlu0 %1129
        %v1131 = vsel %vm1109, %v1052, 0.0
        %1132 = vadd.xlane.f32.xlu0 %v1131
        %v1133 = vpop.xlane.xlu0 %1132
        %v1134 = vsel %vm1109, %v1053, 0.0
        %1135 = vadd.xlane.f32.xlu0 %v1134
        %v1136 = vpop.xlane.xlu0 %1135
        %v1137 = vsel %vm1109, %v1054, 0.0
        %1138 = vadd.xlane.f32.xlu0 %v1137
        %v1139 = vpop.xlane.xlu0 %1138
        %v1140 = vsel %vm1109, %v1055, 0.0
        %1141 = vadd.xlane.f32.xlu0 %v1140
        %v1142 = vpop.xlane.xlu0 %1141
        %v1143 = vsel %vm1109, %v1056, 0.0
        %1144 = vadd.xlane.f32.xlu0 %v1143
        %v1145 = vpop.xlane.xlu0 %1144
        %v1146 = vsel %vm1109, %v1057, 0.0
        %1147 = vadd.xlane.f32.xlu0 %v1146
        %v1148 = vpop.xlane.xlu0 %1147
        %v1149 = vsel %vm1109, %v1058, 0.0
        %1150 = vadd.xlane.f32.xlu0 %v1149
        %v1151 = vpop.xlane.xlu0 %1150
        %v1152 = vsel %vm1109, %v1059, 0.0
        %1153 = vadd.xlane.f32.xlu0 %v1152
        %v1154 = vpop.xlane.xlu0 %1153
        %v1155 = vsel %vm1109, %v1060, 0.0
        %1156 = vadd.xlane.f32.xlu0 %v1155
        %v1157 = vpop.xlane.xlu0 %1156
        %v1158 = vsel %vm1109, %v1061, 0.0
        %1159 = vadd.xlane.f32.xlu0 %v1158
        %v1160 = vpop.xlane.xlu0 %1159
        %v1161 = vsel %vm1109, %v1062, 0.0
        %1162 = vadd.xlane.f32.xlu0 %v1161
        %v1163 = vpop.xlane.xlu0 %1162
        %v1164 = vsel %vm1109, %v1063, 0.0
        %1165 = vadd.xlane.f32.xlu0 %v1164
        %v1166 = vpop.xlane.xlu0 %1165
        %v1167 = vsel %vm1109, %v1064, 0.0
        %1168 = vadd.xlane.f32.xlu0 %v1167
        %v1169 = vpop.xlane.xlu0 %1168
        %v1170 = vsel %vm1109, %v1065, 0.0
        %1171 = vadd.xlane.f32.xlu0 %v1170
        %v1172 = vpop.xlane.xlu0 %1171
        %v1173 = vsel %vm1109, %v1066, 0.0
        %1174 = vadd.xlane.f32.xlu0 %v1173
        %v1175 = vpop.xlane.xlu0 %1174
        %v1176 = vsel %vm1109, %v1067, 0.0
        %1177 = vadd.xlane.f32.xlu0 %v1176
        %v1178 = vpop.xlane.xlu0 %1177
        %v1179 = vsel %vm1109, %v1068, 0.0
        %1180 = vadd.xlane.f32.xlu0 %v1179
        %v1181 = vpop.xlane.xlu0 %1180
        %v1182 = vsel %vm1109, %v1069, 0.0
        %1183 = vadd.xlane.f32.xlu0 %v1182
        %v1184 = vpop.xlane.xlu0 %1183
        %v1185 = vsel %vm1109, %v1070, 0.0
        %1186 = vadd.xlane.f32.xlu0 %v1185
        %v1187 = vpop.xlane.xlu0 %1186
        %v1188 = vsel %vm1109, %v1071, 0.0
        %1189 = vadd.xlane.f32.xlu0 %v1188
        %v1190 = vpop.xlane.xlu0 %1189
        %v1191 = vsel %vm1109, %v1072, 0.0
        %1192 = vadd.xlane.f32.xlu0 %v1191
        %v1193 = vpop.xlane.xlu0 %1192
        %v1194 = vsel %vm1109, %v1073, 0.0
        %1195 = vadd.xlane.f32.xlu0 %v1194
        %v1196 = vpop.xlane.xlu0 %1195
        %v1197 = vsel %vm1109, %v1074, 0.0
        %1198 = vadd.xlane.f32.xlu0 %v1197
        %v1199 = vpop.xlane.xlu0 %1198
        %v1200 = vsel %vm1109, %v1075, 0.0
        %1201 = vadd.xlane.f32.xlu0 %v1200
        %v1202 = vpop.xlane.xlu0 %1201
        %v1203 = vsel %vm1109, %v1076, 0.0
        %1204 = vadd.xlane.f32.xlu0 %v1203
        %v1205 = vpop.xlane.xlu0 %1204
        %v1206 = vsel %vm1109, %v1077, 0.0
        %1207 = vadd.xlane.f32.xlu0 %v1206
        %v1208 = vpop.xlane.xlu0 %1207
        %v1209 = vsel %vm1109, %v1078, 0.0
        %1210 = vadd.xlane.f32.xlu0 %v1209
        %v1211 = vpop.xlane.xlu0 %1210
        %v1212 = vsel %vm1109, %v1079, 0.0
        %1213 = vadd.xlane.f32.xlu0 %v1212
        %v1214 = vpop.xlane.xlu0 %1213
        %v1215 = vsel %vm1109, %v1080, 0.0
        %1216 = vadd.xlane.f32.xlu0 %v1215
        %v1217 = vpop.xlane.xlu0 %1216
        %v1218 = vsel %vm1109, %v1081, 0.0
        %1219 = vadd.xlane.f32.xlu0 %v1218
        %v1220 = vpop.xlane.xlu0 %1219
        %v1221 = vsel %vm1109, %v1082, 0.0
        %1222 = vadd.xlane.f32.xlu0 %v1221
        %v1223 = vpop.xlane.xlu0 %1222
        %v1224 = vsel %vm1109, %v1083, 0.0
        %1225 = vadd.xlane.f32.xlu0 %v1224
        %v1226 = vpop.xlane.xlu0 %1225
        %v1227 = vsel %vm1109, %v1084, 0.0
        %1228 = vadd.xlane.f32.xlu0 %v1227
        %v1229 = vpop.xlane.xlu0 %1228
        %v1230 = vsel %vm1109, %v1085, 0.0
        %1231 = vadd.xlane.f32.xlu0 %v1230
        %v1232 = vpop.xlane.xlu0 %1231
        %v1233 = vsel %vm1109, %v1086, 0.0
        %1234 = vadd.xlane.f32.xlu0 %v1233
        %v1235 = vpop.xlane.xlu0 %1234
        %v1236 = vsel %vm1109, %v1087, 0.0
        %1237 = vadd.xlane.f32.xlu0 %v1236
        %v1238 = vpop.xlane.xlu0 %1237
        %v1239 = vsel %vm1109, %v1088, 0.0
        %1240 = vadd.xlane.f32.xlu0 %v1239
        %v1241 = vpop.xlane.xlu0 %1240
        %v1242 = vsel %vm1109, %v1089, 0.0
        %1243 = vadd.xlane.f32.xlu0 %v1242
        %v1244 = vpop.xlane.xlu0 %1243
        %v1245 = vsel %vm1109, %v1090, 0.0
        %1246 = vadd.xlane.f32.xlu0 %v1245
        %v1247 = vpop.xlane.xlu0 %1246
        %v1248 = vsel %vm1109, %v1091, 0.0
        %1249 = vadd.xlane.f32.xlu0 %v1248
        %v1250 = vpop.xlane.xlu0 %1249
        %v1251 = vsel %vm1109, %v1092, 0.0
        %1252 = vadd.xlane.f32.xlu0 %v1251
        %v1253 = vpop.xlane.xlu0 %1252
        %v1254 = vsel %vm1109, %v1093, 0.0
        %1255 = vadd.xlane.f32.xlu0 %v1254
        %v1256 = vpop.xlane.xlu0 %1255
        %v1257 = vsel %vm1109, %v1094, 0.0
        %1258 = vadd.xlane.f32.xlu0 %v1257
        %v1259 = vpop.xlane.xlu0 %1258
        %v1260 = vsel %vm1109, %v1095, 0.0
        %1261 = vadd.xlane.f32.xlu0 %v1260
        %v1262 = vpop.xlane.xlu0 %1261
        %v1263 = vsel %vm1109, %v1096, 0.0
        %1264 = vadd.xlane.f32.xlu0 %v1263
        %v1265 = vpop.xlane.xlu0 %1264
        %v1266 = vsel %vm1109, %v1097, 0.0
        %1267 = vadd.xlane.f32.xlu0 %v1266
        %v1268 = vpop.xlane.xlu0 %1267
        %v1269 = vsel %vm1109, %v1098, 0.0
        %1270 = vadd.xlane.f32.xlu0 %v1269
        %v1271 = vpop.xlane.xlu0 %1270
        %v1272 = vsel %vm1109, %v1099, 0.0
        %1273 = vadd.xlane.f32.xlu0 %v1272
        %v1274 = vpop.xlane.xlu0 %1273
        %v1275 = vsel %vm1109, %v1100, 0.0
        %1276 = vadd.xlane.f32.xlu0 %v1275
        %v1277 = vpop.xlane.xlu0 %1276
        %v1278 = vsel %vm1109, %v1101, 0.0
        %1279 = vadd.xlane.f32.xlu0 %v1278
        %v1280 = vpop.xlane.xlu0 %1279
        %v1281 = vsel %vm1109, %v1102, 0.0
        %1282 = vadd.xlane.f32.xlu0 %v1281
        %v1283 = vpop.xlane.xlu0 %1282
        %v1284 = vsel %vm1109, %v1103, 0.0
        %1285 = vadd.xlane.f32.xlu0 %v1284
        %v1286 = vpop.xlane.xlu0 %1285
        %v1287 = vsel %vm1109, %v1104, 0.0
        %1288 = vadd.xlane.f32.xlu0 %v1287
        %v1289 = vpop.xlane.xlu0 %1288
        %v1290 = vsel %vm1109, %v1105, 0.0
        %1291 = vadd.xlane.f32.xlu0 %v1290
        %v1292 = vpop.xlane.xlu0 %1291
        %v1293 = vsel %vm1109, %v1106, 0.0
        %1294 = vadd.xlane.f32.xlu0 %v1293
        %v1295 = vpop.xlane.xlu0 %1294
        %v1296 = vsel %vm1109, %v1107, 0.0
        %1297 = vadd.xlane.f32.xlu0 %v1296
        %v1298 = vpop.xlane.xlu0 %1297
        %v1299 = vsel %vm1109, %v1108, 0.0
        %1300 = vadd.xlane.f32.xlu0 %v1299
        %v1301 = vpop.xlane.xlu0 %1300
        %v1302 = vrsqrt.pop %v1112
        %v1303 = vmul.f32 %v1112, %v1302
        %vm1304 = vcmp.eq.f32.partialorder %v1112, inf
        %v1305 = vsel %vm1304, %v1112, %v1303
        %vm1306 = vcmp.eq.f32.partialorder %v1112, 0.0
        %v1307 = vand.u32 %v1112, 2147483648
        %v1308 = vsel %vm1306, %v1307, %v1305
        %v1309 = vrsqrt.pop %v1115
        %v1310 = vmul.f32 %v1115, %v1309
        %vm1311 = vcmp.eq.f32.partialorder %v1115, inf
        %v1312 = vsel %vm1311, %v1115, %v1310
        %vm1313 = vcmp.eq.f32.partialorder %v1115, 0.0
        %v1314 = vand.u32 %v1115, 2147483648
        %v1315 = vsel %vm1313, %v1314, %v1312
        %v1316 = vrsqrt.pop %v1118
        %v1317 = vmul.f32 %v1118, %v1316
        %vm1318 = vcmp.eq.f32.partialorder %v1118, inf
        %v1319 = vsel %vm1318, %v1118, %v1317
        %vm1320 = vcmp.eq.f32.partialorder %v1118, 0.0
        %v1321 = vand.u32 %v1118, 2147483648
        %v1322 = vsel %vm1320, %v1321, %v1319
        %v1323 = vrsqrt.pop %v1121
        %v1324 = vmul.f32 %v1121, %v1323
        %vm1325 = vcmp.eq.f32.partialorder %v1121, inf
        %v1326 = vsel %vm1325, %v1121, %v1324
        %vm1327 = vcmp.eq.f32.partialorder %v1121, 0.0
        %v1328 = vand.u32 %v1121, 2147483648
        %v1329 = vsel %vm1327, %v1328, %v1326
        %v1330 = vrsqrt.pop %v1124
        %v1331 = vmul.f32 %v1124, %v1330
        %vm1332 = vcmp.eq.f32.partialorder %v1124, inf
        %v1333 = vsel %vm1332, %v1124, %v1331
        %vm1334 = vcmp.eq.f32.partialorder %v1124, 0.0
        %v1335 = vand.u32 %v1124, 2147483648
        %v1336 = vsel %vm1334, %v1335, %v1333
        %v1337 = vrsqrt.pop %v1127
        %v1338 = vmul.f32 %v1127, %v1337
        %vm1339 = vcmp.eq.f32.partialorder %v1127, inf
        %v1340 = vsel %vm1339, %v1127, %v1338
        %vm1341 = vcmp.eq.f32.partialorder %v1127, 0.0
        %v1342 = vand.u32 %v1127, 2147483648
        %v1343 = vsel %vm1341, %v1342, %v1340
        %v1344 = vrsqrt.pop %v1130
        %v1345 = vmul.f32 %v1130, %v1344
        %vm1346 = vcmp.eq.f32.partialorder %v1130, inf
        %v1347 = vsel %vm1346, %v1130, %v1345
        %vm1348 = vcmp.eq.f32.partialorder %v1130, 0.0
        %v1349 = vand.u32 %v1130, 2147483648
        %v1350 = vsel %vm1348, %v1349, %v1347
        %v1351 = vrsqrt.pop %v1133
        %v1352 = vmul.f32 %v1133, %v1351
        %vm1353 = vcmp.eq.f32.partialorder %v1133, inf
        %v1354 = vsel %vm1353, %v1133, %v1352
        %vm1355 = vcmp.eq.f32.partialorder %v1133, 0.0
        %v1356 = vand.u32 %v1133, 2147483648
        %v1357 = vsel %vm1355, %v1356, %v1354
        %v1358 = vrsqrt.pop %v1136
        %v1359 = vmul.f32 %v1136, %v1358
        %vm1360 = vcmp.eq.f32.partialorder %v1136, inf
        %v1361 = vsel %vm1360, %v1136, %v1359
        %vm1362 = vcmp.eq.f32.partialorder %v1136, 0.0
        %v1363 = vand.u32 %v1136, 2147483648
        %v1364 = vsel %vm1362, %v1363, %v1361
        %v1365 = vrsqrt.pop %v1139
        %v1366 = vmul.f32 %v1139, %v1365
        %vm1367 = vcmp.eq.f32.partialorder %v1139, inf
        %v1368 = vsel %vm1367, %v1139, %v1366
        %vm1369 = vcmp.eq.f32.partialorder %v1139, 0.0
        %v1370 = vand.u32 %v1139, 2147483648
        %v1371 = vsel %vm1369, %v1370, %v1368
        %v1372 = vrsqrt.pop %v1142
        %v1373 = vmul.f32 %v1142, %v1372
        %vm1374 = vcmp.eq.f32.partialorder %v1142, inf
        %v1375 = vsel %vm1374, %v1142, %v1373
        %vm1376 = vcmp.eq.f32.partialorder %v1142, 0.0
        %v1377 = vand.u32 %v1142, 2147483648
        %v1378 = vsel %vm1376, %v1377, %v1375
        %v1379 = vrsqrt.pop %v1145
        %v1380 = vmul.f32 %v1145, %v1379
        %vm1381 = vcmp.eq.f32.partialorder %v1145, inf
        %v1382 = vsel %vm1381, %v1145, %v1380
        %vm1383 = vcmp.eq.f32.partialorder %v1145, 0.0
        %v1384 = vand.u32 %v1145, 2147483648
        %v1385 = vsel %vm1383, %v1384, %v1382
        %v1386 = vrsqrt.pop %v1148
        %v1387 = vmul.f32 %v1148, %v1386
        %vm1388 = vcmp.eq.f32.partialorder %v1148, inf
        %v1389 = vsel %vm1388, %v1148, %v1387
        %vm1390 = vcmp.eq.f32.partialorder %v1148, 0.0
        %v1391 = vand.u32 %v1148, 2147483648
        %v1392 = vsel %vm1390, %v1391, %v1389
        %v1393 = vrsqrt.pop %v1151
        %v1394 = vmul.f32 %v1151, %v1393
        %vm1395 = vcmp.eq.f32.partialorder %v1151, inf
        %v1396 = vsel %vm1395, %v1151, %v1394
        %vm1397 = vcmp.eq.f32.partialorder %v1151, 0.0
        %v1398 = vand.u32 %v1151, 2147483648
        %v1399 = vsel %vm1397, %v1398, %v1396
        %v1400 = vrsqrt.pop %v1154
        %v1401 = vmul.f32 %v1154, %v1400
        %vm1402 = vcmp.eq.f32.partialorder %v1154, inf
        %v1403 = vsel %vm1402, %v1154, %v1401
        %vm1404 = vcmp.eq.f32.partialorder %v1154, 0.0
        %v1405 = vand.u32 %v1154, 2147483648
        %v1406 = vsel %vm1404, %v1405, %v1403
        %v1407 = vrsqrt.pop %v1157
        %v1408 = vmul.f32 %v1157, %v1407
        %vm1409 = vcmp.eq.f32.partialorder %v1157, inf
        %v1410 = vsel %vm1409, %v1157, %v1408
        %vm1411 = vcmp.eq.f32.partialorder %v1157, 0.0
        %v1412 = vand.u32 %v1157, 2147483648
        %v1413 = vsel %vm1411, %v1412, %v1410
        %v1414 = vrsqrt.pop %v1160
        %v1415 = vmul.f32 %v1160, %v1414
        %vm1416 = vcmp.eq.f32.partialorder %v1160, inf
        %v1417 = vsel %vm1416, %v1160, %v1415
        %vm1418 = vcmp.eq.f32.partialorder %v1160, 0.0
        %v1419 = vand.u32 %v1160, 2147483648
        %v1420 = vsel %vm1418, %v1419, %v1417
        %v1421 = vrsqrt.pop %v1163
        %v1422 = vmul.f32 %v1163, %v1421
        %vm1423 = vcmp.eq.f32.partialorder %v1163, inf
        %v1424 = vsel %vm1423, %v1163, %v1422
        %vm1425 = vcmp.eq.f32.partialorder %v1163, 0.0
        %v1426 = vand.u32 %v1163, 2147483648
        %v1427 = vsel %vm1425, %v1426, %v1424
        %v1428 = vrsqrt.pop %v1166
        %v1429 = vmul.f32 %v1166, %v1428
        %vm1430 = vcmp.eq.f32.partialorder %v1166, inf
        %v1431 = vsel %vm1430, %v1166, %v1429
        %vm1432 = vcmp.eq.f32.partialorder %v1166, 0.0
        %v1433 = vand.u32 %v1166, 2147483648
        %v1434 = vsel %vm1432, %v1433, %v1431
        %v1435 = vrsqrt.pop %v1169
        %v1436 = vmul.f32 %v1169, %v1435
        %vm1437 = vcmp.eq.f32.partialorder %v1169, inf
        %v1438 = vsel %vm1437, %v1169, %v1436
        %vm1439 = vcmp.eq.f32.partialorder %v1169, 0.0
        %v1440 = vand.u32 %v1169, 2147483648
        %v1441 = vsel %vm1439, %v1440, %v1438
        %v1442 = vrsqrt.pop %v1172
        %v1443 = vmul.f32 %v1172, %v1442
        %vm1444 = vcmp.eq.f32.partialorder %v1172, inf
        %v1445 = vsel %vm1444, %v1172, %v1443
        %vm1446 = vcmp.eq.f32.partialorder %v1172, 0.0
        %v1447 = vand.u32 %v1172, 2147483648
        %v1448 = vsel %vm1446, %v1447, %v1445
        %v1449 = vrsqrt.pop %v1175
        %v1450 = vmul.f32 %v1175, %v1449
        %vm1451 = vcmp.eq.f32.partialorder %v1175, inf
        %v1452 = vsel %vm1451, %v1175, %v1450
        %vm1453 = vcmp.eq.f32.partialorder %v1175, 0.0
        %v1454 = vand.u32 %v1175, 2147483648
        %v1455 = vsel %vm1453, %v1454, %v1452
        %v1456 = vrsqrt.pop %v1178
        %v1457 = vmul.f32 %v1178, %v1456
        %vm1458 = vcmp.eq.f32.partialorder %v1178, inf
        %v1459 = vsel %vm1458, %v1178, %v1457
        %vm1460 = vcmp.eq.f32.partialorder %v1178, 0.0
        %v1461 = vand.u32 %v1178, 2147483648
        %v1462 = vsel %vm1460, %v1461, %v1459
        %v1463 = vrsqrt.pop %v1181
        %v1464 = vmul.f32 %v1181, %v1463
        %vm1465 = vcmp.eq.f32.partialorder %v1181, inf
        %v1466 = vsel %vm1465, %v1181, %v1464
        %vm1467 = vcmp.eq.f32.partialorder %v1181, 0.0
        %v1468 = vand.u32 %v1181, 2147483648
        %v1469 = vsel %vm1467, %v1468, %v1466
        %v1470 = vrsqrt.pop %v1184
        %v1471 = vmul.f32 %v1184, %v1470
        %vm1472 = vcmp.eq.f32.partialorder %v1184, inf
        %v1473 = vsel %vm1472, %v1184, %v1471
        %vm1474 = vcmp.eq.f32.partialorder %v1184, 0.0
        %v1475 = vand.u32 %v1184, 2147483648
        %v1476 = vsel %vm1474, %v1475, %v1473
        %v1477 = vrsqrt.pop %v1187
        %v1478 = vmul.f32 %v1187, %v1477
        %vm1479 = vcmp.eq.f32.partialorder %v1187, inf
        %v1480 = vsel %vm1479, %v1187, %v1478
        %vm1481 = vcmp.eq.f32.partialorder %v1187, 0.0
        %v1482 = vand.u32 %v1187, 2147483648
        %v1483 = vsel %vm1481, %v1482, %v1480
        %v1484 = vrsqrt.pop %v1190
        %v1485 = vmul.f32 %v1190, %v1484
        %vm1486 = vcmp.eq.f32.partialorder %v1190, inf
        %v1487 = vsel %vm1486, %v1190, %v1485
        %vm1488 = vcmp.eq.f32.partialorder %v1190, 0.0
        %v1489 = vand.u32 %v1190, 2147483648
        %v1490 = vsel %vm1488, %v1489, %v1487
        %v1491 = vrsqrt.pop %v1193
        %v1492 = vmul.f32 %v1193, %v1491
        %vm1493 = vcmp.eq.f32.partialorder %v1193, inf
        %v1494 = vsel %vm1493, %v1193, %v1492
        %vm1495 = vcmp.eq.f32.partialorder %v1193, 0.0
        %v1496 = vand.u32 %v1193, 2147483648
        %v1497 = vsel %vm1495, %v1496, %v1494
        %v1498 = vrsqrt.pop %v1196
        %v1499 = vmul.f32 %v1196, %v1498
        %vm1500 = vcmp.eq.f32.partialorder %v1196, inf
        %v1501 = vsel %vm1500, %v1196, %v1499
        %vm1502 = vcmp.eq.f32.partialorder %v1196, 0.0
        %v1503 = vand.u32 %v1196, 2147483648
        %v1504 = vsel %vm1502, %v1503, %v1501
        %v1505 = vrsqrt.pop %v1199
        %v1506 = vmul.f32 %v1199, %v1505
        %vm1507 = vcmp.eq.f32.partialorder %v1199, inf
        %v1508 = vsel %vm1507, %v1199, %v1506
        %vm1509 = vcmp.eq.f32.partialorder %v1199, 0.0
        %v1510 = vand.u32 %v1199, 2147483648
        %v1511 = vsel %vm1509, %v1510, %v1508
        %v1512 = vrsqrt.pop %v1202
        %v1513 = vmul.f32 %v1202, %v1512
        %vm1514 = vcmp.eq.f32.partialorder %v1202, inf
        %v1515 = vsel %vm1514, %v1202, %v1513
        %vm1516 = vcmp.eq.f32.partialorder %v1202, 0.0
        %v1517 = vand.u32 %v1202, 2147483648
        %v1518 = vsel %vm1516, %v1517, %v1515
        %v1519 = vrsqrt.pop %v1205
        %v1520 = vmul.f32 %v1205, %v1519
        %vm1521 = vcmp.eq.f32.partialorder %v1205, inf
        %v1522 = vsel %vm1521, %v1205, %v1520
        %vm1523 = vcmp.eq.f32.partialorder %v1205, 0.0
        %v1524 = vand.u32 %v1205, 2147483648
        %v1525 = vsel %vm1523, %v1524, %v1522
        %v1526 = vrsqrt.pop %v1208
        %v1527 = vmul.f32 %v1208, %v1526
        %vm1528 = vcmp.eq.f32.partialorder %v1208, inf
        %v1529 = vsel %vm1528, %v1208, %v1527
        %vm1530 = vcmp.eq.f32.partialorder %v1208, 0.0
        %v1531 = vand.u32 %v1208, 2147483648
        %v1532 = vsel %vm1530, %v1531, %v1529
        %v1533 = vrsqrt.pop %v1211
        %v1534 = vmul.f32 %v1211, %v1533
        %vm1535 = vcmp.eq.f32.partialorder %v1211, inf
        %v1536 = vsel %vm1535, %v1211, %v1534
        %vm1537 = vcmp.eq.f32.partialorder %v1211, 0.0
        %v1538 = vand.u32 %v1211, 2147483648
        %v1539 = vsel %vm1537, %v1538, %v1536
        %v1540 = vrsqrt.pop %v1214
        %v1541 = vmul.f32 %v1214, %v1540
        %vm1542 = vcmp.eq.f32.partialorder %v1214, inf
        %v1543 = vsel %vm1542, %v1214, %v1541
        %vm1544 = vcmp.eq.f32.partialorder %v1214, 0.0
        %v1545 = vand.u32 %v1214, 2147483648
        %v1546 = vsel %vm1544, %v1545, %v1543
        %v1547 = vrsqrt.pop %v1217
        %v1548 = vmul.f32 %v1217, %v1547
        %vm1549 = vcmp.eq.f32.partialorder %v1217, inf
        %v1550 = vsel %vm1549, %v1217, %v1548
        %vm1551 = vcmp.eq.f32.partialorder %v1217, 0.0
        %v1552 = vand.u32 %v1217, 2147483648
        %v1553 = vsel %vm1551, %v1552, %v1550
        %v1554 = vrsqrt.pop %v1220
        %v1555 = vmul.f32 %v1220, %v1554
        %vm1556 = vcmp.eq.f32.partialorder %v1220, inf
        %v1557 = vsel %vm1556, %v1220, %v1555
        %vm1558 = vcmp.eq.f32.partialorder %v1220, 0.0
        %v1559 = vand.u32 %v1220, 2147483648
        %v1560 = vsel %vm1558, %v1559, %v1557
        %v1561 = vrsqrt.pop %v1223
        %v1562 = vmul.f32 %v1223, %v1561
        %vm1563 = vcmp.eq.f32.partialorder %v1223, inf
        %v1564 = vsel %vm1563, %v1223, %v1562
        %vm1565 = vcmp.eq.f32.partialorder %v1223, 0.0
        %v1566 = vand.u32 %v1223, 2147483648
        %v1567 = vsel %vm1565, %v1566, %v1564
        %v1568 = vrsqrt.pop %v1226
        %v1569 = vmul.f32 %v1226, %v1568
        %vm1570 = vcmp.eq.f32.partialorder %v1226, inf
        %v1571 = vsel %vm1570, %v1226, %v1569
        %vm1572 = vcmp.eq.f32.partialorder %v1226, 0.0
        %v1573 = vand.u32 %v1226, 2147483648
        %v1574 = vsel %vm1572, %v1573, %v1571
        %v1575 = vrsqrt.pop %v1229
        %v1576 = vmul.f32 %v1229, %v1575
        %vm1577 = vcmp.eq.f32.partialorder %v1229, inf
        %v1578 = vsel %vm1577, %v1229, %v1576
        %vm1579 = vcmp.eq.f32.partialorder %v1229, 0.0
        %v1580 = vand.u32 %v1229, 2147483648
        %v1581 = vsel %vm1579, %v1580, %v1578
        %v1582 = vrsqrt.pop %v1232
        %v1583 = vmul.f32 %v1232, %v1582
        %vm1584 = vcmp.eq.f32.partialorder %v1232, inf
        %v1585 = vsel %vm1584, %v1232, %v1583
        %vm1586 = vcmp.eq.f32.partialorder %v1232, 0.0
        %v1587 = vand.u32 %v1232, 2147483648
        %v1588 = vsel %vm1586, %v1587, %v1585
        %v1589 = vrsqrt.pop %v1235
        %v1590 = vmul.f32 %v1235, %v1589
        %vm1591 = vcmp.eq.f32.partialorder %v1235, inf
        %v1592 = vsel %vm1591, %v1235, %v1590
        %vm1593 = vcmp.eq.f32.partialorder %v1235, 0.0
        %v1594 = vand.u32 %v1235, 2147483648
        %v1595 = vsel %vm1593, %v1594, %v1592
        %v1596 = vrsqrt.pop %v1238
        %v1597 = vmul.f32 %v1238, %v1596
        %vm1598 = vcmp.eq.f32.partialorder %v1238, inf
        %v1599 = vsel %vm1598, %v1238, %v1597
        %vm1600 = vcmp.eq.f32.partialorder %v1238, 0.0
        %v1601 = vand.u32 %v1238, 2147483648
        %v1602 = vsel %vm1600, %v1601, %v1599
        %v1603 = vrsqrt.pop %v1241
        %v1604 = vmul.f32 %v1241, %v1603
        %vm1605 = vcmp.eq.f32.partialorder %v1241, inf
        %v1606 = vsel %vm1605, %v1241, %v1604
        %vm1607 = vcmp.eq.f32.partialorder %v1241, 0.0
        %v1608 = vand.u32 %v1241, 2147483648
        %v1609 = vsel %vm1607, %v1608, %v1606
        %v1610 = vrsqrt.pop %v1244
        %v1611 = vmul.f32 %v1244, %v1610
        %vm1612 = vcmp.eq.f32.partialorder %v1244, inf
        %v1613 = vsel %vm1612, %v1244, %v1611
        %vm1614 = vcmp.eq.f32.partialorder %v1244, 0.0
        %v1615 = vand.u32 %v1244, 2147483648
        %v1616 = vsel %vm1614, %v1615, %v1613
        %v1617 = vrsqrt.pop %v1247
        %v1618 = vmul.f32 %v1247, %v1617
        %vm1619 = vcmp.eq.f32.partialorder %v1247, inf
        %v1620 = vsel %vm1619, %v1247, %v1618
        %vm1621 = vcmp.eq.f32.partialorder %v1247, 0.0
        %v1622 = vand.u32 %v1247, 2147483648
        %v1623 = vsel %vm1621, %v1622, %v1620
        %v1624 = vrsqrt.pop %v1250
        %v1625 = vmul.f32 %v1250, %v1624
        %vm1626 = vcmp.eq.f32.partialorder %v1250, inf
        %v1627 = vsel %vm1626, %v1250, %v1625
        %vm1628 = vcmp.eq.f32.partialorder %v1250, 0.0
        %v1629 = vand.u32 %v1250, 2147483648
        %v1630 = vsel %vm1628, %v1629, %v1627
        %v1631 = vrsqrt.pop %v1253
        %v1632 = vmul.f32 %v1253, %v1631
        %vm1633 = vcmp.eq.f32.partialorder %v1253, inf
        %v1634 = vsel %vm1633, %v1253, %v1632
        %vm1635 = vcmp.eq.f32.partialorder %v1253, 0.0
        %v1636 = vand.u32 %v1253, 2147483648
        %v1637 = vsel %vm1635, %v1636, %v1634
        %v1638 = vrsqrt.pop %v1256
        %v1639 = vmul.f32 %v1256, %v1638
        %vm1640 = vcmp.eq.f32.partialorder %v1256, inf
        %v1641 = vsel %vm1640, %v1256, %v1639
        %vm1642 = vcmp.eq.f32.partialorder %v1256, 0.0
        %v1643 = vand.u32 %v1256, 2147483648
        %v1644 = vsel %vm1642, %v1643, %v1641
        %v1645 = vrsqrt.pop %v1259
        %v1646 = vmul.f32 %v1259, %v1645
        %vm1647 = vcmp.eq.f32.partialorder %v1259, inf
        %v1648 = vsel %vm1647, %v1259, %v1646
        %vm1649 = vcmp.eq.f32.partialorder %v1259, 0.0
        %v1650 = vand.u32 %v1259, 2147483648
        %v1651 = vsel %vm1649, %v1650, %v1648
        %v1652 = vrsqrt.pop %v1262
        %v1653 = vmul.f32 %v1262, %v1652
        %vm1654 = vcmp.eq.f32.partialorder %v1262, inf
        %v1655 = vsel %vm1654, %v1262, %v1653
        %vm1656 = vcmp.eq.f32.partialorder %v1262, 0.0
        %v1657 = vand.u32 %v1262, 2147483648
        %v1658 = vsel %vm1656, %v1657, %v1655
        %v1659 = vrsqrt.pop %v1265
        %v1660 = vmul.f32 %v1265, %v1659
        %vm1661 = vcmp.eq.f32.partialorder %v1265, inf
        %v1662 = vsel %vm1661, %v1265, %v1660
        %vm1663 = vcmp.eq.f32.partialorder %v1265, 0.0
        %v1664 = vand.u32 %v1265, 2147483648
        %v1665 = vsel %vm1663, %v1664, %v1662
        %v1666 = vrsqrt.pop %v1268
        %v1667 = vmul.f32 %v1268, %v1666
        %vm1668 = vcmp.eq.f32.partialorder %v1268, inf
        %v1669 = vsel %vm1668, %v1268, %v1667
        %vm1670 = vcmp.eq.f32.partialorder %v1268, 0.0
        %v1671 = vand.u32 %v1268, 2147483648
        %v1672 = vsel %vm1670, %v1671, %v1669
        %v1673 = vrsqrt.pop %v1271
        %v1674 = vmul.f32 %v1271, %v1673
        %vm1675 = vcmp.eq.f32.partialorder %v1271, inf
        %v1676 = vsel %vm1675, %v1271, %v1674
        %vm1677 = vcmp.eq.f32.partialorder %v1271, 0.0
        %v1678 = vand.u32 %v1271, 2147483648
        %v1679 = vsel %vm1677, %v1678, %v1676
        %v1680 = vrsqrt.pop %v1274
        %v1681 = vmul.f32 %v1274, %v1680
        %vm1682 = vcmp.eq.f32.partialorder %v1274, inf
        %v1683 = vsel %vm1682, %v1274, %v1681
        %vm1684 = vcmp.eq.f32.partialorder %v1274, 0.0
        %v1685 = vand.u32 %v1274, 2147483648
        %v1686 = vsel %vm1684, %v1685, %v1683
        %v1687 = vrsqrt.pop %v1277
        %v1688 = vmul.f32 %v1277, %v1687
        %vm1689 = vcmp.eq.f32.partialorder %v1277, inf
        %v1690 = vsel %vm1689, %v1277, %v1688
        %vm1691 = vcmp.eq.f32.partialorder %v1277, 0.0
        %v1692 = vand.u32 %v1277, 2147483648
        %v1693 = vsel %vm1691, %v1692, %v1690
        %v1694 = vrsqrt.pop %v1280
        %v1695 = vmul.f32 %v1280, %v1694
        %vm1696 = vcmp.eq.f32.partialorder %v1280, inf
        %v1697 = vsel %vm1696, %v1280, %v1695
        %vm1698 = vcmp.eq.f32.partialorder %v1280, 0.0
        %v1699 = vand.u32 %v1280, 2147483648
        %v1700 = vsel %vm1698, %v1699, %v1697
        %v1701 = vrsqrt.pop %v1283
        %v1702 = vmul.f32 %v1283, %v1701
        %vm1703 = vcmp.eq.f32.partialorder %v1283, inf
        %v1704 = vsel %vm1703, %v1283, %v1702
        %vm1705 = vcmp.eq.f32.partialorder %v1283, 0.0
        %v1706 = vand.u32 %v1283, 2147483648
        %v1707 = vsel %vm1705, %v1706, %v1704
        %v1708 = vrsqrt.pop %v1286
        %v1709 = vmul.f32 %v1286, %v1708
        %vm1710 = vcmp.eq.f32.partialorder %v1286, inf
        %v1711 = vsel %vm1710, %v1286, %v1709
        %vm1712 = vcmp.eq.f32.partialorder %v1286, 0.0
        %v1713 = vand.u32 %v1286, 2147483648
        %v1714 = vsel %vm1712, %v1713, %v1711
        %v1715 = vrsqrt.pop %v1289
        %v1716 = vmul.f32 %v1289, %v1715
        %vm1717 = vcmp.eq.f32.partialorder %v1289, inf
        %v1718 = vsel %vm1717, %v1289, %v1716
        %vm1719 = vcmp.eq.f32.partialorder %v1289, 0.0
        %v1720 = vand.u32 %v1289, 2147483648
        %v1721 = vsel %vm1719, %v1720, %v1718
        %v1722 = vrsqrt.pop %v1292
        %v1723 = vmul.f32 %v1292, %v1722
        %vm1724 = vcmp.eq.f32.partialorder %v1292, inf
        %v1725 = vsel %vm1724, %v1292, %v1723
        %vm1726 = vcmp.eq.f32.partialorder %v1292, 0.0
        %v1727 = vand.u32 %v1292, 2147483648
        %v1728 = vsel %vm1726, %v1727, %v1725
        %v1729 = vrsqrt.pop %v1295
        %v1730 = vmul.f32 %v1295, %v1729
        %vm1731 = vcmp.eq.f32.partialorder %v1295, inf
        %v1732 = vsel %vm1731, %v1295, %v1730
        %vm1733 = vcmp.eq.f32.partialorder %v1295, 0.0
        %v1734 = vand.u32 %v1295, 2147483648
        %v1735 = vsel %vm1733, %v1734, %v1732
        %v1736 = vrsqrt.pop %v1298
        %v1737 = vmul.f32 %v1298, %v1736
        %vm1738 = vcmp.eq.f32.partialorder %v1298, inf
        %v1739 = vsel %vm1738, %v1298, %v1737
        %vm1740 = vcmp.eq.f32.partialorder %v1298, 0.0
        %v1741 = vand.u32 %v1298, 2147483648
        %v1742 = vsel %vm1740, %v1741, %v1739
        %v1743 = vrsqrt.pop %v1301
        %v1744 = vmul.f32 %v1301, %v1743
        %vm1745 = vcmp.eq.f32.partialorder %v1301, inf
        %v1746 = vsel %vm1745, %v1301, %v1744
        %vm1747 = vcmp.eq.f32.partialorder %v1301, 0.0
        %v1748 = vand.u32 %v1301, 2147483648
        %v1749 = vsel %vm1747, %v1748, %v1746
        %v1750 = vadd.f32 %v1308, 1e-06
        %v1751 = vadd.f32 %v1315, 1e-06
        %v1752 = vadd.f32 %v1322, 1e-06
        %v1753 = vadd.f32 %v1329, 1e-06
        %v1754 = vadd.f32 %v1336, 1e-06
        %v1755 = vadd.f32 %v1343, 1e-06
        %v1756 = vadd.f32 %v1350, 1e-06
        %v1757 = vadd.f32 %v1357, 1e-06
        %v1758 = vadd.f32 %v1364, 1e-06
        %v1759 = vadd.f32 %v1371, 1e-06
        %v1760 = vadd.f32 %v1378, 1e-06
        %v1761 = vadd.f32 %v1385, 1e-06
        %v1762 = vadd.f32 %v1392, 1e-06
        %v1763 = vadd.f32 %v1399, 1e-06
        %v1764 = vadd.f32 %v1406, 1e-06
        %v1765 = vadd.f32 %v1413, 1e-06
        %v1766 = vadd.f32 %v1420, 1e-06
        %v1767 = vadd.f32 %v1427, 1e-06
        %v1768 = vadd.f32 %v1434, 1e-06
        %v1769 = vadd.f32 %v1441, 1e-06
        %v1770 = vadd.f32 %v1448, 1e-06
        %v1771 = vadd.f32 %v1455, 1e-06
        %v1772 = vadd.f32 %v1462, 1e-06
        %v1773 = vadd.f32 %v1469, 1e-06
        %v1774 = vadd.f32 %v1476, 1e-06
        %v1775 = vadd.f32 %v1483, 1e-06
        %v1776 = vadd.f32 %v1490, 1e-06
        %v1777 = vadd.f32 %v1497, 1e-06
        %v1778 = vadd.f32 %v1504, 1e-06
        %v1779 = vadd.f32 %v1511, 1e-06
        %v1780 = vadd.f32 %v1518, 1e-06
        %v1781 = vadd.f32 %v1525, 1e-06
        %v1782 = vadd.f32 %v1532, 1e-06
        %v1783 = vadd.f32 %v1539, 1e-06
        %v1784 = vadd.f32 %v1546, 1e-06
        %v1785 = vadd.f32 %v1553, 1e-06
        %v1786 = vadd.f32 %v1560, 1e-06
        %v1787 = vadd.f32 %v1567, 1e-06
        %v1788 = vadd.f32 %v1574, 1e-06
        %v1789 = vadd.f32 %v1581, 1e-06
        %v1790 = vadd.f32 %v1588, 1e-06
        %v1791 = vadd.f32 %v1595, 1e-06
        %v1792 = vadd.f32 %v1602, 1e-06
        %v1793 = vadd.f32 %v1609, 1e-06
        %v1794 = vadd.f32 %v1616, 1e-06
        %v1795 = vadd.f32 %v1623, 1e-06
        %v1796 = vadd.f32 %v1630, 1e-06
        %v1797 = vadd.f32 %v1637, 1e-06
        %v1798 = vadd.f32 %v1644, 1e-06
        %v1799 = vadd.f32 %v1651, 1e-06
        %v1800 = vadd.f32 %v1658, 1e-06
        %v1801 = vadd.f32 %v1665, 1e-06
        %v1802 = vadd.f32 %v1672, 1e-06
        %v1803 = vadd.f32 %v1679, 1e-06
        %v1804 = vadd.f32 %v1686, 1e-06
        %v1805 = vadd.f32 %v1693, 1e-06
        %v1806 = vadd.f32 %v1700, 1e-06
        %v1807 = vadd.f32 %v1707, 1e-06
        %v1808 = vadd.f32 %v1714, 1e-06
        %v1809 = vadd.f32 %v1721, 1e-06
        %v1810 = vadd.f32 %v1728, 1e-06
        %v1811 = vadd.f32 %v1735, 1e-06
        %v1812 = vadd.f32 %v1742, 1e-06
        %v1813 = vadd.f32 %v1749, 1e-06
        %v1814 = vrcp.pop %v1750
        %v1815 = vrcp.pop %v1751
        %v1816 = vrcp.pop %v1752
        %v1817 = vrcp.pop %v1753
        %v1818 = vrcp.pop %v1754
        %v1819 = vrcp.pop %v1755
        %v1820 = vrcp.pop %v1756
        %v1821 = vrcp.pop %v1757
        %v1822 = vrcp.pop %v1758
        %v1823 = vrcp.pop %v1759
        %v1824 = vrcp.pop %v1760
        %v1825 = vrcp.pop %v1761
        %v1826 = vrcp.pop %v1762
        %v1827 = vrcp.pop %v1763
        %v1828 = vrcp.pop %v1764
        %v1829 = vrcp.pop %v1765
        %v1830 = vrcp.pop %v1766
        %v1831 = vrcp.pop %v1767
        %v1832 = vrcp.pop %v1768
        %v1833 = vrcp.pop %v1769
        %v1834 = vrcp.pop %v1770
        %v1835 = vrcp.pop %v1771
        %v1836 = vrcp.pop %v1772
        %v1837 = vrcp.pop %v1773
        %v1838 = vrcp.pop %v1774
        %v1839 = vrcp.pop %v1775
        %v1840 = vrcp.pop %v1776
        %v1841 = vrcp.pop %v1777
        %v1842 = vrcp.pop %v1778
        %v1843 = vrcp.pop %v1779
        %v1844 = vrcp.pop %v1780
        %v1845 = vrcp.pop %v1781
        %v1846 = vrcp.pop %v1782
        %v1847 = vrcp.pop %v1783
        %v1848 = vrcp.pop %v1784
        %v1849 = vrcp.pop %v1785
        %v1850 = vrcp.pop %v1786
        %v1851 = vrcp.pop %v1787
        %v1852 = vrcp.pop %v1788
        %v1853 = vrcp.pop %v1789
        %v1854 = vrcp.pop %v1790
        %v1855 = vrcp.pop %v1791
        %v1856 = vrcp.pop %v1792
        %v1857 = vrcp.pop %v1793
        %v1858 = vrcp.pop %v1794
        %v1859 = vrcp.pop %v1795
        %v1860 = vrcp.pop %v1796
        %v1861 = vrcp.pop %v1797
        %v1862 = vrcp.pop %v1798
        %v1863 = vrcp.pop %v1799
        %v1864 = vrcp.pop %v1800
        %v1865 = vrcp.pop %v1801
        %v1866 = vrcp.pop %v1802
        %v1867 = vrcp.pop %v1803
        %v1868 = vrcp.pop %v1804
        %v1869 = vrcp.pop %v1805
        %v1870 = vrcp.pop %v1806
        %v1871 = vrcp.pop %v1807
        %v1872 = vrcp.pop %v1808
        %v1873 = vrcp.pop %v1809
        %v1874 = vrcp.pop %v1810
        %v1875 = vrcp.pop %v1811
        %v1876 = vrcp.pop %v1812
        %v1877 = vrcp.pop %v1813
        %v1878 = vmul.f32 %v791, %v1814
        %v1879 = vmul.f32 %v794, %v1815
        %v1880 = vmul.f32 %v799, %v1816
        %v1881 = vmul.f32 %v802, %v1817
        %v1882 = vmul.f32 %v807, %v1818
        %v1883 = vmul.f32 %v810, %v1819
        %v1884 = vmul.f32 %v815, %v1820
        %v1885 = vmul.f32 %v818, %v1821
        %v1886 = vmul.f32 %v823, %v1822
        %v1887 = vmul.f32 %v826, %v1823
        %v1888 = vmul.f32 %v831, %v1824
        %v1889 = vmul.f32 %v834, %v1825
        %v1890 = vmul.f32 %v839, %v1826
        %v1891 = vmul.f32 %v842, %v1827
        %v1892 = vmul.f32 %v847, %v1828
        %v1893 = vmul.f32 %v850, %v1829
        %v1894 = vmul.f32 %v855, %v1830
        %v1895 = vmul.f32 %v858, %v1831
        %v1896 = vmul.f32 %v863, %v1832
        %v1897 = vmul.f32 %v866, %v1833
        %v1898 = vmul.f32 %v871, %v1834
        %v1899 = vmul.f32 %v874, %v1835
        %v1900 = vmul.f32 %v879, %v1836
        %v1901 = vmul.f32 %v882, %v1837
        %v1902 = vmul.f32 %v887, %v1838
        %v1903 = vmul.f32 %v890, %v1839
        %v1904 = vmul.f32 %v895, %v1840
        %v1905 = vmul.f32 %v898, %v1841
        %v1906 = vmul.f32 %v903, %v1842
        %v1907 = vmul.f32 %v906, %v1843
        %v1908 = vmul.f32 %v911, %v1844
        %v1909 = vmul.f32 %v914, %v1845
        %v1910 = vmul.f32 %v919, %v1846
        %v1911 = vmul.f32 %v922, %v1847
        %v1912 = vmul.f32 %v927, %v1848
        %v1913 = vmul.f32 %v930, %v1849
        %v1914 = vmul.f32 %v935, %v1850
        %v1915 = vmul.f32 %v938, %v1851
        %v1916 = vmul.f32 %v943, %v1852
        %v1917 = vmul.f32 %v946, %v1853
        %v1918 = vmul.f32 %v951, %v1854
        %v1919 = vmul.f32 %v954, %v1855
        %v1920 = vmul.f32 %v959, %v1856
        %v1921 = vmul.f32 %v962, %v1857
        %v1922 = vmul.f32 %v967, %v1858
        %v1923 = vmul.f32 %v970, %v1859
        %v1924 = vmul.f32 %v975, %v1860
        %v1925 = vmul.f32 %v978, %v1861
        %v1926 = vmul.f32 %v983, %v1862
        %v1927 = vmul.f32 %v986, %v1863
        %v1928 = vmul.f32 %v991, %v1864
        %v1929 = vmul.f32 %v994, %v1865
        %v1930 = vmul.f32 %v999, %v1866
        %v1931 = vmul.f32 %v1002, %v1867
        %v1932 = vmul.f32 %v1007, %v1868
        %v1933 = vmul.f32 %v1010, %v1869
        %v1934 = vmul.f32 %v1015, %v1870
        %v1935 = vmul.f32 %v1018, %v1871
        %v1936 = vmul.f32 %v1023, %v1872
        %v1937 = vmul.f32 %v1026, %v1873
        %v1938 = vmul.f32 %v1031, %v1874
        %v1939 = vmul.f32 %v1034, %v1875
        %v1940 = vmul.f32 %v1039, %v1876
        %v1941 = vmul.f32 %v1042, %v1877
        %p1942 = scmp.eq.s32.totalorder %s34, 0
        // Predicated region
        $region41: #{carla_ml_forward.1} parent=39 // pred_check
          %p1943 = pneg %p1942
        $region42: #{carla_ml_forward.1} parent=39 // pred_check_branch
          %1945 = sbr.rel (%p1943) target = $region44
        $region43: #{carla_ml_forward.1} parent=39 // pred_region
          %1946 = vst.msk [vmem:[%s330] sm:$0xff] %vm1109, 0.0
          %1947 = vst.msk [vmem:[%s330 + $0x8] sm:$0xff] %vm1109, 0.0
          %1948 = vst.msk [vmem:[%s330 + $0x10] sm:$0xff] %vm1109, 0.0
          %1949 = vst.msk [vmem:[%s330 + $0x18] sm:$0xff] %vm1109, 0.0
          %1950 = vst.msk [vmem:[%s330 + $0x20] sm:$0xff] %vm1109, 0.0
          %1951 = vst.msk [vmem:[%s330 + $0x28] sm:$0xff] %vm1109, 0.0
          %1952 = vst.msk [vmem:[%s330 + $0x30] sm:$0xff] %vm1109, 0.0
          %1953 = vst.msk [vmem:[%s330 + $0x38] sm:$0xff] %vm1109, 0.0
          %1954 = vst.msk [vmem:[%s330 + $0x40] sm:$0xff] %vm1109, 0.0
          %1955 = vst.msk [vmem:[%s330 + $0x48] sm:$0xff] %vm1109, 0.0
          %1956 = vst.msk [vmem:[%s330 + $0x50] sm:$0xff] %vm1109, 0.0
          %1957 = vst.msk [vmem:[%s330 + $0x58] sm:$0xff] %vm1109, 0.0
          %1958 = vst.msk [vmem:[%s330 + $0x60] sm:$0xff] %vm1109, 0.0
          %1959 = vst.msk [vmem:[%s330 + $0x68] sm:$0xff] %vm1109, 0.0
          %1960 = vst.msk [vmem:[%s330 + $0x70] sm:$0xff] %vm1109, 0.0
          %1961 = vst.msk [vmem:[%s330 + $0x78] sm:$0xff] %vm1109, 0.0
          %1962 = vst.msk [vmem:[%s330 + $0x80] sm:$0xff] %vm1109, 0.0
          %1963 = vst.msk [vmem:[%s330 + $0x88] sm:$0xff] %vm1109, 0.0
          %1964 = vst.msk [vmem:[%s330 + $0x90] sm:$0xff] %vm1109, 0.0
          %1965 = vst.msk [vmem:[%s330 + $0x98] sm:$0xff] %vm1109, 0.0
          %1966 = vst.msk [vmem:[%s330 + $0xa0] sm:$0xff] %vm1109, 0.0
          %1967 = vst.msk [vmem:[%s330 + $0xa8] sm:$0xff] %vm1109, 0.0
          %1968 = vst.msk [vmem:[%s330 + $0xb0] sm:$0xff] %vm1109, 0.0
          %1969 = vst.msk [vmem:[%s330 + $0xb8] sm:$0xff] %vm1109, 0.0
          %1970 = vst.msk [vmem:[%s330 + $0xc0] sm:$0xff] %vm1109, 0.0
          %1971 = vst.msk [vmem:[%s330 + $0xc8] sm:$0xff] %vm1109, 0.0
          %1972 = vst.msk [vmem:[%s330 + $0xd0] sm:$0xff] %vm1109, 0.0
          %1973 = vst.msk [vmem:[%s330 + $0xd8] sm:$0xff] %vm1109, 0.0
          %1974 = vst.msk [vmem:[%s330 + $0xe0] sm:$0xff] %vm1109, 0.0
          %1975 = vst.msk [vmem:[%s330 + $0xe8] sm:$0xff] %vm1109, 0.0
          %1976 = vst.msk [vmem:[%s330 + $0xf0] sm:$0xff] %vm1109, 0.0
          %1977 = vst.msk [vmem:[%s330 + $0xf8] sm:$0xff] %vm1109, 0.0
          %1978 = vst.msk [vmem:[%s330 + $0x100] sm:$0xff] %vm1109, 0.0
          %1979 = vst.msk [vmem:[%s330 + $0x108] sm:$0xff] %vm1109, 0.0
          %1980 = vst.msk [vmem:[%s330 + $0x110] sm:$0xff] %vm1109, 0.0
          %1981 = vst.msk [vmem:[%s330 + $0x118] sm:$0xff] %vm1109, 0.0
          %1982 = vst.msk [vmem:[%s330 + $0x120] sm:$0xff] %vm1109, 0.0
          %1983 = vst.msk [vmem:[%s330 + $0x128] sm:$0xff] %vm1109, 0.0
          %1984 = vst.msk [vmem:[%s330 + $0x130] sm:$0xff] %vm1109, 0.0
          %1985 = vst.msk [vmem:[%s330 + $0x138] sm:$0xff] %vm1109, 0.0
          %1986 = vst.msk [vmem:[%s330 + $0x140] sm:$0xff] %vm1109, 0.0
          %1987 = vst.msk [vmem:[%s330 + $0x148] sm:$0xff] %vm1109, 0.0
          %1988 = vst.msk [vmem:[%s330 + $0x150] sm:$0xff] %vm1109, 0.0
          %1989 = vst.msk [vmem:[%s330 + $0x158] sm:$0xff] %vm1109, 0.0
          %1990 = vst.msk [vmem:[%s330 + $0x160] sm:$0xff] %vm1109, 0.0
          %1991 = vst.msk [vmem:[%s330 + $0x168] sm:$0xff] %vm1109, 0.0
          %1992 = vst.msk [vmem:[%s330 + $0x170] sm:$0xff] %vm1109, 0.0
          %1993 = vst.msk [vmem:[%s330 + $0x178] sm:$0xff] %vm1109, 0.0
          %1994 = vst.msk [vmem:[%s330 + $0x180] sm:$0xff] %vm1109, 0.0
          %1995 = vst.msk [vmem:[%s330 + $0x188] sm:$0xff] %vm1109, 0.0
          %1996 = vst.msk [vmem:[%s330 + $0x190] sm:$0xff] %vm1109, 0.0
          %1997 = vst.msk [vmem:[%s330 + $0x198] sm:$0xff] %vm1109, 0.0
          %1998 = vst.msk [vmem:[%s330 + $0x1a0] sm:$0xff] %vm1109, 0.0
          %1999 = vst.msk [vmem:[%s330 + $0x1a8] sm:$0xff] %vm1109, 0.0
          %2000 = vst.msk [vmem:[%s330 + $0x1b0] sm:$0xff] %vm1109, 0.0
          %2001 = vst.msk [vmem:[%s330 + $0x1b8] sm:$0xff] %vm1109, 0.0
          %2002 = vst.msk [vmem:[%s330 + $0x1c0] sm:$0xff] %vm1109, 0.0
          %2003 = vst.msk [vmem:[%s330 + $0x1c8] sm:$0xff] %vm1109, 0.0
          %2004 = vst.msk [vmem:[%s330 + $0x1d0] sm:$0xff] %vm1109, 0.0
          %2005 = vst.msk [vmem:[%s330 + $0x1d8] sm:$0xff] %vm1109, 0.0
          %2006 = vst.msk [vmem:[%s330 + $0x1e0] sm:$0xff] %vm1109, 0.0
          %2007 = vst.msk [vmem:[%s330 + $0x1e8] sm:$0xff] %vm1109, 0.0
          %2008 = vst.msk [vmem:[%s330 + $0x1f0] sm:$0xff] %vm1109, 0.0
          %2009 = vst.msk [vmem:[%s330 + $0x1f8] sm:$0xff] %vm1109, 0.0
          %2010 = vst.msk [vmem:[%s323] sm:$0xff] %vm1109, %v1878
          %2011 = vst.msk [vmem:[%s323 + $0x8] sm:$0xff] %vm1109, %v1879
          %2012 = vst.msk [vmem:[%s323 + $0x10] sm:$0xff] %vm1109, %v1880
          %2013 = vst.msk [vmem:[%s323 + $0x18] sm:$0xff] %vm1109, %v1881
          %2014 = vst.msk [vmem:[%s323 + $0x20] sm:$0xff] %vm1109, %v1882
          %2015 = vst.msk [vmem:[%s323 + $0x28] sm:$0xff] %vm1109, %v1883
          %2016 = vst.msk [vmem:[%s323 + $0x30] sm:$0xff] %vm1109, %v1884
          %2017 = vst.msk [vmem:[%s323 + $0x38] sm:$0xff] %vm1109, %v1885
          %2018 = vst.msk [vmem:[%s323 + $0x40] sm:$0xff] %vm1109, %v1886
          %2019 = vst.msk [vmem:[%s323 + $0x48] sm:$0xff] %vm1109, %v1887
          %2020 = vst.msk [vmem:[%s323 + $0x50] sm:$0xff] %vm1109, %v1888
          %2021 = vst.msk [vmem:[%s323 + $0x58] sm:$0xff] %vm1109, %v1889
          %2022 = vst.msk [vmem:[%s323 + $0x60] sm:$0xff] %vm1109, %v1890
          %2023 = vst.msk [vmem:[%s323 + $0x68] sm:$0xff] %vm1109, %v1891
          %2024 = vst.msk [vmem:[%s323 + $0x70] sm:$0xff] %vm1109, %v1892
          %2025 = vst.msk [vmem:[%s323 + $0x78] sm:$0xff] %vm1109, %v1893
          %2026 = vst.msk [vmem:[%s323 + $0x80] sm:$0xff] %vm1109, %v1894
          %2027 = vst.msk [vmem:[%s323 + $0x88] sm:$0xff] %vm1109, %v1895
          %2028 = vst.msk [vmem:[%s323 + $0x90] sm:$0xff] %vm1109, %v1896
          %2029 = vst.msk [vmem:[%s323 + $0x98] sm:$0xff] %vm1109, %v1897
          %2030 = vst.msk [vmem:[%s323 + $0xa0] sm:$0xff] %vm1109, %v1898
          %2031 = vst.msk [vmem:[%s323 + $0xa8] sm:$0xff] %vm1109, %v1899
          %2032 = vst.msk [vmem:[%s323 + $0xb0] sm:$0xff] %vm1109, %v1900
          %2033 = vst.msk [vmem:[%s323 + $0xb8] sm:$0xff] %vm1109, %v1901
          %2034 = vst.msk [vmem:[%s323 + $0xc0] sm:$0xff] %vm1109, %v1902
          %2035 = vst.msk [vmem:[%s323 + $0xc8] sm:$0xff] %vm1109, %v1903
          %2036 = vst.msk [vmem:[%s323 + $0xd0] sm:$0xff] %vm1109, %v1904
          %2037 = vst.msk [vmem:[%s323 + $0xd8] sm:$0xff] %vm1109, %v1905
          %2038 = vst.msk [vmem:[%s323 + $0xe0] sm:$0xff] %vm1109, %v1906
          %2039 = vst.msk [vmem:[%s323 + $0xe8] sm:$0xff] %vm1109, %v1907
          %2040 = vst.msk [vmem:[%s323 + $0xf0] sm:$0xff] %vm1109, %v1908
          %2041 = vst.msk [vmem:[%s323 + $0xf8] sm:$0xff] %vm1109, %v1909
          %2042 = vst.msk [vmem:[%s323 + $0x100] sm:$0xff] %vm1109, %v1910
          %2043 = vst.msk [vmem:[%s323 + $0x108] sm:$0xff] %vm1109, %v1911
          %2044 = vst.msk [vmem:[%s323 + $0x110] sm:$0xff] %vm1109, %v1912
          %2045 = vst.msk [vmem:[%s323 + $0x118] sm:$0xff] %vm1109, %v1913
          %2046 = vst.msk [vmem:[%s323 + $0x120] sm:$0xff] %vm1109, %v1914
          %2047 = vst.msk [vmem:[%s323 + $0x128] sm:$0xff] %vm1109, %v1915
          %2048 = vst.msk [vmem:[%s323 + $0x130] sm:$0xff] %vm1109, %v1916
          %2049 = vst.msk [vmem:[%s323 + $0x138] sm:$0xff] %vm1109, %v1917
          %2050 = vst.msk [vmem:[%s323 + $0x140] sm:$0xff] %vm1109, %v1918
          %2051 = vst.msk [vmem:[%s323 + $0x148] sm:$0xff] %vm1109, %v1919
          %2052 = vst.msk [vmem:[%s323 + $0x150] sm:$0xff] %vm1109, %v1920
          %2053 = vst.msk [vmem:[%s323 + $0x158] sm:$0xff] %vm1109, %v1921
          %2054 = vst.msk [vmem:[%s323 + $0x160] sm:$0xff] %vm1109, %v1922
          %2055 = vst.msk [vmem:[%s323 + $0x168] sm:$0xff] %vm1109, %v1923
          %2056 = vst.msk [vmem:[%s323 + $0x170] sm:$0xff] %vm1109, %v1924
          %2057 = vst.msk [vmem:[%s323 + $0x178] sm:$0xff] %vm1109, %v1925
          %2058 = vst.msk [vmem:[%s323 + $0x180] sm:$0xff] %vm1109, %v1926
          %2059 = vst.msk [vmem:[%s323 + $0x188] sm:$0xff] %vm1109, %v1927
          %2060 = vst.msk [vmem:[%s323 + $0x190] sm:$0xff] %vm1109, %v1928
          %2061 = vst.msk [vmem:[%s323 + $0x198] sm:$0xff] %vm1109, %v1929
          %2062 = vst.msk [vmem:[%s323 + $0x1a0] sm:$0xff] %vm1109, %v1930
          %2063 = vst.msk [vmem:[%s323 + $0x1a8] sm:$0xff] %vm1109, %v1931
          %2064 = vst.msk [vmem:[%s323 + $0x1b0] sm:$0xff] %vm1109, %v1932
          %2065 = vst.msk [vmem:[%s323 + $0x1b8] sm:$0xff] %vm1109, %v1933
          %2066 = vst.msk [vmem:[%s323 + $0x1c0] sm:$0xff] %vm1109, %v1934
          %2067 = vst.msk [vmem:[%s323 + $0x1c8] sm:$0xff] %vm1109, %v1935
          %2068 = vst.msk [vmem:[%s323 + $0x1d0] sm:$0xff] %vm1109, %v1936
          %2069 = vst.msk [vmem:[%s323 + $0x1d8] sm:$0xff] %vm1109, %v1937
          %2070 = vst.msk [vmem:[%s323 + $0x1e0] sm:$0xff] %vm1109, %v1938
          %2071 = vst.msk [vmem:[%s323 + $0x1e8] sm:$0xff] %vm1109, %v1939
          %2072 = vst.msk [vmem:[%s323 + $0x1f0] sm:$0xff] %vm1109, %v1940
          %2073 = vst.msk [vmem:[%s323 + $0x1f8] sm:$0xff] %vm1109, %v1941
          %v2074 = vld [vmem:[%s3] sm:$0x1]
          %v2076 = vlaneseq
          %v2077 = vshrl.u32 %v2076, 7
          %v2078 = vsub.s32 0, %v2077
          %v2079 = vrot.slane %v2074, %v2078
          %v2081 = vmul.f32 %v1878, %v2079
          %v2082 = vmul.f32 %v1879, %v2079
          %v2083 = vmul.f32 %v1880, %v2079
          %v2084 = vmul.f32 %v1881, %v2079
          %v2085 = vmul.f32 %v1882, %v2079
          %v2086 = vmul.f32 %v1883, %v2079
          %v2087 = vmul.f32 %v1884, %v2079
          %v2088 = vmul.f32 %v1885, %v2079
          %v2089 = vmul.f32 %v1886, %v2079
          %v2090 = vmul.f32 %v1887, %v2079
          %v2091 = vmul.f32 %v1888, %v2079
          %v2092 = vmul.f32 %v1889, %v2079
          %v2093 = vmul.f32 %v1890, %v2079
          %v2094 = vmul.f32 %v1891, %v2079
          %v2095 = vmul.f32 %v1892, %v2079
          %v2096 = vmul.f32 %v1893, %v2079
          %v2097 = vmul.f32 %v1894, %v2079
          %v2098 = vmul.f32 %v1895, %v2079
          %v2099 = vmul.f32 %v1896, %v2079
          %v2100 = vmul.f32 %v1897, %v2079
          %v2101 = vmul.f32 %v1898, %v2079
          %v2102 = vmul.f32 %v1899, %v2079
          %v2103 = vmul.f32 %v1900, %v2079
          %v2104 = vmul.f32 %v1901, %v2079
          %v2105 = vmul.f32 %v1902, %v2079
          %v2106 = vmul.f32 %v1903, %v2079
          %v2107 = vmul.f32 %v1904, %v2079
          %v2108 = vmul.f32 %v1905, %v2079
          %v2109 = vmul.f32 %v1906, %v2079
          %v2110 = vmul.f32 %v1907, %v2079
          %v2111 = vmul.f32 %v1908, %v2079
          %v2112 = vmul.f32 %v1909, %v2079
          %v2113 = vmul.f32 %v1910, %v2079
          %v2114 = vmul.f32 %v1911, %v2079
          %v2115 = vmul.f32 %v1912, %v2079
          %v2116 = vmul.f32 %v1913, %v2079
          %v2117 = vmul.f32 %v1914, %v2079
          %v2118 = vmul.f32 %v1915, %v2079
          %v2119 = vmul.f32 %v1916, %v2079
          %v2120 = vmul.f32 %v1917, %v2079
          %v2121 = vmul.f32 %v1918, %v2079
          %v2122 = vmul.f32 %v1919, %v2079
          %v2123 = vmul.f32 %v1920, %v2079
          %v2124 = vmul.f32 %v1921, %v2079
          %v2125 = vmul.f32 %v1922, %v2079
          %v2126 = vmul.f32 %v1923, %v2079
          %v2127 = vmul.f32 %v1924, %v2079
          %v2128 = vmul.f32 %v1925, %v2079
          %v2129 = vmul.f32 %v1926, %v2079
          %v2130 = vmul.f32 %v1927, %v2079
          %v2131 = vmul.f32 %v1928, %v2079
          %v2132 = vmul.f32 %v1929, %v2079
          %v2133 = vmul.f32 %v1930, %v2079
          %v2134 = vmul.f32 %v1931, %v2079
          %v2135 = vmul.f32 %v1932, %v2079
          %v2136 = vmul.f32 %v1933, %v2079
          %v2137 = vmul.f32 %v1934, %v2079
          %v2138 = vmul.f32 %v1935, %v2079
          %v2139 = vmul.f32 %v1936, %v2079
          %v2140 = vmul.f32 %v1937, %v2079
          %v2141 = vmul.f32 %v1938, %v2079
          %v2142 = vmul.f32 %v1939, %v2079
          %v2143 = vmul.f32 %v1940, %v2079
          %v2144 = vmul.f32 %v1941, %v2079
          %v2145 = vsel %vm1109, %v2081, 0.0
          %2146 = vadd.xlane.f32.xlu0 %v2145
          %v2147 = vpop.xlane.xlu0 %2146
          %v2148 = vsel %vm1109, %v2082, 0.0
          %2149 = vadd.xlane.f32.xlu0 %v2148
          %v2150 = vpop.xlane.xlu0 %2149
          %v2151 = vsel %vm1109, %v2083, 0.0
          %2152 = vadd.xlane.f32.xlu0 %v2151
          %v2153 = vpop.xlane.xlu0 %2152
          %v2154 = vsel %vm1109, %v2084, 0.0
          %2155 = vadd.xlane.f32.xlu0 %v2154
          %v2156 = vpop.xlane.xlu0 %2155
          %v2157 = vsel %vm1109, %v2085, 0.0
          %2158 = vadd.xlane.f32.xlu0 %v2157
          %v2159 = vpop.xlane.xlu0 %2158
          %v2160 = vsel %vm1109, %v2086, 0.0
          %2161 = vadd.xlane.f32.xlu0 %v2160
          %v2162 = vpop.xlane.xlu0 %2161
          %v2163 = vsel %vm1109, %v2087, 0.0
          %2164 = vadd.xlane.f32.xlu0 %v2163
          %v2165 = vpop.xlane.xlu0 %2164
          %v2166 = vsel %vm1109, %v2088, 0.0
          %2167 = vadd.xlane.f32.xlu0 %v2166
          %v2168 = vpop.xlane.xlu0 %2167
          %v2169 = vsel %vm1109, %v2089, 0.0
          %2170 = vadd.xlane.f32.xlu0 %v2169
          %v2171 = vpop.xlane.xlu0 %2170
          %v2172 = vsel %vm1109, %v2090, 0.0
          %2173 = vadd.xlane.f32.xlu0 %v2172
          %v2174 = vpop.xlane.xlu0 %2173
          %v2175 = vsel %vm1109, %v2091, 0.0
          %2176 = vadd.xlane.f32.xlu0 %v2175
          %v2177 = vpop.xlane.xlu0 %2176
          %v2178 = vsel %vm1109, %v2092, 0.0
          %2179 = vadd.xlane.f32.xlu0 %v2178
          %v2180 = vpop.xlane.xlu0 %2179
          %v2181 = vsel %vm1109, %v2093, 0.0
          %2182 = vadd.xlane.f32.xlu0 %v2181
          %v2183 = vpop.xlane.xlu0 %2182
          %v2184 = vsel %vm1109, %v2094, 0.0
          %2185 = vadd.xlane.f32.xlu0 %v2184
          %v2186 = vpop.xlane.xlu0 %2185
          %v2187 = vsel %vm1109, %v2095, 0.0
          %2188 = vadd.xlane.f32.xlu0 %v2187
          %v2189 = vpop.xlane.xlu0 %2188
          %v2190 = vsel %vm1109, %v2096, 0.0
          %2191 = vadd.xlane.f32.xlu0 %v2190
          %v2192 = vpop.xlane.xlu0 %2191
          %v2193 = vsel %vm1109, %v2097, 0.0
          %2194 = vadd.xlane.f32.xlu0 %v2193
          %v2195 = vpop.xlane.xlu0 %2194
          %v2196 = vsel %vm1109, %v2098, 0.0
          %2197 = vadd.xlane.f32.xlu0 %v2196
          %v2198 = vpop.xlane.xlu0 %2197
          %v2199 = vsel %vm1109, %v2099, 0.0
          %2200 = vadd.xlane.f32.xlu0 %v2199
          %v2201 = vpop.xlane.xlu0 %2200
          %v2202 = vsel %vm1109, %v2100, 0.0
          %2203 = vadd.xlane.f32.xlu0 %v2202
          %v2204 = vpop.xlane.xlu0 %2203
          %v2205 = vsel %vm1109, %v2101, 0.0
          %2206 = vadd.xlane.f32.xlu0 %v2205
          %v2207 = vpop.xlane.xlu0 %2206
          %v2208 = vsel %vm1109, %v2102, 0.0
          %2209 = vadd.xlane.f32.xlu0 %v2208
          %v2210 = vpop.xlane.xlu0 %2209
          %v2211 = vsel %vm1109, %v2103, 0.0
          %2212 = vadd.xlane.f32.xlu0 %v2211
          %v2213 = vpop.xlane.xlu0 %2212
          %v2214 = vsel %vm1109, %v2104, 0.0
          %2215 = vadd.xlane.f32.xlu0 %v2214
          %v2216 = vpop.xlane.xlu0 %2215
          %v2217 = vsel %vm1109, %v2105, 0.0
          %2218 = vadd.xlane.f32.xlu0 %v2217
          %v2219 = vpop.xlane.xlu0 %2218
          %v2220 = vsel %vm1109, %v2106, 0.0
          %2221 = vadd.xlane.f32.xlu0 %v2220
          %v2222 = vpop.xlane.xlu0 %2221
          %v2223 = vsel %vm1109, %v2107, 0.0
          %2224 = vadd.xlane.f32.xlu0 %v2223
          %v2225 = vpop.xlane.xlu0 %2224
          %v2226 = vsel %vm1109, %v2108, 0.0
          %2227 = vadd.xlane.f32.xlu0 %v2226
          %v2228 = vpop.xlane.xlu0 %2227
          %v2229 = vsel %vm1109, %v2109, 0.0
          %2230 = vadd.xlane.f32.xlu0 %v2229
          %v2231 = vpop.xlane.xlu0 %2230
          %v2232 = vsel %vm1109, %v2110, 0.0
          %2233 = vadd.xlane.f32.xlu0 %v2232
          %v2234 = vpop.xlane.xlu0 %2233
          %v2235 = vsel %vm1109, %v2111, 0.0
          %2236 = vadd.xlane.f32.xlu0 %v2235
          %v2237 = vpop.xlane.xlu0 %2236
          %v2238 = vsel %vm1109, %v2112, 0.0
          %2239 = vadd.xlane.f32.xlu0 %v2238
          %v2240 = vpop.xlane.xlu0 %2239
          %v2241 = vsel %vm1109, %v2113, 0.0
          %2242 = vadd.xlane.f32.xlu0 %v2241
          %v2243 = vpop.xlane.xlu0 %2242
          %v2244 = vsel %vm1109, %v2114, 0.0
          %2245 = vadd.xlane.f32.xlu0 %v2244
          %v2246 = vpop.xlane.xlu0 %2245
          %v2247 = vsel %vm1109, %v2115, 0.0
          %2248 = vadd.xlane.f32.xlu0 %v2247
          %v2249 = vpop.xlane.xlu0 %2248
          %v2250 = vsel %vm1109, %v2116, 0.0
          %2251 = vadd.xlane.f32.xlu0 %v2250
          %v2252 = vpop.xlane.xlu0 %2251
          %v2253 = vsel %vm1109, %v2117, 0.0
          %2254 = vadd.xlane.f32.xlu0 %v2253
          %v2255 = vpop.xlane.xlu0 %2254
          %v2256 = vsel %vm1109, %v2118, 0.0
          %2257 = vadd.xlane.f32.xlu0 %v2256
          %v2258 = vpop.xlane.xlu0 %2257
          %v2259 = vsel %vm1109, %v2119, 0.0
          %2260 = vadd.xlane.f32.xlu0 %v2259
          %v2261 = vpop.xlane.xlu0 %2260
          %v2262 = vsel %vm1109, %v2120, 0.0
          %2263 = vadd.xlane.f32.xlu0 %v2262
          %v2264 = vpop.xlane.xlu0 %2263
          %v2265 = vsel %vm1109, %v2121, 0.0
          %2266 = vadd.xlane.f32.xlu0 %v2265
          %v2267 = vpop.xlane.xlu0 %2266
          %v2268 = vsel %vm1109, %v2122, 0.0
          %2269 = vadd.xlane.f32.xlu0 %v2268
          %v2270 = vpop.xlane.xlu0 %2269
          %v2271 = vsel %vm1109, %v2123, 0.0
          %2272 = vadd.xlane.f32.xlu0 %v2271
          %v2273 = vpop.xlane.xlu0 %2272
          %v2274 = vsel %vm1109, %v2124, 0.0
          %2275 = vadd.xlane.f32.xlu0 %v2274
          %v2276 = vpop.xlane.xlu0 %2275
          %v2277 = vsel %vm1109, %v2125, 0.0
          %2278 = vadd.xlane.f32.xlu0 %v2277
          %v2279 = vpop.xlane.xlu0 %2278
          %v2280 = vsel %vm1109, %v2126, 0.0
          %2281 = vadd.xlane.f32.xlu0 %v2280
          %v2282 = vpop.xlane.xlu0 %2281
          %v2283 = vsel %vm1109, %v2127, 0.0
          %2284 = vadd.xlane.f32.xlu0 %v2283
          %v2285 = vpop.xlane.xlu0 %2284
          %v2286 = vsel %vm1109, %v2128, 0.0
          %2287 = vadd.xlane.f32.xlu0 %v2286
          %v2288 = vpop.xlane.xlu0 %2287
          %v2289 = vsel %vm1109, %v2129, 0.0
          %2290 = vadd.xlane.f32.xlu0 %v2289
          %v2291 = vpop.xlane.xlu0 %2290
          %v2292 = vsel %vm1109, %v2130, 0.0
          %2293 = vadd.xlane.f32.xlu0 %v2292
          %v2294 = vpop.xlane.xlu0 %2293
          %v2295 = vsel %vm1109, %v2131, 0.0
          %2296 = vadd.xlane.f32.xlu0 %v2295
          %v2297 = vpop.xlane.xlu0 %2296
          %v2298 = vsel %vm1109, %v2132, 0.0
          %2299 = vadd.xlane.f32.xlu0 %v2298
          %v2300 = vpop.xlane.xlu0 %2299
          %v2301 = vsel %vm1109, %v2133, 0.0
          %2302 = vadd.xlane.f32.xlu0 %v2301
          %v2303 = vpop.xlane.xlu0 %2302
          %v2304 = vsel %vm1109, %v2134, 0.0
          %2305 = vadd.xlane.f32.xlu0 %v2304
          %v2306 = vpop.xlane.xlu0 %2305
          %v2307 = vsel %vm1109, %v2135, 0.0
          %2308 = vadd.xlane.f32.xlu0 %v2307
          %v2309 = vpop.xlane.xlu0 %2308
          %v2310 = vsel %vm1109, %v2136, 0.0
          %2311 = vadd.xlane.f32.xlu0 %v2310
          %v2312 = vpop.xlane.xlu0 %2311
          %v2313 = vsel %vm1109, %v2137, 0.0
          %2314 = vadd.xlane.f32.xlu0 %v2313
          %v2315 = vpop.xlane.xlu0 %2314
          %v2316 = vsel %vm1109, %v2138, 0.0
          %2317 = vadd.xlane.f32.xlu0 %v2316
          %v2318 = vpop.xlane.xlu0 %2317
          %v2319 = vsel %vm1109, %v2139, 0.0
          %2320 = vadd.xlane.f32.xlu0 %v2319
          %v2321 = vpop.xlane.xlu0 %2320
          %v2322 = vsel %vm1109, %v2140, 0.0
          %2323 = vadd.xlane.f32.xlu0 %v2322
          %v2324 = vpop.xlane.xlu0 %2323
          %v2325 = vsel %vm1109, %v2141, 0.0
          %2326 = vadd.xlane.f32.xlu0 %v2325
          %v2327 = vpop.xlane.xlu0 %2326
          %v2328 = vsel %vm1109, %v2142, 0.0
          %2329 = vadd.xlane.f32.xlu0 %v2328
          %v2330 = vpop.xlane.xlu0 %2329
          %v2331 = vsel %vm1109, %v2143, 0.0
          %2332 = vadd.xlane.f32.xlu0 %v2331
          %v2333 = vpop.xlane.xlu0 %2332
          %v2334 = vsel %vm1109, %v2144, 0.0
          %2335 = vadd.xlane.f32.xlu0 %v2334
          %v2336 = vpop.xlane.xlu0 %2335
          %v2337 = vld [vmem:[#allocation2] sm:$0x1]
          %v2339 = vlaneseq
          %v2340 = vshrl.u32 %v2339, 7
          %v2341 = vsub.s32 0, %v2340
          %v2342 = vrot.slane %v2337, %v2341
          %v2344 = vadd.f32 %v2147, %v2342
          %v2345 = vadd.f32 %v2150, %v2342
          %v2346 = vadd.f32 %v2153, %v2342
          %v2347 = vadd.f32 %v2156, %v2342
          %v2348 = vadd.f32 %v2159, %v2342
          %v2349 = vadd.f32 %v2162, %v2342
          %v2350 = vadd.f32 %v2165, %v2342
          %v2351 = vadd.f32 %v2168, %v2342
          %v2352 = vadd.f32 %v2171, %v2342
          %v2353 = vadd.f32 %v2174, %v2342
          %v2354 = vadd.f32 %v2177, %v2342
          %v2355 = vadd.f32 %v2180, %v2342
          %v2356 = vadd.f32 %v2183, %v2342
          %v2357 = vadd.f32 %v2186, %v2342
          %v2358 = vadd.f32 %v2189, %v2342
          %v2359 = vadd.f32 %v2192, %v2342
          %v2360 = vadd.f32 %v2195, %v2342
          %v2361 = vadd.f32 %v2198, %v2342
          %v2362 = vadd.f32 %v2201, %v2342
          %v2363 = vadd.f32 %v2204, %v2342
          %v2364 = vadd.f32 %v2207, %v2342
          %v2365 = vadd.f32 %v2210, %v2342
          %v2366 = vadd.f32 %v2213, %v2342
          %v2367 = vadd.f32 %v2216, %v2342
          %v2368 = vadd.f32 %v2219, %v2342
          %v2369 = vadd.f32 %v2222, %v2342
          %v2370 = vadd.f32 %v2225, %v2342
          %v2371 = vadd.f32 %v2228, %v2342
          %v2372 = vadd.f32 %v2231, %v2342
          %v2373 = vadd.f32 %v2234, %v2342
          %v2374 = vadd.f32 %v2237, %v2342
          %v2375 = vadd.f32 %v2240, %v2342
          %v2376 = vadd.f32 %v2243, %v2342
          %v2377 = vadd.f32 %v2246, %v2342
          %v2378 = vadd.f32 %v2249, %v2342
          %v2379 = vadd.f32 %v2252, %v2342
          %v2380 = vadd.f32 %v2255, %v2342
          %v2381 = vadd.f32 %v2258, %v2342
          %v2382 = vadd.f32 %v2261, %v2342
          %v2383 = vadd.f32 %v2264, %v2342
          %v2384 = vadd.f32 %v2267, %v2342
          %v2385 = vadd.f32 %v2270, %v2342
          %v2386 = vadd.f32 %v2273, %v2342
          %v2387 = vadd.f32 %v2276, %v2342
          %v2388 = vadd.f32 %v2279, %v2342
          %v2389 = vadd.f32 %v2282, %v2342
          %v2390 = vadd.f32 %v2285, %v2342
          %v2391 = vadd.f32 %v2288, %v2342
          %v2392 = vadd.f32 %v2291, %v2342
          %v2393 = vadd.f32 %v2294, %v2342
          %v2394 = vadd.f32 %v2297, %v2342
          %v2395 = vadd.f32 %v2300, %v2342
          %v2396 = vadd.f32 %v2303, %v2342
          %v2397 = vadd.f32 %v2306, %v2342
          %v2398 = vadd.f32 %v2309, %v2342
          %v2399 = vadd.f32 %v2312, %v2342
          %v2400 = vadd.f32 %v2315, %v2342
          %v2401 = vadd.f32 %v2318, %v2342
          %v2402 = vadd.f32 %v2321, %v2342
          %v2403 = vadd.f32 %v2324, %v2342
          %v2404 = vadd.f32 %v2327, %v2342
          %v2405 = vadd.f32 %v2330, %v2342
          %v2406 = vadd.f32 %v2333, %v2342
          %v2407 = vadd.f32 %v2336, %v2342
          %v2408 = vxor.u32 %v2344, 2147483648
          %v2409 = vxor.u32 %v2345, 2147483648
          %v2410 = vxor.u32 %v2346, 2147483648
          %v2411 = vxor.u32 %v2347, 2147483648
          %v2412 = vxor.u32 %v2348, 2147483648
          %v2413 = vxor.u32 %v2349, 2147483648
          %v2414 = vxor.u32 %v2350, 2147483648
          %v2415 = vxor.u32 %v2351, 2147483648
          %v2416 = vxor.u32 %v2352, 2147483648
          %v2417 = vxor.u32 %v2353, 2147483648
          %v2418 = vxor.u32 %v2354, 2147483648
          %v2419 = vxor.u32 %v2355, 2147483648
          %v2420 = vxor.u32 %v2356, 2147483648
          %v2421 = vxor.u32 %v2357, 2147483648
          %v2422 = vxor.u32 %v2358, 2147483648
          %v2423 = vxor.u32 %v2359, 2147483648
          %v2424 = vxor.u32 %v2360, 2147483648
          %v2425 = vxor.u32 %v2361, 2147483648
          %v2426 = vxor.u32 %v2362, 2147483648
          %v2427 = vxor.u32 %v2363, 2147483648
          %v2428 = vxor.u32 %v2364, 2147483648
          %v2429 = vxor.u32 %v2365, 2147483648
          %v2430 = vxor.u32 %v2366, 2147483648
          %v2431 = vxor.u32 %v2367, 2147483648
          %v2432 = vxor.u32 %v2368, 2147483648
          %v2433 = vxor.u32 %v2369, 2147483648
          %v2434 = vxor.u32 %v2370, 2147483648
          %v2435 = vxor.u32 %v2371, 2147483648
          %v2436 = vxor.u32 %v2372, 2147483648
          %v2437 = vxor.u32 %v2373, 2147483648
          %v2438 = vxor.u32 %v2374, 2147483648
          %v2439 = vxor.u32 %v2375, 2147483648
          %v2440 = vxor.u32 %v2376, 2147483648
          %v2441 = vxor.u32 %v2377, 2147483648
          %v2442 = vxor.u32 %v2378, 2147483648
          %v2443 = vxor.u32 %v2379, 2147483648
          %v2444 = vxor.u32 %v2380, 2147483648
          %v2445 = vxor.u32 %v2381, 2147483648
          %v2446 = vxor.u32 %v2382, 2147483648
          %v2447 = vxor.u32 %v2383, 2147483648
          %v2448 = vxor.u32 %v2384, 2147483648
          %v2449 = vxor.u32 %v2385, 2147483648
          %v2450 = vxor.u32 %v2386, 2147483648
          %v2451 = vxor.u32 %v2387, 2147483648
          %v2452 = vxor.u32 %v2388, 2147483648
          %v2453 = vxor.u32 %v2389, 2147483648
          %v2454 = vxor.u32 %v2390, 2147483648
          %v2455 = vxor.u32 %v2391, 2147483648
          %v2456 = vxor.u32 %v2392, 2147483648
          %v2457 = vxor.u32 %v2393, 2147483648
          %v2458 = vxor.u32 %v2394, 2147483648
          %v2459 = vxor.u32 %v2395, 2147483648
          %v2460 = vxor.u32 %v2396, 2147483648
          %v2461 = vxor.u32 %v2397, 2147483648
          %v2462 = vxor.u32 %v2398, 2147483648
          %v2463 = vxor.u32 %v2399, 2147483648
          %v2464 = vxor.u32 %v2400, 2147483648
          %v2465 = vxor.u32 %v2401, 2147483648
          %v2466 = vxor.u32 %v2402, 2147483648
          %v2467 = vxor.u32 %v2403, 2147483648
          %v2468 = vxor.u32 %v2404, 2147483648
          %v2469 = vxor.u32 %v2405, 2147483648
          %v2470 = vxor.u32 %v2406, 2147483648
          %v2471 = vxor.u32 %v2407, 2147483648
          %v2472 = vmul.f32 %v2408, 1.442695
          %v2473 = vpow.pop %v2472
          %v2474 = vmul.f32 %v2409, 1.442695
          %v2475 = vpow.pop %v2474
          %v2476 = vmul.f32 %v2410, 1.442695
          %v2477 = vpow.pop %v2476
          %v2478 = vmul.f32 %v2411, 1.442695
          %v2479 = vpow.pop %v2478
          %v2480 = vmul.f32 %v2412, 1.442695
          %v2481 = vpow.pop %v2480
          %v2482 = vmul.f32 %v2413, 1.442695
          %v2483 = vpow.pop %v2482
          %v2484 = vmul.f32 %v2414, 1.442695
          %v2485 = vpow.pop %v2484
          %v2486 = vmul.f32 %v2415, 1.442695
          %v2487 = vpow.pop %v2486
          %v2488 = vmul.f32 %v2416, 1.442695
          %v2489 = vpow.pop %v2488
          %v2490 = vmul.f32 %v2417, 1.442695
          %v2491 = vpow.pop %v2490
          %v2492 = vmul.f32 %v2418, 1.442695
          %v2493 = vpow.pop %v2492
          %v2494 = vmul.f32 %v2419, 1.442695
          %v2495 = vpow.pop %v2494
          %v2496 = vmul.f32 %v2420, 1.442695
          %v2497 = vpow.pop %v2496
          %v2498 = vmul.f32 %v2421, 1.442695
          %v2499 = vpow.pop %v2498
          %v2500 = vmul.f32 %v2422, 1.442695
          %v2501 = vpow.pop %v2500
          %v2502 = vmul.f32 %v2423, 1.442695
          %v2503 = vpow.pop %v2502
          %v2504 = vmul.f32 %v2424, 1.442695
          %v2505 = vpow.pop %v2504
          %v2506 = vmul.f32 %v2425, 1.442695
          %v2507 = vpow.pop %v2506
          %v2508 = vmul.f32 %v2426, 1.442695
          %v2509 = vpow.pop %v2508
          %v2510 = vmul.f32 %v2427, 1.442695
          %v2511 = vpow.pop %v2510
          %v2512 = vmul.f32 %v2428, 1.442695
          %v2513 = vpow.pop %v2512
          %v2514 = vmul.f32 %v2429, 1.442695
          %v2515 = vpow.pop %v2514
          %v2516 = vmul.f32 %v2430, 1.442695
          %v2517 = vpow.pop %v2516
          %v2518 = vmul.f32 %v2431, 1.442695
          %v2519 = vpow.pop %v2518
          %v2520 = vmul.f32 %v2432, 1.442695
          %v2521 = vpow.pop %v2520
          %v2522 = vmul.f32 %v2433, 1.442695
          %v2523 = vpow.pop %v2522
          %v2524 = vmul.f32 %v2434, 1.442695
          %v2525 = vpow.pop %v2524
          %v2526 = vmul.f32 %v2435, 1.442695
          %v2527 = vpow.pop %v2526
          %v2528 = vmul.f32 %v2436, 1.442695
          %v2529 = vpow.pop %v2528
          %v2530 = vmul.f32 %v2437, 1.442695
          %v2531 = vpow.pop %v2530
          %v2532 = vmul.f32 %v2438, 1.442695
          %v2533 = vpow.pop %v2532
          %v2534 = vmul.f32 %v2439, 1.442695
          %v2535 = vpow.pop %v2534
          %v2536 = vmul.f32 %v2440, 1.442695
          %v2537 = vpow.pop %v2536
          %v2538 = vmul.f32 %v2441, 1.442695
          %v2539 = vpow.pop %v2538
          %v2540 = vmul.f32 %v2442, 1.442695
          %v2541 = vpow.pop %v2540
          %v2542 = vmul.f32 %v2443, 1.442695
          %v2543 = vpow.pop %v2542
          %v2544 = vmul.f32 %v2444, 1.442695
          %v2545 = vpow.pop %v2544
          %v2546 = vmul.f32 %v2445, 1.442695
          %v2547 = vpow.pop %v2546
          %v2548 = vmul.f32 %v2446, 1.442695
          %v2549 = vpow.pop %v2548
          %v2550 = vmul.f32 %v2447, 1.442695
          %v2551 = vpow.pop %v2550
          %v2552 = vmul.f32 %v2448, 1.442695
          %v2553 = vpow.pop %v2552
          %v2554 = vmul.f32 %v2449, 1.442695
          %v2555 = vpow.pop %v2554
          %v2556 = vmul.f32 %v2450, 1.442695
          %v2557 = vpow.pop %v2556
          %v2558 = vmul.f32 %v2451, 1.442695
          %v2559 = vpow.pop %v2558
          %v2560 = vmul.f32 %v2452, 1.442695
          %v2561 = vpow.pop %v2560
          %v2562 = vmul.f32 %v2453, 1.442695
          %v2563 = vpow.pop %v2562
          %v2564 = vmul.f32 %v2454, 1.442695
          %v2565 = vpow.pop %v2564
          %v2566 = vmul.f32 %v2455, 1.442695
          %v2567 = vpow.pop %v2566
          %v2568 = vmul.f32 %v2456, 1.442695
          %v2569 = vpow.pop %v2568
          %v2570 = vmul.f32 %v2457, 1.442695
          %v2571 = vpow.pop %v2570
          %v2572 = vmul.f32 %v2458, 1.442695
          %v2573 = vpow.pop %v2572
          %v2574 = vmul.f32 %v2459, 1.442695
          %v2575 = vpow.pop %v2574
          %v2576 = vmul.f32 %v2460, 1.442695
          %v2577 = vpow.pop %v2576
          %v2578 = vmul.f32 %v2461, 1.442695
          %v2579 = vpow.pop %v2578
          %v2580 = vmul.f32 %v2462, 1.442695
          %v2581 = vpow.pop %v2580
          %v2582 = vmul.f32 %v2463, 1.442695
          %v2583 = vpow.pop %v2582
          %v2584 = vmul.f32 %v2464, 1.442695
          %v2585 = vpow.pop %v2584
          %v2586 = vmul.f32 %v2465, 1.442695
          %v2587 = vpow.pop %v2586
          %v2588 = vmul.f32 %v2466, 1.442695
          %v2589 = vpow.pop %v2588
          %v2590 = vmul.f32 %v2467, 1.442695
          %v2591 = vpow.pop %v2590
          %v2592 = vmul.f32 %v2468, 1.442695
          %v2593 = vpow.pop %v2592
          %v2594 = vmul.f32 %v2469, 1.442695
          %v2595 = vpow.pop %v2594
          %v2596 = vmul.f32 %v2470, 1.442695
          %v2597 = vpow.pop %v2596
          %v2598 = vmul.f32 %v2471, 1.442695
          %v2599 = vpow.pop %v2598
          %v2600 = vadd.f32 %v2473, 1.0
          %v2601 = vadd.f32 %v2475, 1.0
          %v2602 = vadd.f32 %v2477, 1.0
          %v2603 = vadd.f32 %v2479, 1.0
          %v2604 = vadd.f32 %v2481, 1.0
          %v2605 = vadd.f32 %v2483, 1.0
          %v2606 = vadd.f32 %v2485, 1.0
          %v2607 = vadd.f32 %v2487, 1.0
          %v2608 = vadd.f32 %v2489, 1.0
          %v2609 = vadd.f32 %v2491, 1.0
          %v2610 = vadd.f32 %v2493, 1.0
          %v2611 = vadd.f32 %v2495, 1.0
          %v2612 = vadd.f32 %v2497, 1.0
          %v2613 = vadd.f32 %v2499, 1.0
          %v2614 = vadd.f32 %v2501, 1.0
          %v2615 = vadd.f32 %v2503, 1.0
          %v2616 = vadd.f32 %v2505, 1.0
          %v2617 = vadd.f32 %v2507, 1.0
          %v2618 = vadd.f32 %v2509, 1.0
          %v2619 = vadd.f32 %v2511, 1.0
          %v2620 = vadd.f32 %v2513, 1.0
          %v2621 = vadd.f32 %v2515, 1.0
          %v2622 = vadd.f32 %v2517, 1.0
          %v2623 = vadd.f32 %v2519, 1.0
          %v2624 = vadd.f32 %v2521, 1.0
          %v2625 = vadd.f32 %v2523, 1.0
          %v2626 = vadd.f32 %v2525, 1.0
          %v2627 = vadd.f32 %v2527, 1.0
          %v2628 = vadd.f32 %v2529, 1.0
          %v2629 = vadd.f32 %v2531, 1.0
          %v2630 = vadd.f32 %v2533, 1.0
          %v2631 = vadd.f32 %v2535, 1.0
          %v2632 = vadd.f32 %v2537, 1.0
          %v2633 = vadd.f32 %v2539, 1.0
          %v2634 = vadd.f32 %v2541, 1.0
          %v2635 = vadd.f32 %v2543, 1.0
          %v2636 = vadd.f32 %v2545, 1.0
          %v2637 = vadd.f32 %v2547, 1.0
          %v2638 = vadd.f32 %v2549, 1.0
          %v2639 = vadd.f32 %v2551, 1.0
          %v2640 = vadd.f32 %v2553, 1.0
          %v2641 = vadd.f32 %v2555, 1.0
          %v2642 = vadd.f32 %v2557, 1.0
          %v2643 = vadd.f32 %v2559, 1.0
          %v2644 = vadd.f32 %v2561, 1.0
          %v2645 = vadd.f32 %v2563, 1.0
          %v2646 = vadd.f32 %v2565, 1.0
          %v2647 = vadd.f32 %v2567, 1.0
          %v2648 = vadd.f32 %v2569, 1.0
          %v2649 = vadd.f32 %v2571, 1.0
          %v2650 = vadd.f32 %v2573, 1.0
          %v2651 = vadd.f32 %v2575, 1.0
          %v2652 = vadd.f32 %v2577, 1.0
          %v2653 = vadd.f32 %v2579, 1.0
          %v2654 = vadd.f32 %v2581, 1.0
          %v2655 = vadd.f32 %v2583, 1.0
          %v2656 = vadd.f32 %v2585, 1.0
          %v2657 = vadd.f32 %v2587, 1.0
          %v2658 = vadd.f32 %v2589, 1.0
          %v2659 = vadd.f32 %v2591, 1.0
          %v2660 = vadd.f32 %v2593, 1.0
          %v2661 = vadd.f32 %v2595, 1.0
          %v2662 = vadd.f32 %v2597, 1.0
          %v2663 = vadd.f32 %v2599, 1.0
          %v2664 = vrcp.pop %v2600
          %v2665 = vmul.f32 1.0, %v2664
          %v2666 = vrcp.pop %v2601
          %v2667 = vmul.f32 1.0, %v2666
          %v2668 = vrcp.pop %v2602
          %v2669 = vmul.f32 1.0, %v2668
          %v2670 = vrcp.pop %v2603
          %v2671 = vmul.f32 1.0, %v2670
          %v2672 = vrcp.pop %v2604
          %v2673 = vmul.f32 1.0, %v2672
          %v2674 = vrcp.pop %v2605
          %v2675 = vmul.f32 1.0, %v2674
          %v2676 = vrcp.pop %v2606
          %v2677 = vmul.f32 1.0, %v2676
          %v2678 = vrcp.pop %v2607
          %v2679 = vmul.f32 1.0, %v2678
          %v2680 = vrcp.pop %v2608
          %v2681 = vmul.f32 1.0, %v2680
          %v2682 = vrcp.pop %v2609
          %v2683 = vmul.f32 1.0, %v2682
          %v2684 = vrcp.pop %v2610
          %v2685 = vmul.f32 1.0, %v2684
          %v2686 = vrcp.pop %v2611
          %v2687 = vmul.f32 1.0, %v2686
          %v2688 = vrcp.pop %v2612
          %v2689 = vmul.f32 1.0, %v2688
          %v2690 = vrcp.pop %v2613
          %v2691 = vmul.f32 1.0, %v2690
          %v2692 = vrcp.pop %v2614
          %v2693 = vmul.f32 1.0, %v2692
          %v2694 = vrcp.pop %v2615
          %v2695 = vmul.f32 1.0, %v2694
          %v2696 = vrcp.pop %v2616
          %v2697 = vmul.f32 1.0, %v2696
          %v2698 = vrcp.pop %v2617
          %v2699 = vmul.f32 1.0, %v2698
          %v2700 = vrcp.pop %v2618
          %v2701 = vmul.f32 1.0, %v2700
          %v2702 = vrcp.pop %v2619
          %v2703 = vmul.f32 1.0, %v2702
          %v2704 = vrcp.pop %v2620
          %v2705 = vmul.f32 1.0, %v2704
          %v2706 = vrcp.pop %v2621
          %v2707 = vmul.f32 1.0, %v2706
          %v2708 = vrcp.pop %v2622
          %v2709 = vmul.f32 1.0, %v2708
          %v2710 = vrcp.pop %v2623
          %v2711 = vmul.f32 1.0, %v2710
          %v2712 = vrcp.pop %v2624
          %v2713 = vmul.f32 1.0, %v2712
          %v2714 = vrcp.pop %v2625
          %v2715 = vmul.f32 1.0, %v2714
          %v2716 = vrcp.pop %v2626
          %v2717 = vmul.f32 1.0, %v2716
          %v2718 = vrcp.pop %v2627
          %v2719 = vmul.f32 1.0, %v2718
          %v2720 = vrcp.pop %v2628
          %v2721 = vmul.f32 1.0, %v2720
          %v2722 = vrcp.pop %v2629
          %v2723 = vmul.f32 1.0, %v2722
          %v2724 = vrcp.pop %v2630
          %v2725 = vmul.f32 1.0, %v2724
          %v2726 = vrcp.pop %v2631
          %v2727 = vmul.f32 1.0, %v2726
          %v2728 = vrcp.pop %v2632
          %v2729 = vmul.f32 1.0, %v2728
          %v2730 = vrcp.pop %v2633
          %v2731 = vmul.f32 1.0, %v2730
          %v2732 = vrcp.pop %v2634
          %v2733 = vmul.f32 1.0, %v2732
          %v2734 = vrcp.pop %v2635
          %v2735 = vmul.f32 1.0, %v2734
          %v2736 = vrcp.pop %v2636
          %v2737 = vmul.f32 1.0, %v2736
          %v2738 = vrcp.pop %v2637
          %v2739 = vmul.f32 1.0, %v2738
          %v2740 = vrcp.pop %v2638
          %v2741 = vmul.f32 1.0, %v2740
          %v2742 = vrcp.pop %v2639
          %v2743 = vmul.f32 1.0, %v2742
          %v2744 = vrcp.pop %v2640
          %v2745 = vmul.f32 1.0, %v2744
          %v2746 = vrcp.pop %v2641
          %v2747 = vmul.f32 1.0, %v2746
          %v2748 = vrcp.pop %v2642
          %v2749 = vmul.f32 1.0, %v2748
          %v2750 = vrcp.pop %v2643
          %v2751 = vmul.f32 1.0, %v2750
          %v2752 = vrcp.pop %v2644
          %v2753 = vmul.f32 1.0, %v2752
          %v2754 = vrcp.pop %v2645
          %v2755 = vmul.f32 1.0, %v2754
          %v2756 = vrcp.pop %v2646
          %v2757 = vmul.f32 1.0, %v2756
          %v2758 = vrcp.pop %v2647
          %v2759 = vmul.f32 1.0, %v2758
          %v2760 = vrcp.pop %v2648
          %v2761 = vmul.f32 1.0, %v2760
          %v2762 = vrcp.pop %v2649
          %v2763 = vmul.f32 1.0, %v2762
          %v2764 = vrcp.pop %v2650
          %v2765 = vmul.f32 1.0, %v2764
          %v2766 = vrcp.pop %v2651
          %v2767 = vmul.f32 1.0, %v2766
          %v2768 = vrcp.pop %v2652
          %v2769 = vmul.f32 1.0, %v2768
          %v2770 = vrcp.pop %v2653
          %v2771 = vmul.f32 1.0, %v2770
          %v2772 = vrcp.pop %v2654
          %v2773 = vmul.f32 1.0, %v2772
          %v2774 = vrcp.pop %v2655
          %v2775 = vmul.f32 1.0, %v2774
          %v2776 = vrcp.pop %v2656
          %v2777 = vmul.f32 1.0, %v2776
          %v2778 = vrcp.pop %v2657
          %v2779 = vmul.f32 1.0, %v2778
          %v2780 = vrcp.pop %v2658
          %v2781 = vmul.f32 1.0, %v2780
          %v2782 = vrcp.pop %v2659
          %v2783 = vmul.f32 1.0, %v2782
          %v2784 = vrcp.pop %v2660
          %v2785 = vmul.f32 1.0, %v2784
          %v2786 = vrcp.pop %v2661
          %v2787 = vmul.f32 1.0, %v2786
          %v2788 = vrcp.pop %v2662
          %v2789 = vmul.f32 1.0, %v2788
          %v2790 = vrcp.pop %v2663
          %v2791 = vmul.f32 1.0, %v2790
          %vm2792 = vcmask 7168
          %2793 = vst.msk [vmem:[%s366] sm:$0xff] %vm2792, %v2665
          %2794 = vst.msk [vmem:[%s366 + $0x8] sm:$0xff] %vm2792, %v2667
          %2795 = vst.msk [vmem:[%s366 + $0x10] sm:$0xff] %vm2792, %v2669
          %2796 = vst.msk [vmem:[%s366 + $0x18] sm:$0xff] %vm2792, %v2671
          %2797 = vst.msk [vmem:[%s366 + $0x20] sm:$0xff] %vm2792, %v2673
          %2798 = vst.msk [vmem:[%s366 + $0x28] sm:$0xff] %vm2792, %v2675
          %2799 = vst.msk [vmem:[%s366 + $0x30] sm:$0xff] %vm2792, %v2677
          %2800 = vst.msk [vmem:[%s366 + $0x38] sm:$0xff] %vm2792, %v2679
          %2801 = vst.msk [vmem:[%s366 + $0x40] sm:$0xff] %vm2792, %v2681
          %2802 = vst.msk [vmem:[%s366 + $0x48] sm:$0xff] %vm2792, %v2683
          %2803 = vst.msk [vmem:[%s366 + $0x50] sm:$0xff] %vm2792, %v2685
          %2804 = vst.msk [vmem:[%s366 + $0x58] sm:$0xff] %vm2792, %v2687
          %2805 = vst.msk [vmem:[%s366 + $0x60] sm:$0xff] %vm2792, %v2689
          %2806 = vst.msk [vmem:[%s366 + $0x68] sm:$0xff] %vm2792, %v2691
          %2807 = vst.msk [vmem:[%s366 + $0x70] sm:$0xff] %vm2792, %v2693
          %2808 = vst.msk [vmem:[%s366 + $0x78] sm:$0xff] %vm2792, %v2695
          %2809 = vst.msk [vmem:[%s366 + $0x80] sm:$0xff] %vm2792, %v2697
          %2810 = vst.msk [vmem:[%s366 + $0x88] sm:$0xff] %vm2792, %v2699
          %2811 = vst.msk [vmem:[%s366 + $0x90] sm:$0xff] %vm2792, %v2701
          %2812 = vst.msk [vmem:[%s366 + $0x98] sm:$0xff] %vm2792, %v2703
          %2813 = vst.msk [vmem:[%s366 + $0xa0] sm:$0xff] %vm2792, %v2705
          %2814 = vst.msk [vmem:[%s366 + $0xa8] sm:$0xff] %vm2792, %v2707
          %2815 = vst.msk [vmem:[%s366 + $0xb0] sm:$0xff] %vm2792, %v2709
          %2816 = vst.msk [vmem:[%s366 + $0xb8] sm:$0xff] %vm2792, %v2711
          %2817 = vst.msk [vmem:[%s366 + $0xc0] sm:$0xff] %vm2792, %v2713
          %2818 = vst.msk [vmem:[%s366 + $0xc8] sm:$0xff] %vm2792, %v2715
          %2819 = vst.msk [vmem:[%s366 + $0xd0] sm:$0xff] %vm2792, %v2717
          %2820 = vst.msk [vmem:[%s366 + $0xd8] sm:$0xff] %vm2792, %v2719
          %2821 = vst.msk [vmem:[%s366 + $0xe0] sm:$0xff] %vm2792, %v2721
          %2822 = vst.msk [vmem:[%s366 + $0xe8] sm:$0xff] %vm2792, %v2723
          %2823 = vst.msk [vmem:[%s366 + $0xf0] sm:$0xff] %vm2792, %v2725
          %2824 = vst.msk [vmem:[%s366 + $0xf8] sm:$0xff] %vm2792, %v2727
          %2825 = vst.msk [vmem:[%s366 + $0x100] sm:$0xff] %vm2792, %v2729
          %2826 = vst.msk [vmem:[%s366 + $0x108] sm:$0xff] %vm2792, %v2731
          %2827 = vst.msk [vmem:[%s366 + $0x110] sm:$0xff] %vm2792, %v2733
          %2828 = vst.msk [vmem:[%s366 + $0x118] sm:$0xff] %vm2792, %v2735
          %2829 = vst.msk [vmem:[%s366 + $0x120] sm:$0xff] %vm2792, %v2737
          %2830 = vst.msk [vmem:[%s366 + $0x128] sm:$0xff] %vm2792, %v2739
          %2831 = vst.msk [vmem:[%s366 + $0x130] sm:$0xff] %vm2792, %v2741
          %2832 = vst.msk [vmem:[%s366 + $0x138] sm:$0xff] %vm2792, %v2743
          %2833 = vst.msk [vmem:[%s366 + $0x140] sm:$0xff] %vm2792, %v2745
          %2834 = vst.msk [vmem:[%s366 + $0x148] sm:$0xff] %vm2792, %v2747
          %2835 = vst.msk [vmem:[%s366 + $0x150] sm:$0xff] %vm2792, %v2749
          %2836 = vst.msk [vmem:[%s366 + $0x158] sm:$0xff] %vm2792, %v2751
          %2837 = vst.msk [vmem:[%s366 + $0x160] sm:$0xff] %vm2792, %v2753
          %2838 = vst.msk [vmem:[%s366 + $0x168] sm:$0xff] %vm2792, %v2755
          %2839 = vst.msk [vmem:[%s366 + $0x170] sm:$0xff] %vm2792, %v2757
          %2840 = vst.msk [vmem:[%s366 + $0x178] sm:$0xff] %vm2792, %v2759
          %2841 = vst.msk [vmem:[%s366 + $0x180] sm:$0xff] %vm2792, %v2761
          %2842 = vst.msk [vmem:[%s366 + $0x188] sm:$0xff] %vm2792, %v2763
          %2843 = vst.msk [vmem:[%s366 + $0x190] sm:$0xff] %vm2792, %v2765
          %2844 = vst.msk [vmem:[%s366 + $0x198] sm:$0xff] %vm2792, %v2767
          %2845 = vst.msk [vmem:[%s366 + $0x1a0] sm:$0xff] %vm2792, %v2769
          %2846 = vst.msk [vmem:[%s366 + $0x1a8] sm:$0xff] %vm2792, %v2771
          %2847 = vst.msk [vmem:[%s366 + $0x1b0] sm:$0xff] %vm2792, %v2773
          %2848 = vst.msk [vmem:[%s366 + $0x1b8] sm:$0xff] %vm2792, %v2775
          %2849 = vst.msk [vmem:[%s366 + $0x1c0] sm:$0xff] %vm2792, %v2777
          %2850 = vst.msk [vmem:[%s366 + $0x1c8] sm:$0xff] %vm2792, %v2779
          %2851 = vst.msk [vmem:[%s366 + $0x1d0] sm:$0xff] %vm2792, %v2781
          %2852 = vst.msk [vmem:[%s366 + $0x1d8] sm:$0xff] %vm2792, %v2783
          %2853 = vst.msk [vmem:[%s366 + $0x1e0] sm:$0xff] %vm2792, %v2785
          %2854 = vst.msk [vmem:[%s366 + $0x1e8] sm:$0xff] %vm2792, %v2787
          %2855 = vst.msk [vmem:[%s366 + $0x1f0] sm:$0xff] %vm2792, %v2789
          %2856 = vst.msk [vmem:[%s366 + $0x1f8] sm:$0xff] %vm2792, %v2791
        $region44: #{carla_ml_forward.1} parent=39 // pred_fallthru
          _
        %p2857 = scmp.gt.s32.totalorder %s34, 0
        // Predicated region
        $region45: #{carla_ml_forward.1} parent=39 // pred_check
          %p2858 = pneg %p2857
        $region46: #{carla_ml_forward.1} parent=39 // pred_check_branch
          %2860 = sbr.rel (%p2858) target = $region48
        $region47: #{carla_ml_forward.1} parent=39 // pred_region
          %v2861 = vld [vmem:[%s330] sm:$0xff]
          %v2862 = vld [vmem:[%s330 + $0x8] sm:$0xff]
          %v2863 = vld [vmem:[%s330 + $0x10] sm:$0xff]
          %v2864 = vld [vmem:[%s330 + $0x18] sm:$0xff]
          %v2865 = vld [vmem:[%s330 + $0x20] sm:$0xff]
          %v2866 = vld [vmem:[%s330 + $0x28] sm:$0xff]
          %v2867 = vld [vmem:[%s330 + $0x30] sm:$0xff]
          %v2868 = vld [vmem:[%s330 + $0x38] sm:$0xff]
          %v2869 = vld [vmem:[%s330 + $0x40] sm:$0xff]
          %v2870 = vld [vmem:[%s330 + $0x48] sm:$0xff]
          %v2871 = vld [vmem:[%s330 + $0x50] sm:$0xff]
          %v2872 = vld [vmem:[%s330 + $0x58] sm:$0xff]
          %v2873 = vld [vmem:[%s330 + $0x60] sm:$0xff]
          %v2874 = vld [vmem:[%s330 + $0x68] sm:$0xff]
          %v2875 = vld [vmem:[%s330 + $0x70] sm:$0xff]
          %v2876 = vld [vmem:[%s330 + $0x78] sm:$0xff]
          %v2877 = vld [vmem:[%s330 + $0x80] sm:$0xff]
          %v2878 = vld [vmem:[%s330 + $0x88] sm:$0xff]
          %v2879 = vld [vmem:[%s330 + $0x90] sm:$0xff]
          %v2880 = vld [vmem:[%s330 + $0x98] sm:$0xff]
          %v2881 = vld [vmem:[%s330 + $0xa0] sm:$0xff]
          %v2882 = vld [vmem:[%s330 + $0xa8] sm:$0xff]
          %v2883 = vld [vmem:[%s330 + $0xb0] sm:$0xff]
          %v2884 = vld [vmem:[%s330 + $0xb8] sm:$0xff]
          %v2885 = vld [vmem:[%s330 + $0xc0] sm:$0xff]
          %v2886 = vld [vmem:[%s330 + $0xc8] sm:$0xff]
          %v2887 = vld [vmem:[%s330 + $0xd0] sm:$0xff]
          %v2888 = vld [vmem:[%s330 + $0xd8] sm:$0xff]
          %v2889 = vld [vmem:[%s330 + $0xe0] sm:$0xff]
          %v2890 = vld [vmem:[%s330 + $0xe8] sm:$0xff]
          %v2891 = vld [vmem:[%s330 + $0xf0] sm:$0xff]
          %v2892 = vld [vmem:[%s330 + $0xf8] sm:$0xff]
          %v2893 = vld [vmem:[%s330 + $0x100] sm:$0xff]
          %v2894 = vld [vmem:[%s330 + $0x108] sm:$0xff]
          %v2895 = vld [vmem:[%s330 + $0x110] sm:$0xff]
          %v2896 = vld [vmem:[%s330 + $0x118] sm:$0xff]
          %v2897 = vld [vmem:[%s330 + $0x120] sm:$0xff]
          %v2898 = vld [vmem:[%s330 + $0x128] sm:$0xff]
          %v2899 = vld [vmem:[%s330 + $0x130] sm:$0xff]
          %v2900 = vld [vmem:[%s330 + $0x138] sm:$0xff]
          %v2901 = vld [vmem:[%s330 + $0x140] sm:$0xff]
          %v2902 = vld [vmem:[%s330 + $0x148] sm:$0xff]
          %v2903 = vld [vmem:[%s330 + $0x150] sm:$0xff]
          %v2904 = vld [vmem:[%s330 + $0x158] sm:$0xff]
          %v2905 = vld [vmem:[%s330 + $0x160] sm:$0xff]
          %v2906 = vld [vmem:[%s330 + $0x168] sm:$0xff]
          %v2907 = vld [vmem:[%s330 + $0x170] sm:$0xff]
          %v2908 = vld [vmem:[%s330 + $0x178] sm:$0xff]
          %v2909 = vld [vmem:[%s330 + $0x180] sm:$0xff]
          %v2910 = vld [vmem:[%s330 + $0x188] sm:$0xff]
          %v2911 = vld [vmem:[%s330 + $0x190] sm:$0xff]
          %v2912 = vld [vmem:[%s330 + $0x198] sm:$0xff]
          %v2913 = vld [vmem:[%s330 + $0x1a0] sm:$0xff]
          %v2914 = vld [vmem:[%s330 + $0x1a8] sm:$0xff]
          %v2915 = vld [vmem:[%s330 + $0x1b0] sm:$0xff]
          %v2916 = vld [vmem:[%s330 + $0x1b8] sm:$0xff]
          %v2917 = vld [vmem:[%s330 + $0x1c0] sm:$0xff]
          %v2918 = vld [vmem:[%s330 + $0x1c8] sm:$0xff]
          %v2919 = vld [vmem:[%s330 + $0x1d0] sm:$0xff]
          %v2920 = vld [vmem:[%s330 + $0x1d8] sm:$0xff]
          %v2921 = vld [vmem:[%s330 + $0x1e0] sm:$0xff]
          %v2922 = vld [vmem:[%s330 + $0x1e8] sm:$0xff]
          %v2923 = vld [vmem:[%s330 + $0x1f0] sm:$0xff]
          %v2924 = vld [vmem:[%s330 + $0x1f8] sm:$0xff]
          %v2925 = vadd.f32 %v2861, %v1878
          %v2926 = vadd.f32 %v2862, %v1879
          %v2927 = vadd.f32 %v2863, %v1880
          %v2928 = vadd.f32 %v2864, %v1881
          %v2929 = vadd.f32 %v2865, %v1882
          %v2930 = vadd.f32 %v2866, %v1883
          %v2931 = vadd.f32 %v2867, %v1884
          %v2932 = vadd.f32 %v2868, %v1885
          %v2933 = vadd.f32 %v2869, %v1886
          %v2934 = vadd.f32 %v2870, %v1887
          %v2935 = vadd.f32 %v2871, %v1888
          %v2936 = vadd.f32 %v2872, %v1889
          %v2937 = vadd.f32 %v2873, %v1890
          %v2938 = vadd.f32 %v2874, %v1891
          %v2939 = vadd.f32 %v2875, %v1892
          %v2940 = vadd.f32 %v2876, %v1893
          %v2941 = vadd.f32 %v2877, %v1894
          %v2942 = vadd.f32 %v2878, %v1895
          %v2943 = vadd.f32 %v2879, %v1896
          %v2944 = vadd.f32 %v2880, %v1897
          %v2945 = vadd.f32 %v2881, %v1898
          %v2946 = vadd.f32 %v2882, %v1899
          %v2947 = vadd.f32 %v2883, %v1900
          %v2948 = vadd.f32 %v2884, %v1901
          %v2949 = vadd.f32 %v2885, %v1902
          %v2950 = vadd.f32 %v2886, %v1903
          %v2951 = vadd.f32 %v2887, %v1904
          %v2952 = vadd.f32 %v2888, %v1905
          %v2953 = vadd.f32 %v2889, %v1906
          %v2954 = vadd.f32 %v2890, %v1907
          %v2955 = vadd.f32 %v2891, %v1908
          %v2956 = vadd.f32 %v2892, %v1909
          %v2957 = vadd.f32 %v2893, %v1910
          %v2958 = vadd.f32 %v2894, %v1911
          %v2959 = vadd.f32 %v2895, %v1912
          %v2960 = vadd.f32 %v2896, %v1913
          %v2961 = vadd.f32 %v2897, %v1914
          %v2962 = vadd.f32 %v2898, %v1915
          %v2963 = vadd.f32 %v2899, %v1916
          %v2964 = vadd.f32 %v2900, %v1917
          %v2965 = vadd.f32 %v2901, %v1918
          %v2966 = vadd.f32 %v2902, %v1919
          %v2967 = vadd.f32 %v2903, %v1920
          %v2968 = vadd.f32 %v2904, %v1921
          %v2969 = vadd.f32 %v2905, %v1922
          %v2970 = vadd.f32 %v2906, %v1923
          %v2971 = vadd.f32 %v2907, %v1924
          %v2972 = vadd.f32 %v2908, %v1925
          %v2973 = vadd.f32 %v2909, %v1926
          %v2974 = vadd.f32 %v2910, %v1927
          %v2975 = vadd.f32 %v2911, %v1928
          %v2976 = vadd.f32 %v2912, %v1929
          %v2977 = vadd.f32 %v2913, %v1930
          %v2978 = vadd.f32 %v2914, %v1931
          %v2979 = vadd.f32 %v2915, %v1932
          %v2980 = vadd.f32 %v2916, %v1933
          %v2981 = vadd.f32 %v2917, %v1934
          %v2982 = vadd.f32 %v2918, %v1935
          %v2983 = vadd.f32 %v2919, %v1936
          %v2984 = vadd.f32 %v2920, %v1937
          %v2985 = vadd.f32 %v2921, %v1938
          %v2986 = vadd.f32 %v2922, %v1939
          %v2987 = vadd.f32 %v2923, %v1940
          %v2988 = vadd.f32 %v2924, %v1941
          %2989 = vst.msk [vmem:[%s330] sm:$0xff] %vm1109, %v2925
          %2990 = vst.msk [vmem:[%s330 + $0x8] sm:$0xff] %vm1109, %v2926
          %2991 = vst.msk [vmem:[%s330 + $0x10] sm:$0xff] %vm1109, %v2927
          %2992 = vst.msk [vmem:[%s330 + $0x18] sm:$0xff] %vm1109, %v2928
          %2993 = vst.msk [vmem:[%s330 + $0x20] sm:$0xff] %vm1109, %v2929
          %2994 = vst.msk [vmem:[%s330 + $0x28] sm:$0xff] %vm1109, %v2930
          %2995 = vst.msk [vmem:[%s330 + $0x30] sm:$0xff] %vm1109, %v2931
          %2996 = vst.msk [vmem:[%s330 + $0x38] sm:$0xff] %vm1109, %v2932
          %2997 = vst.msk [vmem:[%s330 + $0x40] sm:$0xff] %vm1109, %v2933
          %2998 = vst.msk [vmem:[%s330 + $0x48] sm:$0xff] %vm1109, %v2934
          %2999 = vst.msk [vmem:[%s330 + $0x50] sm:$0xff] %vm1109, %v2935
          %3000 = vst.msk [vmem:[%s330 + $0x58] sm:$0xff] %vm1109, %v2936
          %3001 = vst.msk [vmem:[%s330 + $0x60] sm:$0xff] %vm1109, %v2937
          %3002 = vst.msk [vmem:[%s330 + $0x68] sm:$0xff] %vm1109, %v2938
          %3003 = vst.msk [vmem:[%s330 + $0x70] sm:$0xff] %vm1109, %v2939
          %3004 = vst.msk [vmem:[%s330 + $0x78] sm:$0xff] %vm1109, %v2940
          %3005 = vst.msk [vmem:[%s330 + $0x80] sm:$0xff] %vm1109, %v2941
          %3006 = vst.msk [vmem:[%s330 + $0x88] sm:$0xff] %vm1109, %v2942
          %3007 = vst.msk [vmem:[%s330 + $0x90] sm:$0xff] %vm1109, %v2943
          %3008 = vst.msk [vmem:[%s330 + $0x98] sm:$0xff] %vm1109, %v2944
          %3009 = vst.msk [vmem:[%s330 + $0xa0] sm:$0xff] %vm1109, %v2945
          %3010 = vst.msk [vmem:[%s330 + $0xa8] sm:$0xff] %vm1109, %v2946
          %3011 = vst.msk [vmem:[%s330 + $0xb0] sm:$0xff] %vm1109, %v2947
          %3012 = vst.msk [vmem:[%s330 + $0xb8] sm:$0xff] %vm1109, %v2948
          %3013 = vst.msk [vmem:[%s330 + $0xc0] sm:$0xff] %vm1109, %v2949
          %3014 = vst.msk [vmem:[%s330 + $0xc8] sm:$0xff] %vm1109, %v2950
          %3015 = vst.msk [vmem:[%s330 + $0xd0] sm:$0xff] %vm1109, %v2951
          %3016 = vst.msk [vmem:[%s330 + $0xd8] sm:$0xff] %vm1109, %v2952
          %3017 = vst.msk [vmem:[%s330 + $0xe0] sm:$0xff] %vm1109, %v2953
          %3018 = vst.msk [vmem:[%s330 + $0xe8] sm:$0xff] %vm1109, %v2954
          %3019 = vst.msk [vmem:[%s330 + $0xf0] sm:$0xff] %vm1109, %v2955
          %3020 = vst.msk [vmem:[%s330 + $0xf8] sm:$0xff] %vm1109, %v2956
          %3021 = vst.msk [vmem:[%s330 + $0x100] sm:$0xff] %vm1109, %v2957
          %3022 = vst.msk [vmem:[%s330 + $0x108] sm:$0xff] %vm1109, %v2958
          %3023 = vst.msk [vmem:[%s330 + $0x110] sm:$0xff] %vm1109, %v2959
          %3024 = vst.msk [vmem:[%s330 + $0x118] sm:$0xff] %vm1109, %v2960
          %3025 = vst.msk [vmem:[%s330 + $0x120] sm:$0xff] %vm1109, %v2961
          %3026 = vst.msk [vmem:[%s330 + $0x128] sm:$0xff] %vm1109, %v2962
          %3027 = vst.msk [vmem:[%s330 + $0x130] sm:$0xff] %vm1109, %v2963
          %3028 = vst.msk [vmem:[%s330 + $0x138] sm:$0xff] %vm1109, %v2964
          %3029 = vst.msk [vmem:[%s330 + $0x140] sm:$0xff] %vm1109, %v2965
          %3030 = vst.msk [vmem:[%s330 + $0x148] sm:$0xff] %vm1109, %v2966
          %3031 = vst.msk [vmem:[%s330 + $0x150] sm:$0xff] %vm1109, %v2967
          %3032 = vst.msk [vmem:[%s330 + $0x158] sm:$0xff] %vm1109, %v2968
          %3033 = vst.msk [vmem:[%s330 + $0x160] sm:$0xff] %vm1109, %v2969
          %3034 = vst.msk [vmem:[%s330 + $0x168] sm:$0xff] %vm1109, %v2970
          %3035 = vst.msk [vmem:[%s330 + $0x170] sm:$0xff] %vm1109, %v2971
          %3036 = vst.msk [vmem:[%s330 + $0x178] sm:$0xff] %vm1109, %v2972
          %3037 = vst.msk [vmem:[%s330 + $0x180] sm:$0xff] %vm1109, %v2973
          %3038 = vst.msk [vmem:[%s330 + $0x188] sm:$0xff] %vm1109, %v2974
          %3039 = vst.msk [vmem:[%s330 + $0x190] sm:$0xff] %vm1109, %v2975
          %3040 = vst.msk [vmem:[%s330 + $0x198] sm:$0xff] %vm1109, %v2976
          %3041 = vst.msk [vmem:[%s330 + $0x1a0] sm:$0xff] %vm1109, %v2977
          %3042 = vst.msk [vmem:[%s330 + $0x1a8] sm:$0xff] %vm1109, %v2978
          %3043 = vst.msk [vmem:[%s330 + $0x1b0] sm:$0xff] %vm1109, %v2979
          %3044 = vst.msk [vmem:[%s330 + $0x1b8] sm:$0xff] %vm1109, %v2980
          %3045 = vst.msk [vmem:[%s330 + $0x1c0] sm:$0xff] %vm1109, %v2981
          %3046 = vst.msk [vmem:[%s330 + $0x1c8] sm:$0xff] %vm1109, %v2982
          %3047 = vst.msk [vmem:[%s330 + $0x1d0] sm:$0xff] %vm1109, %v2983
          %3048 = vst.msk [vmem:[%s330 + $0x1d8] sm:$0xff] %vm1109, %v2984
          %3049 = vst.msk [vmem:[%s330 + $0x1e0] sm:$0xff] %vm1109, %v2985
          %3050 = vst.msk [vmem:[%s330 + $0x1e8] sm:$0xff] %vm1109, %v2986
          %3051 = vst.msk [vmem:[%s330 + $0x1f0] sm:$0xff] %vm1109, %v2987
          %3052 = vst.msk [vmem:[%s330 + $0x1f8] sm:$0xff] %vm1109, %v2988
        $region48: #{carla_ml_forward.1} parent=39 // pred_fallthru
          _
        %p3053 = scmp.eq.s32.totalorder %s34, 2
        // Predicated region
        $region49: #{carla_ml_forward.1} parent=39 // pred_check
          %p3054 = pneg %p3053
        $region50: #{carla_ml_forward.1} parent=39 // pred_check_branch
          %3056 = sbr.rel (%p3054) target = $region52
        $region51: #{carla_ml_forward.1} parent=39 // pred_region
          %v3057 = vld [vmem:[%s330] sm:$0xff]
          %v3058 = vld [vmem:[%s330 + $0x8] sm:$0xff]
          %v3059 = vld [vmem:[%s330 + $0x10] sm:$0xff]
          %v3060 = vld [vmem:[%s330 + $0x18] sm:$0xff]
          %v3061 = vld [vmem:[%s330 + $0x20] sm:$0xff]
          %v3062 = vld [vmem:[%s330 + $0x28] sm:$0xff]
          %v3063 = vld [vmem:[%s330 + $0x30] sm:$0xff]
          %v3064 = vld [vmem:[%s330 + $0x38] sm:$0xff]
          %v3065 = vld [vmem:[%s330 + $0x40] sm:$0xff]
          %v3066 = vld [vmem:[%s330 + $0x48] sm:$0xff]
          %v3067 = vld [vmem:[%s330 + $0x50] sm:$0xff]
          %v3068 = vld [vmem:[%s330 + $0x58] sm:$0xff]
          %v3069 = vld [vmem:[%s330 + $0x60] sm:$0xff]
          %v3070 = vld [vmem:[%s330 + $0x68] sm:$0xff]
          %v3071 = vld [vmem:[%s330 + $0x70] sm:$0xff]
          %v3072 = vld [vmem:[%s330 + $0x78] sm:$0xff]
          %v3073 = vld [vmem:[%s330 + $0x80] sm:$0xff]
          %v3074 = vld [vmem:[%s330 + $0x88] sm:$0xff]
          %v3075 = vld [vmem:[%s330 + $0x90] sm:$0xff]
          %v3076 = vld [vmem:[%s330 + $0x98] sm:$0xff]
          %v3077 = vld [vmem:[%s330 + $0xa0] sm:$0xff]
          %v3078 = vld [vmem:[%s330 + $0xa8] sm:$0xff]
          %v3079 = vld [vmem:[%s330 + $0xb0] sm:$0xff]
          %v3080 = vld [vmem:[%s330 + $0xb8] sm:$0xff]
          %v3081 = vld [vmem:[%s330 + $0xc0] sm:$0xff]
          %v3082 = vld [vmem:[%s330 + $0xc8] sm:$0xff]
          %v3083 = vld [vmem:[%s330 + $0xd0] sm:$0xff]
          %v3084 = vld [vmem:[%s330 + $0xd8] sm:$0xff]
          %v3085 = vld [vmem:[%s330 + $0xe0] sm:$0xff]
          %v3086 = vld [vmem:[%s330 + $0xe8] sm:$0xff]
          %v3087 = vld [vmem:[%s330 + $0xf0] sm:$0xff]
          %v3088 = vld [vmem:[%s330 + $0xf8] sm:$0xff]
          %v3089 = vld [vmem:[%s330 + $0x100] sm:$0xff]
          %v3090 = vld [vmem:[%s330 + $0x108] sm:$0xff]
          %v3091 = vld [vmem:[%s330 + $0x110] sm:$0xff]
          %v3092 = vld [vmem:[%s330 + $0x118] sm:$0xff]
          %v3093 = vld [vmem:[%s330 + $0x120] sm:$0xff]
          %v3094 = vld [vmem:[%s330 + $0x128] sm:$0xff]
          %v3095 = vld [vmem:[%s330 + $0x130] sm:$0xff]
          %v3096 = vld [vmem:[%s330 + $0x138] sm:$0xff]
          %v3097 = vld [vmem:[%s330 + $0x140] sm:$0xff]
          %v3098 = vld [vmem:[%s330 + $0x148] sm:$0xff]
          %v3099 = vld [vmem:[%s330 + $0x150] sm:$0xff]
          %v3100 = vld [vmem:[%s330 + $0x158] sm:$0xff]
          %v3101 = vld [vmem:[%s330 + $0x160] sm:$0xff]
          %v3102 = vld [vmem:[%s330 + $0x168] sm:$0xff]
          %v3103 = vld [vmem:[%s330 + $0x170] sm:$0xff]
          %v3104 = vld [vmem:[%s330 + $0x178] sm:$0xff]
          %v3105 = vld [vmem:[%s330 + $0x180] sm:$0xff]
          %v3106 = vld [vmem:[%s330 + $0x188] sm:$0xff]
          %v3107 = vld [vmem:[%s330 + $0x190] sm:$0xff]
          %v3108 = vld [vmem:[%s330 + $0x198] sm:$0xff]
          %v3109 = vld [vmem:[%s330 + $0x1a0] sm:$0xff]
          %v3110 = vld [vmem:[%s330 + $0x1a8] sm:$0xff]
          %v3111 = vld [vmem:[%s330 + $0x1b0] sm:$0xff]
          %v3112 = vld [vmem:[%s330 + $0x1b8] sm:$0xff]
          %v3113 = vld [vmem:[%s330 + $0x1c0] sm:$0xff]
          %v3114 = vld [vmem:[%s330 + $0x1c8] sm:$0xff]
          %v3115 = vld [vmem:[%s330 + $0x1d0] sm:$0xff]
          %v3116 = vld [vmem:[%s330 + $0x1d8] sm:$0xff]
          %v3117 = vld [vmem:[%s330 + $0x1e0] sm:$0xff]
          %v3118 = vld [vmem:[%s330 + $0x1e8] sm:$0xff]
          %v3119 = vld [vmem:[%s330 + $0x1f0] sm:$0xff]
          %v3120 = vld [vmem:[%s330 + $0x1f8] sm:$0xff]
          %v3121 = vmul.f32 %v3057, 0.49999976
          %v3122 = vmul.f32 %v3058, 0.49999976
          %v3123 = vmul.f32 %v3059, 0.49999976
          %v3124 = vmul.f32 %v3060, 0.49999976
          %v3125 = vmul.f32 %v3061, 0.49999976
          %v3126 = vmul.f32 %v3062, 0.49999976
          %v3127 = vmul.f32 %v3063, 0.49999976
          %v3128 = vmul.f32 %v3064, 0.49999976
          %v3129 = vmul.f32 %v3065, 0.49999976
          %v3130 = vmul.f32 %v3066, 0.49999976
          %v3131 = vmul.f32 %v3067, 0.49999976
          %v3132 = vmul.f32 %v3068, 0.49999976
          %v3133 = vmul.f32 %v3069, 0.49999976
          %v3134 = vmul.f32 %v3070, 0.49999976
          %v3135 = vmul.f32 %v3071, 0.49999976
          %v3136 = vmul.f32 %v3072, 0.49999976
          %v3137 = vmul.f32 %v3073, 0.49999976
          %v3138 = vmul.f32 %v3074, 0.49999976
          %v3139 = vmul.f32 %v3075, 0.49999976
          %v3140 = vmul.f32 %v3076, 0.49999976
          %v3141 = vmul.f32 %v3077, 0.49999976
          %v3142 = vmul.f32 %v3078, 0.49999976
          %v3143 = vmul.f32 %v3079, 0.49999976
          %v3144 = vmul.f32 %v3080, 0.49999976
          %v3145 = vmul.f32 %v3081, 0.49999976
          %v3146 = vmul.f32 %v3082, 0.49999976
          %v3147 = vmul.f32 %v3083, 0.49999976
          %v3148 = vmul.f32 %v3084, 0.49999976
          %v3149 = vmul.f32 %v3085, 0.49999976
          %v3150 = vmul.f32 %v3086, 0.49999976
          %v3151 = vmul.f32 %v3087, 0.49999976
          %v3152 = vmul.f32 %v3088, 0.49999976
          %v3153 = vmul.f32 %v3089, 0.49999976
          %v3154 = vmul.f32 %v3090, 0.49999976
          %v3155 = vmul.f32 %v3091, 0.49999976
          %v3156 = vmul.f32 %v3092, 0.49999976
          %v3157 = vmul.f32 %v3093, 0.49999976
          %v3158 = vmul.f32 %v3094, 0.49999976
          %v3159 = vmul.f32 %v3095, 0.49999976
          %v3160 = vmul.f32 %v3096, 0.49999976
          %v3161 = vmul.f32 %v3097, 0.49999976
          %v3162 = vmul.f32 %v3098, 0.49999976
          %v3163 = vmul.f32 %v3099, 0.49999976
          %v3164 = vmul.f32 %v3100, 0.49999976
          %v3165 = vmul.f32 %v3101, 0.49999976
          %v3166 = vmul.f32 %v3102, 0.49999976
          %v3167 = vmul.f32 %v3103, 0.49999976
          %v3168 = vmul.f32 %v3104, 0.49999976
          %v3169 = vmul.f32 %v3105, 0.49999976
          %v3170 = vmul.f32 %v3106, 0.49999976
          %v3171 = vmul.f32 %v3107, 0.49999976
          %v3172 = vmul.f32 %v3108, 0.49999976
          %v3173 = vmul.f32 %v3109, 0.49999976
          %v3174 = vmul.f32 %v3110, 0.49999976
          %v3175 = vmul.f32 %v3111, 0.49999976
          %v3176 = vmul.f32 %v3112, 0.49999976
          %v3177 = vmul.f32 %v3113, 0.49999976
          %v3178 = vmul.f32 %v3114, 0.49999976
          %v3179 = vmul.f32 %v3115, 0.49999976
          %v3180 = vmul.f32 %v3116, 0.49999976
          %v3181 = vmul.f32 %v3117, 0.49999976
          %v3182 = vmul.f32 %v3118, 0.49999976
          %v3183 = vmul.f32 %v3119, 0.49999976
          %v3184 = vmul.f32 %v3120, 0.49999976
          %3185 = vst.msk [vmem:[%s330] sm:$0xff] %vm1109, %v3121
          %3186 = vst.msk [vmem:[%s330 + $0x8] sm:$0xff] %vm1109, %v3122
          %3187 = vst.msk [vmem:[%s330 + $0x10] sm:$0xff] %vm1109, %v3123
          %3188 = vst.msk [vmem:[%s330 + $0x18] sm:$0xff] %vm1109, %v3124
          %3189 = vst.msk [vmem:[%s330 + $0x20] sm:$0xff] %vm1109, %v3125
          %3190 = vst.msk [vmem:[%s330 + $0x28] sm:$0xff] %vm1109, %v3126
          %3191 = vst.msk [vmem:[%s330 + $0x30] sm:$0xff] %vm1109, %v3127
          %3192 = vst.msk [vmem:[%s330 + $0x38] sm:$0xff] %vm1109, %v3128
          %3193 = vst.msk [vmem:[%s330 + $0x40] sm:$0xff] %vm1109, %v3129
          %3194 = vst.msk [vmem:[%s330 + $0x48] sm:$0xff] %vm1109, %v3130
          %3195 = vst.msk [vmem:[%s330 + $0x50] sm:$0xff] %vm1109, %v3131
          %3196 = vst.msk [vmem:[%s330 + $0x58] sm:$0xff] %vm1109, %v3132
          %3197 = vst.msk [vmem:[%s330 + $0x60] sm:$0xff] %vm1109, %v3133
          %3198 = vst.msk [vmem:[%s330 + $0x68] sm:$0xff] %vm1109, %v3134
          %3199 = vst.msk [vmem:[%s330 + $0x70] sm:$0xff] %vm1109, %v3135
          %3200 = vst.msk [vmem:[%s330 + $0x78] sm:$0xff] %vm1109, %v3136
          %3201 = vst.msk [vmem:[%s330 + $0x80] sm:$0xff] %vm1109, %v3137
          %3202 = vst.msk [vmem:[%s330 + $0x88] sm:$0xff] %vm1109, %v3138
          %3203 = vst.msk [vmem:[%s330 + $0x90] sm:$0xff] %vm1109, %v3139
          %3204 = vst.msk [vmem:[%s330 + $0x98] sm:$0xff] %vm1109, %v3140
          %3205 = vst.msk [vmem:[%s330 + $0xa0] sm:$0xff] %vm1109, %v3141
          %3206 = vst.msk [vmem:[%s330 + $0xa8] sm:$0xff] %vm1109, %v3142
          %3207 = vst.msk [vmem:[%s330 + $0xb0] sm:$0xff] %vm1109, %v3143
          %3208 = vst.msk [vmem:[%s330 + $0xb8] sm:$0xff] %vm1109, %v3144
          %3209 = vst.msk [vmem:[%s330 + $0xc0] sm:$0xff] %vm1109, %v3145
          %3210 = vst.msk [vmem:[%s330 + $0xc8] sm:$0xff] %vm1109, %v3146
          %3211 = vst.msk [vmem:[%s330 + $0xd0] sm:$0xff] %vm1109, %v3147
          %3212 = vst.msk [vmem:[%s330 + $0xd8] sm:$0xff] %vm1109, %v3148
          %3213 = vst.msk [vmem:[%s330 + $0xe0] sm:$0xff] %vm1109, %v3149
          %3214 = vst.msk [vmem:[%s330 + $0xe8] sm:$0xff] %vm1109, %v3150
          %3215 = vst.msk [vmem:[%s330 + $0xf0] sm:$0xff] %vm1109, %v3151
          %3216 = vst.msk [vmem:[%s330 + $0xf8] sm:$0xff] %vm1109, %v3152
          %3217 = vst.msk [vmem:[%s330 + $0x100] sm:$0xff] %vm1109, %v3153
          %3218 = vst.msk [vmem:[%s330 + $0x108] sm:$0xff] %vm1109, %v3154
          %3219 = vst.msk [vmem:[%s330 + $0x110] sm:$0xff] %vm1109, %v3155
          %3220 = vst.msk [vmem:[%s330 + $0x118] sm:$0xff] %vm1109, %v3156
          %3221 = vst.msk [vmem:[%s330 + $0x120] sm:$0xff] %vm1109, %v3157
          %3222 = vst.msk [vmem:[%s330 + $0x128] sm:$0xff] %vm1109, %v3158
          %3223 = vst.msk [vmem:[%s330 + $0x130] sm:$0xff] %vm1109, %v3159
          %3224 = vst.msk [vmem:[%s330 + $0x138] sm:$0xff] %vm1109, %v3160
          %3225 = vst.msk [vmem:[%s330 + $0x140] sm:$0xff] %vm1109, %v3161
          %3226 = vst.msk [vmem:[%s330 + $0x148] sm:$0xff] %vm1109, %v3162
          %3227 = vst.msk [vmem:[%s330 + $0x150] sm:$0xff] %vm1109, %v3163
          %3228 = vst.msk [vmem:[%s330 + $0x158] sm:$0xff] %vm1109, %v3164
          %3229 = vst.msk [vmem:[%s330 + $0x160] sm:$0xff] %vm1109, %v3165
          %3230 = vst.msk [vmem:[%s330 + $0x168] sm:$0xff] %vm1109, %v3166
          %3231 = vst.msk [vmem:[%s330 + $0x170] sm:$0xff] %vm1109, %v3167
          %3232 = vst.msk [vmem:[%s330 + $0x178] sm:$0xff] %vm1109, %v3168
          %3233 = vst.msk [vmem:[%s330 + $0x180] sm:$0xff] %vm1109, %v3169
          %3234 = vst.msk [vmem:[%s330 + $0x188] sm:$0xff] %vm1109, %v3170
          %3235 = vst.msk [vmem:[%s330 + $0x190] sm:$0xff] %vm1109, %v3171
          %3236 = vst.msk [vmem:[%s330 + $0x198] sm:$0xff] %vm1109, %v3172
          %3237 = vst.msk [vmem:[%s330 + $0x1a0] sm:$0xff] %vm1109, %v3173
          %3238 = vst.msk [vmem:[%s330 + $0x1a8] sm:$0xff] %vm1109, %v3174
          %3239 = vst.msk [vmem:[%s330 + $0x1b0] sm:$0xff] %vm1109, %v3175
          %3240 = vst.msk [vmem:[%s330 + $0x1b8] sm:$0xff] %vm1109, %v3176
          %3241 = vst.msk [vmem:[%s330 + $0x1c0] sm:$0xff] %vm1109, %v3177
          %3242 = vst.msk [vmem:[%s330 + $0x1c8] sm:$0xff] %vm1109, %v3178
          %3243 = vst.msk [vmem:[%s330 + $0x1d0] sm:$0xff] %vm1109, %v3179
          %3244 = vst.msk [vmem:[%s330 + $0x1d8] sm:$0xff] %vm1109, %v3180
          %3245 = vst.msk [vmem:[%s330 + $0x1e0] sm:$0xff] %vm1109, %v3181
          %3246 = vst.msk [vmem:[%s330 + $0x1e8] sm:$0xff] %vm1109, %v3182
          %3247 = vst.msk [vmem:[%s330 + $0x1f0] sm:$0xff] %vm1109, %v3183
          %3248 = vst.msk [vmem:[%s330 + $0x1f8] sm:$0xff] %vm1109, %v3184
        $region52: #{carla_ml_forward.1} parent=39 // pred_fallthru
          _
        %s3249 = sand.u32 %s170, 1
        %s3250 = scalar_lea.sflag [#allocation4], %s3249
        %s3251 = sand.u32 %s170, 1
        %s3252 = smul.addr %s3251, 512
        %s3253 = scalar_lea.vmem [#allocation3], %s3252
        %s3254 = sand.u32 %s198, 1
        %s3255 = scalar_lea.sflag [#allocation6], %s3254
        %s3256 = sand.u32 %s198, 1
        %s3257 = smul.addr %s3256, 512
        %s3258 = scalar_lea.vmem [#allocation5], %s3257
        %s3259 = smul.u32 64, %s33
        %p3260 = scmp.lt.s32.totalorder %s32, 1
        %s3261 = scalar_select %p3260, %s32, 1
        %p3262 = scmp.lt.s32.totalorder %s3259, 63
        %s3263 = scalar_select %p3262, %s3259, 63
        %s3264 = smul.addr %s3261, 64
        %s3265 = sadd.s32 %s3263, %s3264
        %s3266 = smul.addr %s3265, 8
        %s3267 = scalar_lea.vmem %s7, %s3266
        // Predicated region
        $region53: #{carla_ml_forward.1} parent=39 // pred_check
          %p3268 = pneg %p180
        $region54: #{carla_ml_forward.1} parent=39 // pred_check_branch
          %3270 = sbr.rel (%p3268) target = $region56
        $region55: #{carla_ml_forward.1} parent=39 // pred_region
          %s3271 = smul.u32 64, %s33
          %s3273 = ssub.s32 8192, 8192
          %3274 = vsyncadd %s3250, %s3273
          %s3275 = smul.addr %s32, 64
          %s3276 = sadd.s32 %s3271, %s3275
          %s3277 = smul.addr %s3276, 128
          %s3278 = scalar_lea.hbm %s5, %s3277
          %s3279 = sshll.u32 %s3253, 4
          %s3280 = int_to_ptr.vmem [resolvable:$true] %s3279
          %3285 = dma.vmem_to_hbm [thread:$0]  %s3280, 8192, %s3278, %s3250, 128, 128, 8
        $region56: #{carla_ml_forward.1} parent=39 // pred_fallthru
          _
        // Predicated region
        $region57: #{carla_ml_forward.1} parent=39 // pred_check
          %p3286 = pneg %p208
        $region58: #{carla_ml_forward.1} parent=39 // pred_check_branch
          %3288 = sbr.rel (%p3286) target = $region60
        $region59: #{carla_ml_forward.1} parent=39 // pred_region
          %s3289 = smul.u32 64, %s33
          %s3291 = ssub.s32 8192, 8192
          %3292 = vsyncadd %s3255, %s3291
          %s3293 = smul.addr %s32, 64
          %s3294 = sadd.s32 %s3289, %s3293
          %s3295 = smul.addr %s3294, 128
          %s3296 = scalar_lea.hbm %s6, %s3295
          %s3297 = sshll.u32 %s3258, 4
          %s3298 = int_to_ptr.vmem [resolvable:$true] %s3297
          %3303 = dma.vmem_to_hbm [thread:$0]  %s3298, 8192, %s3296, %s3255, 128, 128, 8
        $region60: #{carla_ml_forward.1} parent=39 // pred_fallthru
          _
        // Predicated region
        $region61: #{carla_ml_forward.1} parent=39 // pred_check
          %p3304 = pneg %p236
        $region62: #{carla_ml_forward.1} parent=39 // pred_check_branch
          %3306 = sbr.rel (%p3304) target = $region64
        $region63: #{carla_ml_forward.1} parent=39 // pred_region
          %s3307 = smul.u32 64, %s33
        $region64: #{carla_ml_forward.1} parent=39 // pred_fallthru
          _
      $region40: #{carla_ml_forward.1} parent=5 // pred_fallthru
        _
      %p3308 = scmp.le.s32.totalorder 2, %s22
      // Predicated region
      $region65: #{carla_ml_forward.1} parent=5 // pred_check
        %p3309 = pneg %p3308
      $region66: #{carla_ml_forward.1} parent=5 // pred_check_branch
        %3311 = sbr.rel (%p3309) target = $region68
      $region67: #{carla_ml_forward.1} parent=5 // pred_region
        %s3312 = ssub.s32 %s22, 2
        // Predicated region
        $region69: #{carla_ml_forward.1} parent=67 // pred_check
          %p3313 = pneg %p186
        $region70: #{carla_ml_forward.1} parent=67 // pred_check_branch
          %3315 = sbr.rel (%p3313) target = $region72
        $region71: #{carla_ml_forward.1} parent=67 // pred_region
          %s3316 = sand.u32 %s171, 1
          %s3317 = scalar_lea.sflag [#allocation4], %s3316
          %s3318 = sand.u32 %s171, 1
          %s3319 = smul.addr %s3318, 512
          %s3320 = scalar_lea.vmem [#allocation3], %s3319
          %3321 = dma.done %s3317, 8192
        $region72: #{carla_ml_forward.1} parent=67 // pred_fallthru
          _
        // Predicated region
        $region73: #{carla_ml_forward.1} parent=67 // pred_check
          %p3322 = pneg %p214
        $region74: #{carla_ml_forward.1} parent=67 // pred_check_branch
          %3324 = sbr.rel (%p3322) target = $region76
        $region75: #{carla_ml_forward.1} parent=67 // pred_region
          %s3325 = sand.u32 %s199, 1
          %s3326 = scalar_lea.sflag [#allocation6], %s3325
          %s3327 = sand.u32 %s199, 1
          %s3328 = smul.addr %s3327, 512
          %s3329 = scalar_lea.vmem [#allocation5], %s3328
          %3330 = dma.done %s3326, 8192
        $region76: #{carla_ml_forward.1} parent=67 // pred_fallthru
          _
        // Predicated region
        $region77: #{carla_ml_forward.1} parent=67 // pred_check
          %p3331 = pneg %p242
        $region78: #{carla_ml_forward.1} parent=67 // pred_check_branch
          %3333 = sbr.rel (%p3331) target = $region80
        $region79: #{carla_ml_forward.1} parent=67 // pred_region
          %s3334 = smul.u32 64, %s36
          %p3335 = scmp.lt.s32.totalorder %s35, 1
          %s3336 = scalar_select %p3335, %s35, 1
          %p3337 = scmp.lt.s32.totalorder %s3334, 63
          %s3338 = scalar_select %p3337, %s3334, 63
          %s3339 = smul.addr %s3336, 64
          %s3340 = sadd.s32 %s3338, %s3339
          %s3341 = smul.addr %s3340, 8
          %s3342 = scalar_lea.vmem %s7, %s3341
        $region80: #{carla_ml_forward.1} parent=67 // pred_fallthru
          _
      $region68: #{carla_ml_forward.1} parent=5 // pred_fallthru
        _
    $region6: #{carla_ml_forward.1} parent=1 // loop_footer
      %s26 = sadd.s32 1, %s22
    $region7: #{carla_ml_forward.1} parent=1 // loop_footer_branch
      %21 = sbr.rel target = $region3
    $region8: #{carla_ml_forward.1} parent=1 // loop_exit
      _
    %3343 = vsyncpa [#allocation4], 1
    %s3344 = scalar_lea.sflag [#allocation4], 1
    %3345 = vsyncpa %s3344, 1
    %3346 = vsyncpa [#allocation6], 1
    %s3347 = scalar_lea.sflag [#allocation6], 1
    %3348 = vsyncpa %s3347, 1

</llo_original>
